<compile_context>
chip_gen: v5e
topology: v5e:2x2
jax: 0.10.0
libtpu: 0.0.40
codegen_flags: <defaults>
</compile_context>

<pallas_src>
import functools

import jax
import jax.numpy as jnp
import numpy as np
from jax import lax
from jax.experimental import pallas as pl
from jax.experimental.pallas import tpu as pltpu


# ----------------------------------------------------------------------------
# Single fused kernel: backbone + rank head (left & right) + fusion head
# ----------------------------------------------------------------------------
def _cnn_fused_kernel(*refs, B, n_win, num_classes, do_rank, do_fusion):
    """Whole forward in one kernel invocation (no grid).

    refs (in order):
      pat    : (2B*n_win, S*KKp) bf16  im2col patches, rows = (image, window)
      w_conv : (S*KKp, S*Cout)   bf16  block-diagonal conv weight
      b_conv : (1, S*Cout)       f32   conv bias tiled over pooled positions
      [rank]   w1 (F,4096) bf16, b1 (1,4096) f32, w2 (1,4096) f32, b2 (1,1) f32
      [fusion] wc1l (F,512) bf16, wc1r (F,512) bf16, bc1 (1,512) f32,
               wc2 (512,512) bf16, bc2 (1,512) f32,
               wc3 (512,nc) bf16, bc3 (1,nc) f32
      out    : (B, 128) f32  lane 0 = left rank, lane 1 = right rank,
                             lanes 2:2+nc = fusion logits, rest zero.
    """
    idx = 0
    pat_ref = refs[idx]; idx += 1
    wconv_ref = refs[idx]; idx += 1
    bconv_ref = refs[idx]; idx += 1
    if do_rank:
        w1_ref, b1_ref, w2_ref, b2_ref = refs[idx:idx + 4]
        idx += 4
    if do_fusion:
        (wc1l_ref, wc1r_ref, bc1_ref,
         wc2_ref, bc2_ref, wc3_ref, bc3_ref) = refs[idx:idx + 7]
        idx += 7
    out_ref = refs[idx]

    n2 = 2 * B

    # ---- backbone ---------------------------------------------------------
    # One MXU matmul against the block-diagonal conv weight; output columns
    # are already (pooled_pos, channel) -> lane-dense (2B*n_win, 128).
    y = jnp.dot(pat_ref[...], wconv_ref[...], preferred_element_type=jnp.float32)

    # 4x4 max-pool == max over the window axis.  Rows are (image, window) with
    # n_win = 16 (a multiple of 8), so each per-image slice is a full
    # (16, 128) vreg-aligned block: vectorized max, 100% lane utilisation.
    pooled = jnp.concatenate(
        [jnp.max(y[n * n_win:(n + 1) * n_win, :], axis=0, keepdims=True)
         for n in range(n2)],
        axis=0)                                               # (2B, 128)

    # bias + ReLU commute with the max (bias is constant over a pool window).
    feats = jnp.maximum(pooled + bconv_ref[...], 0.0).astype(jnp.bfloat16)

    out_ref[...] = jnp.zeros_like(out_ref)

    # ---- rank head: left + right stacked into ONE (2B, F) @ (F, 4096) -----
    if do_rank:
        h = jnp.dot(feats, w1_ref[...], preferred_element_type=jnp.float32)
        h = jnp.maximum(h + b1_ref[...], 0.0)
        # TODO(synk): Dropout(0.3) treated as identity (eval mode).
        r = jnp.sum(h * w2_ref[...], axis=1, keepdims=True) + b2_ref[...]  # (2B,1)
        out_ref[:, 0:1] = r[:B]
        out_ref[:, 1:2] = r[B:]

    # ---- fusion head: concat-free cross_fc_1 -> cross_fc_2 -> cross_fc_3 --
    if do_fusion:
        fl = feats[:B]
        fr = feats[B:]
        c = (jnp.dot(fl, wc1l_ref[...], preferred_element_type=jnp.float32)
             + jnp.dot(fr, wc1r_ref[...], preferred_element_type=jnp.float32)
             + bc1_ref[...])
        c = jnp.maximum(c, 0.0)
        # TODO(synk): Dropout(0.3) treated as identity (eval mode).
        c = jnp.dot(c.astype(jnp.bfloat16), wc2_ref[...],
                    preferred_element_type=jnp.float32) + bc2_ref[...]
        c = jnp.maximum(c, 0.0)
        c = jnp.dot(c.astype(jnp.bfloat16), wc3_ref[...],
                    preferred_element_type=jnp.float32) + bc3_ref[...]
        out_ref[:, 2:2 + num_classes] = c


# ----------------------------------------------------------------------------
# XLA-side patch extraction (tiny; fused into the kernel input via
# allow_input_fusion).  Rows = (image, pool-window offset), columns =
# (pooled position s, padded 3x3xCin patch).
# ----------------------------------------------------------------------------
def _im2col_pool_patches(x, pool):
    N2, Cin, H, W = x.shape
    Hf, Wf = H // pool, W // pool
    S = Hf * Wf
    KK = Cin * 9
    KKp = ((KK + 7) // 8) * 8
    xp = jnp.pad(x, ((0, 0), (0, 0), (1, 1), (1, 1)))
    cols = [xp[:, :, kh:kh + H, kw:kw + W] for kh in range(3) for kw in range(3)]
    pat = jnp.stack(cols, axis=2)                        # (N2, Cin, 9, H, W)
    pat = pat.reshape(N2, Cin, 9, Hf, pool, Wf, pool)    # (n,cin,k9,hf,dh,wf,dw)
    pat = pat.transpose(0, 4, 6, 3, 5, 1, 2)             # (n,dh,dw,hf,wf,cin,k9)
    pat = pat.reshape(N2 * pool * pool, S, KK)
    pat = jnp.pad(pat, ((0, 0), (0, 0), (0, KKp - KK)))
    return pat.reshape(N2 * pool * pool, S * KKp).astype(jnp.bfloat16)


# ----------------------------------------------------------------------------
# jitted forward: one pallas_call per forward
# ----------------------------------------------------------------------------
def _forward_impl(params, left, right, *, model, pool, num_classes):
    B = left.shape[0]
    do_rank = model in ("rcnn", "rsscnn")
    do_fusion = model in ("sscnn", "rsscnn")

    # Backbone runs once on the stacked (left, right) batch; features are
    # reused by every head inside the single fused kernel (never leave VMEM).
    x = jnp.concatenate([left, right], axis=0)            # (2B, Cin, H, W)
    pat = _im2col_pool_patches(x, pool)                   # (2B*pool^2, S*KKp)

    ins = [pat, params["w_conv"], params["b_conv"]]
    if do_rank:
        ins += [params["w1"], params["b1"], params["w2"], params["b2"]]
    if do_fusion:
        ins += [params["wc1l"], params["wc1r"], params["bc1"],
                params["wc2"], params["bc2"], params["wc3"], params["bc3"]]

    feat_dim = params["w_conv"].shape[1]
    flops = 2 * pat.shape[0] * pat.shape[1] * feat_dim
    if do_rank:
        flops += 2 * (2 * B) * feat_dim * params["w1"].shape[1]
    if do_fusion:
        flops += 2 * 2 * B * feat_dim * params["wc1l"].shape[1]
        flops += 2 * B * params["wc2"].shape[0] * params["wc2"].shape[1]
        flops += 2 * B * params["wc3"].shape[0] * params["wc3"].shape[1]
    bytes_accessed = (sum(int(np.prod(a.shape)) * a.dtype.itemsize for a in ins)
                      + B * 128 * 4)

    kernel = functools.partial(
        _cnn_fused_kernel, B=B, n_win=pool * pool, num_classes=num_classes,
        do_rank=do_rank, do_fusion=do_fusion)

    slab = pl.pallas_call(
        kernel,
        out_shape=jax.ShapeDtypeStruct((B, 128), jnp.float32),
        in_specs=[pl.BlockSpec(a.shape, lambda: (0, 0)) for a in ins],
        out_specs=pl.BlockSpec((B, 128), lambda: (0, 0)),
        compiler_params=pltpu.CompilerParams(
            vmem_limit_bytes=32 * 1024 * 1024,
            # let XLA fuse the tiny im2col chain into the patch operand
            allow_input_fusion=[True] + [False] * (len(ins) - 1)),
        cost_estimate=pl.CostEstimate(flops=int(flops), transcendentals=0,
                                      bytes_accessed=int(bytes_accessed)),
    )(*ins)

    res = {}
    if do_rank:
        res["left"] = {"output": slab[:, 0:1]}
        res["right"] = {"output": slab[:, 1:2]}
    if do_fusion:
        res["logits"] = {"output": slab[:, 2:2 + num_classes]}
    return res


# ----------------------------------------------------------------------------
# CNN module (Pallas version)
# ----------------------------------------------------------------------------
class CNNPallas:
    def __init__(self, key, model="rsscnn", num_classes=2,
                 in_ch=3, feat_ch=8, img=16, pool=4):
        if 2 + num_classes > 128:
            raise ValueError("num_classes too large for the packed output slab")
        self.model = model
        self.pool = pool
        self.num_classes = num_classes
        hf = img // pool
        self.S = hf * hf
        self.cnn_size = (1, feat_ch, hf, hf)
        self.feat_dim = feat_ch * self.S
        self.dims = feat_ch * 2

        def init(k, shape, scale):
            return scale * jax.random.normal(k, shape, dtype=jnp.float32)

        ks = jax.random.split(key, 12)
        # synthetic backbone conv, PyTorch (Cout, Cin, 3, 3) layout
        self.conv_w = init(ks[0], (feat_ch, in_ch, 3, 3), 0.1)
        self.conv_b = init(ks[1], (feat_ch,), 0.1)
        # heads stored (in, out); PyTorch computes x @ W.T + b -> same math
        self.rank_fc_1_w = init(ks[2], (self.feat_dim, 4096), 0.02)
        self.rank_fc_1_b = init(ks[3], (4096,), 0.02)
        self.rank_fc_out_w = init(ks[4], (4096, 1), 0.02)
        self.rank_fc_out_b = init(ks[5], (1,), 0.02)
        self.cross_fc_1_w = init(ks[6], (self.feat_dim * 2, 512), 0.02)
        self.cross_fc_1_b = init(ks[7], (512,), 0.02)
        self.cross_fc_2_w = init(ks[8], (512, 512), 0.02)
        self.cross_fc_2_b = init(ks[9], (512,), 0.02)
        self.cross_fc_3_w = init(ks[10], (512, num_classes), 0.02)
        self.cross_fc_3_b = init(ks[11], (num_classes,), 0.02)

        # ---- one-time packing for the fused kernel -------------------------
        bf16, f32 = jnp.bfloat16, jnp.float32
        cout, s = feat_ch, self.S
        kk = in_ch * 9
        kkp = ((kk + 7) // 8) * 8

        # conv as block-diagonal (S*KKp, S*Cout) so the matmul output is
        # lane-dense with columns ordered (pooled_pos, channel)
        w_mat = self.conv_w.reshape(cout, kk).T                  # (kk, Cout)
        w_mat = jnp.pad(w_mat, ((0, kkp - kk), (0, 0)))          # (kkp, Cout)
        w_blk = jnp.kron(jnp.eye(s, dtype=f32), w_mat)           # (S*kkp, S*Cout)
        b_tile = jnp.tile(self.conv_b, s).reshape(1, s * cout)   # bias per (s, c)

        def perm_rows(w):   # PyTorch flat feature order (c, s) -> internal (s, c)
            o = w.shape[1]
            return w.reshape(cout, s, o).transpose(1, 0, 2).reshape(s * cout, o)

        self.params = {
            "w_conv": w_blk.astype(bf16),
            "b_conv": b_tile.astype(f32),
            "w1": perm_rows(self.rank_fc_1_w).astype(bf16),
            "b1": self.rank_fc_1_b.reshape(1, -1).astype(f32),
            "w2": self.rank_fc_out_w.reshape(1, -1).astype(f32),   # (1, 4096)
            "b2": self.rank_fc_out_b.reshape(1, 1).astype(f32),
            "wc1l": perm_rows(self.cross_fc_1_w[:self.feat_dim]).astype(bf16),
            "wc1r": perm_rows(self.cross_fc_1_w[self.feat_dim:]).astype(bf16),
            "bc1": self.cross_fc_1_b.reshape(1, -1).astype(f32),
            "wc2": self.cross_fc_2_w.astype(bf16),
            "bc2": self.cross_fc_2_b.reshape(1, -1).astype(f32),
            "wc3": self.cross_fc_3_w.astype(bf16),
            "bc3": self.cross_fc_3_b.reshape(1, -1).astype(f32),
        }
        self._fwd = jax.jit(functools.partial(
            _forward_impl, model=model, pool=pool, num_classes=num_classes))

    def forward(self, left_batch, right_batch):
        if self.model not in ("rcnn", "sscnn", "rsscnn"):
            raise ValueError("Invalid model specification. Aborting.")
        return self._fwd(self.params, left_batch, right_batch)

    # pure-JAX f32 reference (PyTorch weight layout) for numerical sanity check
    def reference_forward(self, left, right):
        def backbone(x):
            y = lax.conv_general_dilated(
                x, self.conv_w, window_strides=(1, 1), padding="SAME",
                dimension_numbers=("NCHW", "OIHW", "NCHW"))
            y = jnp.maximum(y + self.conv_b.reshape(1, -1, 1, 1), 0.0)
            n, c, h, w = y.shape
            y = y.reshape(n, c, h // self.pool, self.pool, w // self.pool, self.pool)
            y = y.max(axis=(3, 5))
            return y.reshape(n, -1)

        fl, fr = backbone(left), backbone(right)

        def rank(f):
            h = jnp.maximum(f @ self.rank_fc_1_w + self.rank_fc_1_b, 0.0)
            return h @ self.rank_fc_out_w + self.rank_fc_out_b

        x = jnp.concatenate([fl, fr], axis=1)
        c = jnp.maximum(x @ self.cross_fc_1_w + self.cross_fc_1_b, 0.0)
        c = jnp.maximum(c @ self.cross_fc_2_w + self.cross_fc_2_b, 0.0)
        c = c @ self.cross_fc_3_w + self.cross_fc_3_b
        return {"left": {"output": rank(fl)}, "right": {"output": rank(fr)},
                "logits": {"output": c}}


# ----------------------------------------------------------------------------
if __name__ == "__main__":
    key = jax.random.PRNGKey(0)
    k_model, k_left, k_right = jax.random.split(key, 3)

    B, Cin, H, W = 2, 3, 16, 16
    left = jax.random.normal(k_left, (B, Cin, H, W), dtype=jnp.float32)
    right = jax.random.normal(k_right, (B, Cin, H, W), dtype=jnp.float32)

    net = CNNPallas(k_model, model="rsscnn", num_classes=2)
    out = net.forward(left, right)
    out = jax.block_until_ready(out)

    assert out["left"]["output"].shape == (B, 1)
    assert out["right"]["output"].shape == (B, 1)
    assert out["logits"]["output"].shape == (B, 2)

    # Loose numerical check vs f32 reference (kernel uses bf16 MXU operands).
    ref = net.reference_forward(left, right)
    for name in ("left", "right", "logits"):
        np.testing.assert_allclose(np.asarray(out[name]["output"]),
                                   np.asarray(ref[name]["output"]),
                                   rtol=0.1, atol=0.1)

    print("KERNEL_OK")
</pallas_src>

<mosaic_0001>
module attributes {stable_mosaic.version = 11 : i64} {
  func.func @_cnn_fused_kernel(%arg0: memref<64x512xbf16, #tpu.memory_space<vmem>>, %arg1: memref<512x128xbf16, #tpu.memory_space<vmem>>, %arg2: memref<1x128xf32, #tpu.memory_space<vmem>>, %arg3: memref<128x4096xbf16, #tpu.memory_space<vmem>>, %arg4: memref<1x4096xf32, #tpu.memory_space<vmem>>, %arg5: memref<1x4096xf32, #tpu.memory_space<vmem>>, %arg6: memref<1x1xf32, #tpu.memory_space<vmem>>, %arg7: memref<128x512xbf16, #tpu.memory_space<vmem>>, %arg8: memref<128x512xbf16, #tpu.memory_space<vmem>>, %arg9: memref<1x512xf32, #tpu.memory_space<vmem>>, %arg10: memref<512x512xbf16, #tpu.memory_space<vmem>>, %arg11: memref<1x512xf32, #tpu.memory_space<vmem>>, %arg12: memref<512x2xbf16, #tpu.memory_space<vmem>>, %arg13: memref<1x2xf32, #tpu.memory_space<vmem>>, %arg14: memref<2x128xf32, #tpu.memory_space<vmem>>) attributes {dimension_semantics = [], scalar_prefetch = 0 : i64, scratch_operands = 0 : i64, tpu.core_type = #tpu.core_type<tc>} {
    %c0 = arith.constant 0 : index
    %c0_0 = arith.constant 0 : index
    %0 = vector.load %arg0[%c0, %c0_0] : memref<64x512xbf16, #tpu.memory_space<vmem>>, vector<64x512xbf16>
    %c0_1 = arith.constant 0 : index
    %c0_2 = arith.constant 0 : index
    %1 = vector.load %arg1[%c0_1, %c0_2] : memref<512x128xbf16, #tpu.memory_space<vmem>>, vector<512x128xbf16>
    %cst = arith.constant dense<0.000000e+00> : vector<64x128xf32>
    %2 = tpu.matmul %0, %1, %cst {dimension_numbers = #tpu.dot_dimension_numbers<[1], [0], [0], [1], [0, 0, 1, 1], [], []>} : vector<64x512xbf16>, vector<512x128xbf16>, vector<64x128xf32> -> vector<64x128xf32>
    %3 = vector.extract_strided_slice %2 {offsets = [0, 0], sizes = [16, 128], strides = [1, 1]} : vector<64x128xf32> to vector<16x128xf32>
    %cst_3 = arith.constant dense<0xFF800000> : vector<128xf32>
    %4 = vector.multi_reduction <maximumf>, %3, %cst_3 [0] : vector<16x128xf32> to vector<128xf32>
    %5 = vector.shape_cast %4 : vector<128xf32> to vector<1x128xf32>
    %6 = vector.extract_strided_slice %2 {offsets = [16, 0], sizes = [16, 128], strides = [1, 1]} : vector<64x128xf32> to vector<16x128xf32>
    %cst_4 = arith.constant dense<0xFF800000> : vector<128xf32>
    %7 = vector.multi_reduction <maximumf>, %6, %cst_4 [0] : vector<16x128xf32> to vector<128xf32>
    %8 = vector.shape_cast %7 : vector<128xf32> to vector<1x128xf32>
    %9 = vector.extract_strided_slice %2 {offsets = [32, 0], sizes = [16, 128], strides = [1, 1]} : vector<64x128xf32> to vector<16x128xf32>
    %cst_5 = arith.constant dense<0xFF800000> : vector<128xf32>
    %10 = vector.multi_reduction <maximumf>, %9, %cst_5 [0] : vector<16x128xf32> to vector<128xf32>
    %11 = vector.shape_cast %10 : vector<128xf32> to vector<1x128xf32>
    %12 = vector.extract_strided_slice %2 {offsets = [48, 0], sizes = [16, 128], strides = [1, 1]} : vector<64x128xf32> to vector<16x128xf32>
    %cst_6 = arith.constant dense<0xFF800000> : vector<128xf32>
    %13 = vector.multi_reduction <maximumf>, %12, %cst_6 [0] : vector<16x128xf32> to vector<128xf32>
    %14 = vector.shape_cast %13 : vector<128xf32> to vector<1x128xf32>
    %15 = tpu.concatenate %5, %8, %11, %14 in 0 : vector<1x128xf32>, vector<1x128xf32>, vector<1x128xf32>, vector<1x128xf32> -> vector<4x128xf32>
    %c0_7 = arith.constant 0 : index
    %c0_8 = arith.constant 0 : index
    %16 = vector.load %arg2[%c0_7, %c0_8] : memref<1x128xf32, #tpu.memory_space<vmem>>, vector<1x128xf32>
    %17 = vector.broadcast %16 : vector<1x128xf32> to vector<4x128xf32>
    %18 = arith.addf %15, %17 : vector<4x128xf32>
    %cst_9 = arith.constant 0.000000e+00 : f32
    %19 = vector.broadcast %cst_9 : f32 to vector<4x128xf32>
    %20 = arith.maximumf %18, %19 : vector<4x128xf32>
    %21 = arith.truncf %20 : vector<4x128xf32> to vector<4x128xbf16>
    %cst_10 = arith.constant 0.000000e+00 : f32
    %22 = vector.broadcast %cst_10 : f32 to vector<2x128xf32>
    %c0_11 = arith.constant 0 : index
    %c0_12 = arith.constant 0 : index
    %23 = vector.load %arg14[%c0_11, %c0_12] : memref<2x128xf32, #tpu.memory_space<vmem>>, vector<2x128xf32>
    tpu.vector_store %arg14[%c0_11, %c0_12], %22 {strides = array<i32>} : memref<2x128xf32, #tpu.memory_space<vmem>>, vector<2x128xf32>,
    %c0_13 = arith.constant 0 : index
    %c0_14 = arith.constant 0 : index
    %24 = vector.load %arg3[%c0_13, %c0_14] : memref<128x4096xbf16, #tpu.memory_space<vmem>>, vector<128x4096xbf16>
    %cst_15 = arith.constant dense<0.000000e+00> : vector<4x4096xf32>
    %25 = tpu.matmul %21, %24, %cst_15 {dimension_numbers = #tpu.dot_dimension_numbers<[1], [0], [0], [1], [0, 0, 1, 1], [], []>} : vector<4x128xbf16>, vector<128x4096xbf16>, vector<4x4096xf32> -> vector<4x4096xf32>
    %c0_16 = arith.constant 0 : index
    %c0_17 = arith.constant 0 : index
    %26 = vector.load %arg4[%c0_16, %c0_17] : memref<1x4096xf32, #tpu.memory_space<vmem>>, vector<1x4096xf32>
    %27 = vector.broadcast %26 : vector<1x4096xf32> to vector<4x4096xf32>
    %28 = arith.addf %25, %27 : vector<4x4096xf32>
    %cst_18 = arith.constant 0.000000e+00 : f32
    %29 = vector.broadcast %cst_18 : f32 to vector<4x4096xf32>
    %30 = arith.maximumf %28, %29 : vector<4x4096xf32>
    %c0_19 = arith.constant 0 : index
    %c0_20 = arith.constant 0 : index
    %31 = vector.load %arg5[%c0_19, %c0_20] : memref<1x4096xf32, #tpu.memory_space<vmem>>, vector<1x4096xf32>
    %32 = vector.broadcast %31 : vector<1x4096xf32> to vector<4x4096xf32>
    %33 = arith.mulf %30, %32 : vector<4x4096xf32>
    %cst_21 = arith.constant dense<0.000000e+00> : vector<4xf32>
    %34 = vector.multi_reduction <add>, %33, %cst_21 [1] : vector<4x4096xf32> to vector<4xf32>
    %35 = vector.shape_cast %34 : vector<4xf32> to vector<4x1xf32>
    %c0_22 = arith.constant 0 : index
    %c0_23 = arith.constant 0 : index
    %36 = vector.load %arg6[%c0_22, %c0_23] : memref<1x1xf32, #tpu.memory_space<vmem>>, vector<1x1xf32>
    %37 = vector.broadcast %36 : vector<1x1xf32> to vector<4x1xf32>
    %38 = arith.addf %35, %37 : vector<4x1xf32>
    %39 = vector.extract_strided_slice %38 {offsets = [0, 0], sizes = [2, 1], strides = [1, 1]} : vector<4x1xf32> to vector<2x1xf32>
    %c0_24 = arith.constant 0 : index
    %c0_25 = arith.constant 0 : index
    %40 = vector.load %arg14[%c0_24, %c0_25] : memref<2x128xf32, #tpu.memory_space<vmem>>, vector<2x1xf32>
    tpu.vector_store %arg14[%c0_24, %c0_25], %39 {strides = array<i32>} : memref<2x128xf32, #tpu.memory_space<vmem>>, vector<2x1xf32>,
    %41 = vector.extract_strided_slice %38 {offsets = [2, 0], sizes = [2, 1], strides = [1, 1]} : vector<4x1xf32> to vector<2x1xf32>
    %c0_26 = arith.constant 0 : index
    %c1 = arith.constant 1 : index
    %42 = vector.load %arg14[%c0_26, %c1] : memref<2x128xf32, #tpu.memory_space<vmem>>, vector<2x1xf32>
    tpu.vector_store %arg14[%c0_26, %c1], %41 {strides = array<i32>} : memref<2x128xf32, #tpu.memory_space<vmem>>, vector<2x1xf32>,
    %43 = vector.extract_strided_slice %21 {offsets = [0, 0], sizes = [2, 128], strides = [1, 1]} : vector<4x128xbf16> to vector<2x128xbf16>
    %44 = vector.extract_strided_slice %21 {offsets = [2, 0], sizes = [2, 128], strides = [1, 1]} : vector<4x128xbf16> to vector<2x128xbf16>
    %c0_27 = arith.constant 0 : index
    %c0_28 = arith.constant 0 : index
    %45 = vector.load %arg7[%c0_27, %c0_28] : memref<128x512xbf16, #tpu.memory_space<vmem>>, vector<128x512xbf16>
    %cst_29 = arith.constant dense<0.000000e+00> : vector<2x512xf32>
    %46 = tpu.matmul %43, %45, %cst_29 {dimension_numbers = #tpu.dot_dimension_numbers<[1], [0], [0], [1], [0, 0, 1, 1], [], []>} : vector<2x128xbf16>, vector<128x512xbf16>, vector<2x512xf32> -> vector<2x512xf32>
    %c0_30 = arith.constant 0 : index
    %c0_31 = arith.constant 0 : index
    %47 = vector.load %arg8[%c0_30, %c0_31] : memref<128x512xbf16, #tpu.memory_space<vmem>>, vector<128x512xbf16>
    %cst_32 = arith.constant dense<0.000000e+00> : vector<2x512xf32>
    %48 = tpu.matmul %44, %47, %cst_32 {dimension_numbers = #tpu.dot_dimension_numbers<[1], [0], [0], [1], [0, 0, 1, 1], [], []>} : vector<2x128xbf16>, vector<128x512xbf16>, vector<2x512xf32> -> vector<2x512xf32>
    %49 = arith.addf %46, %48 : vector<2x512xf32>
    %c0_33 = arith.constant 0 : index
    %c0_34 = arith.constant 0 : index
    %50 = vector.load %arg9[%c0_33, %c0_34] : memref<1x512xf32, #tpu.memory_space<vmem>>, vector<1x512xf32>
    %51 = vector.broadcast %50 : vector<1x512xf32> to vector<2x512xf32>
    %52 = arith.addf %49, %51 : vector<2x512xf32>
    %cst_35 = arith.constant 0.000000e+00 : f32
    %53 = vector.broadcast %cst_35 : f32 to vector<2x512xf32>
    %54 = arith.maximumf %52, %53 : vector<2x512xf32>
    %55 = arith.truncf %54 : vector<2x512xf32> to vector<2x512xbf16>
    %c0_36 = arith.constant 0 : index
    %c0_37 = arith.constant 0 : index
    %56 = vector.load %arg10[%c0_36, %c0_37] : memref<512x512xbf16, #tpu.memory_space<vmem>>, vector<512x512xbf16>
    %cst_38 = arith.constant dense<0.000000e+00> : vector<2x512xf32>
    %57 = tpu.matmul %55, %56, %cst_38 {dimension_numbers = #tpu.dot_dimension_numbers<[1], [0], [0], [1], [0, 0, 1, 1], [], []>} : vector<2x512xbf16>, vector<512x512xbf16>, vector<2x512xf32> -> vector<2x512xf32>
    %c0_39 = arith.constant 0 : index
    %c0_40 = arith.constant 0 : index
    %58 = vector.load %arg11[%c0_39, %c0_40] : memref<1x512xf32, #tpu.memory_space<vmem>>, vector<1x512xf32>
    %59 = vector.broadcast %58 : vector<1x512xf32> to vector<2x512xf32>
    %60 = arith.addf %57, %59 : vector<2x512xf32>
    %cst_41 = arith.constant 0.000000e+00 : f32
    %61 = vector.broadcast %cst_41 : f32 to vector<2x512xf32>
    %62 = arith.maximumf %60, %61 : vector<2x512xf32>
    %63 = arith.truncf %62 : vector<2x512xf32> to vector<2x512xbf16>
    %c0_42 = arith.constant 0 : index
    %c0_43 = arith.constant 0 : index
    %64 = vector.load %arg12[%c0_42, %c0_43] : memref<512x2xbf16, #tpu.memory_space<vmem>>, vector<512x2xbf16>
    %cst_44 = arith.constant dense<0.000000e+00> : vector<2x2xf32>
    %65 = tpu.matmul %63, %64, %cst_44 {dimension_numbers = #tpu.dot_dimension_numbers<[1], [0], [0], [1], [0, 0, 1, 1], [], []>} : vector<2x512xbf16>, vector<512x2xbf16>, vector<2x2xf32> -> vector<2x2xf32>
    %c0_45 = arith.constant 0 : index
    %c0_46 = arith.constant 0 : index
    %66 = vector.load %arg13[%c0_45, %c0_46] : memref<1x2xf32, #tpu.memory_space<vmem>>, vector<1x2xf32>
    %67 = vector.broadcast %66 : vector<1x2xf32> to vector<2x2xf32>
    %68 = arith.addf %65, %67 : vector<2x2xf32>
    %c0_47 = arith.constant 0 : index
    %c2 = arith.constant 2 : index
    %69 = vector.load %arg14[%c0_47, %c2] : memref<2x128xf32, #tpu.memory_space<vmem>>, vector<2x2xf32>
    tpu.vector_store %arg14[%c0_47, %c2], %68 {strides = array<i32>} : memref<2x128xf32, #tpu.memory_space<vmem>>, vector<2x2xf32>,
    return
  }
}

</mosaic_0001>

<llo_original>
// kernel: _forward_impl.1
$region0: #{_forward_impl.1}
  #allocation0 [shape = 'u32[]', space=smem, size = 0x4, offset = 0x4, fixed_abs, tag = 'smem constant byte address 0x4 - core index']
  #allocation1 [shape = 'u32[72,128]{1,0:T(1,128)}', space=vmem, size = 0x9000, scoped, tag = 'internal scratch']
  #allocation2 [shape = 'f32[1,1]{1,0:T(1,128)S(1)}', space=vmem, size = 0x200, scoped, tag = 'scoped memory for _forward_impl.1']
  %s0 = inlined_call_operand.vmem [shape: bf16[64,512], index: 0, kind: input, shape index: {}]
  %s1 = inlined_call_operand.vmem [shape: bf16[512,128], index: 1, kind: input, shape index: {}]
  %s2 = inlined_call_operand.vmem [shape: f32[1,128], index: 2, kind: input, shape index: {}]
  %s3 = inlined_call_operand.vmem [shape: bf16[128,4096], index: 3, kind: input, shape index: {}]
  %s4 = inlined_call_operand.vmem [shape: f32[1,4096], index: 4, kind: input, shape index: {}]
  %s5 = inlined_call_operand.vmem [shape: f32[1,4096], index: 5, kind: input, shape index: {}]
  %s6 = inlined_call_operand.<no memory space> [shape: f32[1,1], index: 6, kind: input, shape index: {}]
  %s7 = inlined_call_operand.vmem [shape: bf16[128,512], index: 7, kind: input, shape index: {}]
  %s8 = inlined_call_operand.vmem [shape: bf16[128,512], index: 8, kind: input, shape index: {}]
  %s9 = inlined_call_operand.vmem [shape: f32[1,512], index: 9, kind: input, shape index: {}]
  %s10 = inlined_call_operand.vmem [shape: bf16[512,512], index: 10, kind: input, shape index: {}]
  %s11 = inlined_call_operand.vmem [shape: f32[1,512], index: 11, kind: input, shape index: {}]
  %s12 = inlined_call_operand.vmem [shape: bf16[512,2], index: 12, kind: input, shape index: {}]
  %s13 = inlined_call_operand.vmem [shape: f32[1,2], index: 13, kind: input, shape index: {}]
  %s14 = inlined_call_operand.vmem [shape: f32[2,128], index: 14, kind: output, shape index: {}]
  %s15 = sld [smem:[#allocation0]]
  $region66: #{_forward_impl.1} parent=0
    _
  %s17 = ssub.s32 1, %s15
  %s18 = scalar_select 0, %s17, %s15
  %v19 = vstv %s6
  %20 = vst [vmem:[#allocation2] sm:$0x1] %v19
  // Predicated region
  $region2: #{_forward_impl.1} parent=0 // pred_check
    _
  $region3: #{_forward_impl.1} parent=0 // pred_check_branch
    %22 = sbr.rel (0) target = $region5
  $region4: #{_forward_impl.1} parent=0 // pred_region
    _
  $region5: #{_forward_impl.1} parent=0 // pred_fallthru
    _
  // Predicated region
  $region6: #{_forward_impl.1} parent=0 // pred_check
    _
  $region7: #{_forward_impl.1} parent=0 // pred_check_branch
    %24 = sbr.rel (0) target = $region9
  $region8: #{_forward_impl.1} parent=0 // pred_region
    _
  $region9: #{_forward_impl.1} parent=0 // pred_fallthru
    _
  // Predicated region
  $region10: #{_forward_impl.1} parent=0 // pred_check
    _
  $region11: #{_forward_impl.1} parent=0 // pred_check_branch
    %26 = sbr.rel (0) target = $region13
  $region12: #{_forward_impl.1} parent=0 // pred_region
    _
  $region13: #{_forward_impl.1} parent=0 // pred_fallthru
    _
  // Predicated region
  $region14: #{_forward_impl.1} parent=0 // pred_check
    _
  $region15: #{_forward_impl.1} parent=0 // pred_check_branch
    %28 = sbr.rel (0) target = $region17
  $region16: #{_forward_impl.1} parent=0 // pred_region
    _
  $region17: #{_forward_impl.1} parent=0 // pred_fallthru
    _
  // Predicated region
  $region18: #{_forward_impl.1} parent=0 // pred_check
    _
  $region19: #{_forward_impl.1} parent=0 // pred_check_branch
    %30 = sbr.rel (0) target = $region21
  $region20: #{_forward_impl.1} parent=0 // pred_region
    _
  $region21: #{_forward_impl.1} parent=0 // pred_fallthru
    _
  // Predicated region
  $region22: #{_forward_impl.1} parent=0 // pred_check
    _
  $region23: #{_forward_impl.1} parent=0 // pred_check_branch
    %32 = sbr.rel (0) target = $region25
  $region24: #{_forward_impl.1} parent=0 // pred_region
    _
  $region25: #{_forward_impl.1} parent=0 // pred_fallthru
    _
  // Predicated region
  $region26: #{_forward_impl.1} parent=0 // pred_check
    _
  $region27: #{_forward_impl.1} parent=0 // pred_check_branch
    %34 = sbr.rel (0) target = $region29
  $region28: #{_forward_impl.1} parent=0 // pred_region
    _
  $region29: #{_forward_impl.1} parent=0 // pred_fallthru
    _
  // Predicated region
  $region30: #{_forward_impl.1} parent=0 // pred_check
    _
  $region31: #{_forward_impl.1} parent=0 // pred_check_branch
    %36 = sbr.rel (0) target = $region33
  $region32: #{_forward_impl.1} parent=0 // pred_region
    _
  $region33: #{_forward_impl.1} parent=0 // pred_fallthru
    _
  // Predicated region
  $region34: #{_forward_impl.1} parent=0 // pred_check
    _
  $region35: #{_forward_impl.1} parent=0 // pred_check_branch
    %38 = sbr.rel (0) target = $region37
  $region36: #{_forward_impl.1} parent=0 // pred_region
    _
  $region37: #{_forward_impl.1} parent=0 // pred_fallthru
    _
  // Predicated region
  $region38: #{_forward_impl.1} parent=0 // pred_check
    _
  $region39: #{_forward_impl.1} parent=0 // pred_check_branch
    %40 = sbr.rel (0) target = $region41
  $region40: #{_forward_impl.1} parent=0 // pred_region
    _
  $region41: #{_forward_impl.1} parent=0 // pred_fallthru
    _
  // Predicated region
  $region42: #{_forward_impl.1} parent=0 // pred_check
    _
  $region43: #{_forward_impl.1} parent=0 // pred_check_branch
    %42 = sbr.rel (0) target = $region45
  $region44: #{_forward_impl.1} parent=0 // pred_region
    _
  $region45: #{_forward_impl.1} parent=0 // pred_fallthru
    _
  // Predicated region
  $region46: #{_forward_impl.1} parent=0 // pred_check
    _
  $region47: #{_forward_impl.1} parent=0 // pred_check_branch
    %44 = sbr.rel (0) target = $region49
  $region48: #{_forward_impl.1} parent=0 // pred_region
    _
  $region49: #{_forward_impl.1} parent=0 // pred_fallthru
    _
  // Predicated region
  $region50: #{_forward_impl.1} parent=0 // pred_check
    _
  $region51: #{_forward_impl.1} parent=0 // pred_check_branch
    %46 = sbr.rel (0) target = $region53
  $region52: #{_forward_impl.1} parent=0 // pred_region
    _
  $region53: #{_forward_impl.1} parent=0 // pred_fallthru
    _
  // Predicated region
  $region54: #{_forward_impl.1} parent=0 // pred_check
    _
  $region55: #{_forward_impl.1} parent=0 // pred_check_branch
    %48 = sbr.rel (0) target = $region57
  $region56: #{_forward_impl.1} parent=0 // pred_region
    _
  $region57: #{_forward_impl.1} parent=0 // pred_fallthru
    _
  %v49 = vld [vmem:[%s0] sm:$0xff]
  %v50 = vld [vmem:[%s0 + $0x8] sm:$0xff]
  %v51 = vld [vmem:[%s0 + $0x10] sm:$0xff]
  %v52 = vld [vmem:[%s0 + $0x18] sm:$0xff]
  %v53 = vld [vmem:[%s0 + $0x20] sm:$0xff]
  %v54 = vld [vmem:[%s0 + $0x28] sm:$0xff]
  %v55 = vld [vmem:[%s0 + $0x30] sm:$0xff]
  %v56 = vld [vmem:[%s0 + $0x38] sm:$0xff]
  %v57 = vld [vmem:[%s0 + $0x40] sm:$0xff]
  %v58 = vld [vmem:[%s0 + $0x48] sm:$0xff]
  %v59 = vld [vmem:[%s0 + $0x50] sm:$0xff]
  %v60 = vld [vmem:[%s0 + $0x58] sm:$0xff]
  %v61 = vld [vmem:[%s0 + $0x60] sm:$0xff]
  %v62 = vld [vmem:[%s0 + $0x68] sm:$0xff]
  %v63 = vld [vmem:[%s0 + $0x70] sm:$0xff]
  %v64 = vld [vmem:[%s0 + $0x78] sm:$0xff]
  %v65 = vld [vmem:[%s1] sm:$0xf]
  %v66 = vld [vmem:[%s1 + $0x4] sm:$0xf]
  %v67 = vld [vmem:[%s1 + $0x8] sm:$0xf]
  %v68 = vld [vmem:[%s1 + $0xc] sm:$0xf]
  %v69 = vld [vmem:[%s1 + $0x10] sm:$0xf]
  %v70 = vld [vmem:[%s1 + $0x14] sm:$0xf]
  %v71 = vld [vmem:[%s1 + $0x18] sm:$0xf]
  %v72 = vld [vmem:[%s1 + $0x1c] sm:$0xf]
  %v73 = vld [vmem:[%s1 + $0x20] sm:$0xf]
  %v74 = vld [vmem:[%s1 + $0x24] sm:$0xf]
  %v75 = vld [vmem:[%s1 + $0x28] sm:$0xf]
  %v76 = vld [vmem:[%s1 + $0x2c] sm:$0xf]
  %v77 = vld [vmem:[%s1 + $0x30] sm:$0xf]
  %v78 = vld [vmem:[%s1 + $0x34] sm:$0xf]
  %v79 = vld [vmem:[%s1 + $0x38] sm:$0xf]
  %v80 = vld [vmem:[%s1 + $0x3c] sm:$0xf]
  %v81 = vld [vmem:[%s1 + $0x40] sm:$0xf]
  %v82 = vld [vmem:[%s1 + $0x44] sm:$0xf]
  %v83 = vld [vmem:[%s1 + $0x48] sm:$0xf]
  %v84 = vld [vmem:[%s1 + $0x4c] sm:$0xf]
  %v85 = vld [vmem:[%s1 + $0x50] sm:$0xf]
  %v86 = vld [vmem:[%s1 + $0x54] sm:$0xf]
  %v87 = vld [vmem:[%s1 + $0x58] sm:$0xf]
  %v88 = vld [vmem:[%s1 + $0x5c] sm:$0xf]
  %v89 = vld [vmem:[%s1 + $0x60] sm:$0xf]
  %v90 = vld [vmem:[%s1 + $0x64] sm:$0xf]
  %v91 = vld [vmem:[%s1 + $0x68] sm:$0xf]
  %v92 = vld [vmem:[%s1 + $0x6c] sm:$0xf]
  %v93 = vld [vmem:[%s1 + $0x70] sm:$0xf]
  %v94 = vld [vmem:[%s1 + $0x74] sm:$0xf]
  %v95 = vld [vmem:[%s1 + $0x78] sm:$0xf]
  %v96 = vld [vmem:[%s1 + $0x7c] sm:$0xf]
  %v97 = vld [vmem:[%s1 + $0x80] sm:$0xf]
  %v98 = vld [vmem:[%s1 + $0x84] sm:$0xf]
  %v99 = vld [vmem:[%s1 + $0x88] sm:$0xf]
  %v100 = vld [vmem:[%s1 + $0x8c] sm:$0xf]
  %v101 = vld [vmem:[%s1 + $0x90] sm:$0xf]
  %v102 = vld [vmem:[%s1 + $0x94] sm:$0xf]
  %v103 = vld [vmem:[%s1 + $0x98] sm:$0xf]
  %v104 = vld [vmem:[%s1 + $0x9c] sm:$0xf]
  %v105 = vld [vmem:[%s1 + $0xa0] sm:$0xf]
  %v106 = vld [vmem:[%s1 + $0xa4] sm:$0xf]
  %v107 = vld [vmem:[%s1 + $0xa8] sm:$0xf]
  %v108 = vld [vmem:[%s1 + $0xac] sm:$0xf]
  %v109 = vld [vmem:[%s1 + $0xb0] sm:$0xf]
  %v110 = vld [vmem:[%s1 + $0xb4] sm:$0xf]
  %v111 = vld [vmem:[%s1 + $0xb8] sm:$0xf]
  %v112 = vld [vmem:[%s1 + $0xbc] sm:$0xf]
  %v113 = vld [vmem:[%s1 + $0xc0] sm:$0xf]
  %v114 = vld [vmem:[%s1 + $0xc4] sm:$0xf]
  %v115 = vld [vmem:[%s1 + $0xc8] sm:$0xf]
  %v116 = vld [vmem:[%s1 + $0xcc] sm:$0xf]
  %v117 = vld [vmem:[%s1 + $0xd0] sm:$0xf]
  %v118 = vld [vmem:[%s1 + $0xd4] sm:$0xf]
  %v119 = vld [vmem:[%s1 + $0xd8] sm:$0xf]
  %v120 = vld [vmem:[%s1 + $0xdc] sm:$0xf]
  %v121 = vld [vmem:[%s1 + $0xe0] sm:$0xf]
  %v122 = vld [vmem:[%s1 + $0xe4] sm:$0xf]
  %v123 = vld [vmem:[%s1 + $0xe8] sm:$0xf]
  %v124 = vld [vmem:[%s1 + $0xec] sm:$0xf]
  %v125 = vld [vmem:[%s1 + $0xf0] sm:$0xf]
  %v126 = vld [vmem:[%s1 + $0xf4] sm:$0xf]
  %v127 = vld [vmem:[%s1 + $0xf8] sm:$0xf]
  %v128 = vld [vmem:[%s1 + $0xfc] sm:$0xf]
  %v145 = vunpack.c.l.b16 %v49
  %v146 = vunpack.c.h.b16 %v49
  %v147 = vunpack.c.l.b16 %v50
  %v148 = vunpack.c.h.b16 %v50
  %v149 = vunpack.c.l.b16 %v51
  %v150 = vunpack.c.h.b16 %v51
  %v151 = vunpack.c.l.b16 %v52
  %v152 = vunpack.c.h.b16 %v52
  %v153 = vunpack.c.l.b16 %v53
  %v154 = vunpack.c.h.b16 %v53
  %v155 = vunpack.c.l.b16 %v54
  %v156 = vunpack.c.h.b16 %v54
  %v157 = vunpack.c.l.b16 %v55
  %v158 = vunpack.c.h.b16 %v55
  %v159 = vunpack.c.l.b16 %v56
  %v160 = vunpack.c.h.b16 %v56
  %v161 = vunpack.c.l.b16 %v57
  %v162 = vunpack.c.h.b16 %v57
  %v163 = vunpack.c.l.b16 %v58
  %v164 = vunpack.c.h.b16 %v58
  %v165 = vunpack.c.l.b16 %v59
  %v166 = vunpack.c.h.b16 %v59
  %v167 = vunpack.c.l.b16 %v60
  %v168 = vunpack.c.h.b16 %v60
  %v169 = vunpack.c.l.b16 %v61
  %v170 = vunpack.c.h.b16 %v61
  %v171 = vunpack.c.l.b16 %v62
  %v172 = vunpack.c.h.b16 %v62
  %v173 = vunpack.c.l.b16 %v63
  %v174 = vunpack.c.h.b16 %v63
  %v175 = vunpack.c.l.b16 %v64
  %v176 = vunpack.c.h.b16 %v64
  %v177 = vpack.c.b16 %v149, %v145
  %v178 = vpack.c.b16 %v150, %v146
  %v179 = vpack.c.b16 %v151, %v147
  %v180 = vpack.c.b16 %v152, %v148
  %v181 = vpack.c.b16 %v157, %v153
  %v182 = vpack.c.b16 %v158, %v154
  %v183 = vpack.c.b16 %v159, %v155
  %v184 = vpack.c.b16 %v160, %v156
  %v185 = vpack.c.b16 %v165, %v161
  %v186 = vpack.c.b16 %v166, %v162
  %v187 = vpack.c.b16 %v167, %v163
  %v188 = vpack.c.b16 %v168, %v164
  %v189 = vpack.c.b16 %v173, %v169
  %v190 = vpack.c.b16 %v174, %v170
  %v191 = vpack.c.b16 %v175, %v171
  %v192 = vpack.c.b16 %v176, %v172
  %v273 = vunpack.c.l.b16 %v65
  %v274 = vunpack.c.l.b16 %v66
  %v275 = vunpack.c.l.b16 %v67
  %v276 = vunpack.c.l.b16 %v68
  %v277 = vunpack.c.l.b16 %v69
  %v278 = vunpack.c.l.b16 %v70
  %v279 = vunpack.c.l.b16 %v71
  %v280 = vunpack.c.l.b16 %v72
  %v281 = vunpack.c.l.b16 %v73
  %v282 = vunpack.c.l.b16 %v74
  %v283 = vunpack.c.l.b16 %v75
  %v284 = vunpack.c.l.b16 %v76
  %v285 = vunpack.c.l.b16 %v77
  %v286 = vunpack.c.l.b16 %v78
  %v287 = vunpack.c.l.b16 %v79
  %v288 = vunpack.c.l.b16 %v80
  %v289 = vunpack.c.l.b16 %v81
  %v290 = vunpack.c.l.b16 %v82
  %v291 = vunpack.c.l.b16 %v83
  %v292 = vunpack.c.l.b16 %v84
  %v293 = vunpack.c.l.b16 %v85
  %v294 = vunpack.c.l.b16 %v86
  %v295 = vunpack.c.l.b16 %v87
  %v296 = vunpack.c.l.b16 %v88
  %v297 = vunpack.c.l.b16 %v89
  %v298 = vunpack.c.l.b16 %v90
  %v299 = vunpack.c.l.b16 %v91
  %v300 = vunpack.c.l.b16 %v92
  %v301 = vunpack.c.l.b16 %v93
  %v302 = vunpack.c.l.b16 %v94
  %v303 = vunpack.c.l.b16 %v95
  %v304 = vunpack.c.l.b16 %v96
  %v305 = vunpack.c.l.b16 %v97
  %v306 = vunpack.c.l.b16 %v98
  %v307 = vunpack.c.l.b16 %v99
  %v308 = vunpack.c.l.b16 %v100
  %v309 = vunpack.c.l.b16 %v101
  %v310 = vunpack.c.l.b16 %v102
  %v311 = vunpack.c.l.b16 %v103
  %v312 = vunpack.c.l.b16 %v104
  %v313 = vunpack.c.l.b16 %v105
  %v314 = vunpack.c.l.b16 %v106
  %v315 = vunpack.c.l.b16 %v107
  %v316 = vunpack.c.l.b16 %v108
  %v317 = vunpack.c.l.b16 %v109
  %v318 = vunpack.c.l.b16 %v110
  %v319 = vunpack.c.l.b16 %v111
  %v320 = vunpack.c.l.b16 %v112
  %v321 = vunpack.c.l.b16 %v113
  %v322 = vunpack.c.l.b16 %v114
  %v323 = vunpack.c.l.b16 %v115
  %v324 = vunpack.c.l.b16 %v116
  %v325 = vunpack.c.l.b16 %v117
  %v326 = vunpack.c.l.b16 %v118
  %v327 = vunpack.c.l.b16 %v119
  %v328 = vunpack.c.l.b16 %v120
  %v329 = vunpack.c.l.b16 %v121
  %v330 = vunpack.c.l.b16 %v122
  %v331 = vunpack.c.l.b16 %v123
  %v332 = vunpack.c.l.b16 %v124
  %v333 = vunpack.c.l.b16 %v125
  %v334 = vunpack.c.l.b16 %v126
  %v335 = vunpack.c.l.b16 %v127
  %v336 = vunpack.c.l.b16 %v128
  %v337 = vpack.c.b16 %v274, %v273
  %v338 = vpack.c.b16 %v276, %v275
  %v339 = vpack.c.b16 %v278, %v277
  %v340 = vpack.c.b16 %v280, %v279
  %v341 = vpack.c.b16 %v282, %v281
  %v342 = vpack.c.b16 %v284, %v283
  %v343 = vpack.c.b16 %v286, %v285
  %v344 = vpack.c.b16 %v288, %v287
  %v345 = vpack.c.b16 %v290, %v289
  %v346 = vpack.c.b16 %v292, %v291
  %v347 = vpack.c.b16 %v294, %v293
  %v348 = vpack.c.b16 %v296, %v295
  %v349 = vpack.c.b16 %v298, %v297
  %v350 = vpack.c.b16 %v300, %v299
  %v351 = vpack.c.b16 %v302, %v301
  %v352 = vpack.c.b16 %v304, %v303
  %v353 = vpack.c.b16 %v306, %v305
  %v354 = vpack.c.b16 %v308, %v307
  %v355 = vpack.c.b16 %v310, %v309
  %v356 = vpack.c.b16 %v312, %v311
  %v357 = vpack.c.b16 %v314, %v313
  %v358 = vpack.c.b16 %v316, %v315
  %v359 = vpack.c.b16 %v318, %v317
  %v360 = vpack.c.b16 %v320, %v319
  %v361 = vpack.c.b16 %v322, %v321
  %v362 = vpack.c.b16 %v324, %v323
  %v363 = vpack.c.b16 %v326, %v325
  %v364 = vpack.c.b16 %v328, %v327
  %v365 = vpack.c.b16 %v330, %v329
  %v366 = vpack.c.b16 %v332, %v331
  %v367 = vpack.c.b16 %v334, %v333
  %v368 = vpack.c.b16 %v336, %v335
  %401 = vmatpush.bf16.msra.mxu0 %v344
  %402 = vmatpush.bf16.msra.mxu0 %v343
  %403 = vmatpush.bf16.msra.mxu0 %v342
  %404 = vmatpush.bf16.msra.mxu0 %v341
  %405 = vmatpush.bf16.msra.mxu0 %v340
  %406 = vmatpush.bf16.msra.mxu0 %v339
  %407 = vmatpush.bf16.msra.mxu0 %v338
  %408 = vmatpush.bf16.msra.mxu0 %v337
  %409 = vmatmul.bf16.gmra.mxu0 %v177
  %v410 = vpop.f32.mrf.mxu0
  %v411 = vadd.f32 0.0, %v410
  %v412 = vpop.f32.mrf.mxu0
  %v413 = vadd.f32 0.0, %v412
  %414 = vmatmul.bf16.gmra.mxu0 %v181
  %v415 = vpop.f32.mrf.mxu0
  %v416 = vadd.f32 0.0, %v415
  %v417 = vpop.f32.mrf.mxu0
  %v418 = vadd.f32 0.0, %v417
  %419 = vmatmul.bf16.gmra.mxu0 %v185
  %v420 = vpop.f32.mrf.mxu0
  %v421 = vadd.f32 0.0, %v420
  %v422 = vpop.f32.mrf.mxu0
  %v423 = vadd.f32 0.0, %v422
  %424 = vmatmul.bf16.gmra.mxu0 %v189
  %v425 = vpop.f32.mrf.mxu0
  %v426 = vadd.f32 0.0, %v425
  %v427 = vpop.f32.mrf.mxu0
  %v428 = vadd.f32 0.0, %v427
  %429 = vdwg.mxu0
  %430 = vmatpush.bf16.msra.mxu0 %v352
  %431 = vmatpush.bf16.msra.mxu0 %v351
  %432 = vmatpush.bf16.msra.mxu0 %v350
  %433 = vmatpush.bf16.msra.mxu0 %v349
  %434 = vmatpush.bf16.msra.mxu0 %v348
  %435 = vmatpush.bf16.msra.mxu0 %v347
  %436 = vmatpush.bf16.msra.mxu0 %v346
  %437 = vmatpush.bf16.msra.mxu0 %v345
  %438 = vmatmul.bf16.gmra.mxu0 %v178
  %v439 = vpop.f32.mrf.mxu0
  %v440 = vadd.f32 %v411, %v439
  %v441 = vpop.f32.mrf.mxu0
  %v442 = vadd.f32 %v413, %v441
  %443 = vmatmul.bf16.gmra.mxu0 %v182
  %v444 = vpop.f32.mrf.mxu0
  %v445 = vadd.f32 %v416, %v444
  %v446 = vpop.f32.mrf.mxu0
  %v447 = vadd.f32 %v418, %v446
  %448 = vmatmul.bf16.gmra.mxu0 %v186
  %v449 = vpop.f32.mrf.mxu0
  %v450 = vadd.f32 %v421, %v449
  %v451 = vpop.f32.mrf.mxu0
  %v452 = vadd.f32 %v423, %v451
  %453 = vmatmul.bf16.gmra.mxu0 %v190
  %v454 = vpop.f32.mrf.mxu0
  %v455 = vadd.f32 %v426, %v454
  %v456 = vpop.f32.mrf.mxu0
  %v457 = vadd.f32 %v428, %v456
  %458 = vdwg.mxu0
  %459 = vmatpush.bf16.msra.mxu0 %v360
  %460 = vmatpush.bf16.msra.mxu0 %v359
  %461 = vmatpush.bf16.msra.mxu0 %v358
  %462 = vmatpush.bf16.msra.mxu0 %v357
  %463 = vmatpush.bf16.msra.mxu0 %v356
  %464 = vmatpush.bf16.msra.mxu0 %v355
  %465 = vmatpush.bf16.msra.mxu0 %v354
  %466 = vmatpush.bf16.msra.mxu0 %v353
  %467 = vmatmul.bf16.gmra.mxu0 %v179
  %v468 = vpop.f32.mrf.mxu0
  %v469 = vadd.f32 %v440, %v468
  %v470 = vpop.f32.mrf.mxu0
  %v471 = vadd.f32 %v442, %v470
  %472 = vmatmul.bf16.gmra.mxu0 %v183
  %v473 = vpop.f32.mrf.mxu0
  %v474 = vadd.f32 %v445, %v473
  %v475 = vpop.f32.mrf.mxu0
  %v476 = vadd.f32 %v447, %v475
  %477 = vmatmul.bf16.gmra.mxu0 %v187
  %v478 = vpop.f32.mrf.mxu0
  %v479 = vadd.f32 %v450, %v478
  %v480 = vpop.f32.mrf.mxu0
  %v481 = vadd.f32 %v452, %v480
  %482 = vmatmul.bf16.gmra.mxu0 %v191
  %v483 = vpop.f32.mrf.mxu0
  %v484 = vadd.f32 %v455, %v483
  %v485 = vpop.f32.mrf.mxu0
  %v486 = vadd.f32 %v457, %v485
  %487 = vdwg.mxu0
  %488 = vmatpush.bf16.msra.mxu0 %v368
  %489 = vmatpush.bf16.msra.mxu0 %v367
  %490 = vmatpush.bf16.msra.mxu0 %v366
  %491 = vmatpush.bf16.msra.mxu0 %v365
  %492 = vmatpush.bf16.msra.mxu0 %v364
  %493 = vmatpush.bf16.msra.mxu0 %v363
  %494 = vmatpush.bf16.msra.mxu0 %v362
  %495 = vmatpush.bf16.msra.mxu0 %v361
  %496 = vmatmul.bf16.gmra.mxu0 %v180
  %v497 = vpop.f32.mrf.mxu0
  %v498 = vadd.f32 %v469, %v497
  %v499 = vpop.f32.mrf.mxu0
  %v500 = vadd.f32 %v471, %v499
  %501 = vmatmul.bf16.gmra.mxu0 %v184
  %v502 = vpop.f32.mrf.mxu0
  %v503 = vadd.f32 %v474, %v502
  %v504 = vpop.f32.mrf.mxu0
  %v505 = vadd.f32 %v476, %v504
  %506 = vmatmul.bf16.gmra.mxu0 %v188
  %v507 = vpop.f32.mrf.mxu0
  %v508 = vadd.f32 %v479, %v507
  %v509 = vpop.f32.mrf.mxu0
  %v510 = vadd.f32 %v481, %v509
  %511 = vmatmul.bf16.gmra.mxu0 %v192
  %v512 = vpop.f32.mrf.mxu0
  %v513 = vadd.f32 %v484, %v512
  %v514 = vpop.f32.mrf.mxu0
  %v515 = vadd.f32 %v486, %v514
  %516 = vdwg.mxu0
  %v517 = vmax.f32 %v498, %v500
  %v518 = vrot.slane %v517, 4
  %v519 = vmax.f32 %v517, %v518
  %v520 = vrot.slane %v519, 2
  %v521 = vmax.f32 %v519, %v520
  %v522 = vrot.slane %v521, 1
  %v523 = vmax.f32 %v521, %v522
  %v524 = vmax.f32 %v503, %v505
  %v525 = vrot.slane %v524, 4
  %v526 = vmax.f32 %v524, %v525
  %v527 = vrot.slane %v526, 2
  %v528 = vmax.f32 %v526, %v527
  %v529 = vrot.slane %v528, 1
  %v530 = vmax.f32 %v528, %v529
  %v531 = vmax.f32 %v508, %v510
  %v532 = vrot.slane %v531, 4
  %v533 = vmax.f32 %v531, %v532
  %v534 = vrot.slane %v533, 2
  %v535 = vmax.f32 %v533, %v534
  %v536 = vrot.slane %v535, 1
  %v537 = vmax.f32 %v535, %v536
  %v538 = vmax.f32 %v513, %v515
  %v539 = vrot.slane %v538, 4
  %v540 = vmax.f32 %v538, %v539
  %v541 = vrot.slane %v540, 2
  %v542 = vmax.f32 %v540, %v541
  %v543 = vrot.slane %v542, 1
  %v544 = vmax.f32 %v542, %v543
  %vm545 = vcmask 1040384
  %v546 = vsel %vm545, %v523, %v530
  %vm547 = vcmask 1041408
  %v548 = vsel %vm547, %v546, %v537
  %vm549 = vcmask 1042432
  %v550 = vsel %vm549, %v548, %v544
  %v551 = vld [vmem:[%s2] sm:$0x1]
  %v553 = vperm.slane %v551, 0
  %v555 = vadd.f32 %v550, %v553
  %v556 = vmax.f32 %v555, 0.0
  %v557 = vpack.c.bf16 %v556, %v556
  %558 = vst [vmem:[%s14] sm:$0x3] 0.0
  %v559 = vld [vmem:[%s3] sm:$0xff]
  %v560 = vld [vmem:[%s3 + $0x8] sm:$0xff]
  %v561 = vld [vmem:[%s3 + $0x10] sm:$0xff]
  %v562 = vld [vmem:[%s3 + $0x18] sm:$0xff]
  %v563 = vld [vmem:[%s3 + $0x20] sm:$0xff]
  %v564 = vld [vmem:[%s3 + $0x28] sm:$0xff]
  %v565 = vld [vmem:[%s3 + $0x30] sm:$0xff]
  %v566 = vld [vmem:[%s3 + $0x38] sm:$0xff]
  %v567 = vld [vmem:[%s3 + $0x40] sm:$0xff]
  %v568 = vld [vmem:[%s3 + $0x48] sm:$0xff]
  %v569 = vld [vmem:[%s3 + $0x50] sm:$0xff]
  %v570 = vld [vmem:[%s3 + $0x58] sm:$0xff]
  %v571 = vld [vmem:[%s3 + $0x60] sm:$0xff]
  %v572 = vld [vmem:[%s3 + $0x68] sm:$0xff]
  %v573 = vld [vmem:[%s3 + $0x70] sm:$0xff]
  %v574 = vld [vmem:[%s3 + $0x78] sm:$0xff]
  %v575 = vld [vmem:[%s3 + $0x80] sm:$0xff]
  %v576 = vld [vmem:[%s3 + $0x88] sm:$0xff]
  %v577 = vld [vmem:[%s3 + $0x90] sm:$0xff]
  %v578 = vld [vmem:[%s3 + $0x98] sm:$0xff]
  %v579 = vld [vmem:[%s3 + $0xa0] sm:$0xff]
  %v580 = vld [vmem:[%s3 + $0xa8] sm:$0xff]
  %v581 = vld [vmem:[%s3 + $0xb0] sm:$0xff]
  %v582 = vld [vmem:[%s3 + $0xb8] sm:$0xff]
  %v583 = vld [vmem:[%s3 + $0xc0] sm:$0xff]
  %v584 = vld [vmem:[%s3 + $0xc8] sm:$0xff]
  %v585 = vld [vmem:[%s3 + $0xd0] sm:$0xff]
  %v586 = vld [vmem:[%s3 + $0xd8] sm:$0xff]
  %v587 = vld [vmem:[%s3 + $0xe0] sm:$0xff]
  %v588 = vld [vmem:[%s3 + $0xe8] sm:$0xff]
  %v589 = vld [vmem:[%s3 + $0xf0] sm:$0xff]
  %v590 = vld [vmem:[%s3 + $0xf8] sm:$0xff]
  %v591 = vld [vmem:[%s3 + $0x100] sm:$0xff]
  %v592 = vld [vmem:[%s3 + $0x108] sm:$0xff]
  %v593 = vld [vmem:[%s3 + $0x110] sm:$0xff]
  %v594 = vld [vmem:[%s3 + $0x118] sm:$0xff]
  %v595 = vld [vmem:[%s3 + $0x120] sm:$0xff]
  %v596 = vld [vmem:[%s3 + $0x128] sm:$0xff]
  %v597 = vld [vmem:[%s3 + $0x130] sm:$0xff]
  %v598 = vld [vmem:[%s3 + $0x138] sm:$0xff]
  %v599 = vld [vmem:[%s3 + $0x140] sm:$0xff]
  %v600 = vld [vmem:[%s3 + $0x148] sm:$0xff]
  %v601 = vld [vmem:[%s3 + $0x150] sm:$0xff]
  %v602 = vld [vmem:[%s3 + $0x158] sm:$0xff]
  %v603 = vld [vmem:[%s3 + $0x160] sm:$0xff]
  %v604 = vld [vmem:[%s3 + $0x168] sm:$0xff]
  %v605 = vld [vmem:[%s3 + $0x170] sm:$0xff]
  %v606 = vld [vmem:[%s3 + $0x178] sm:$0xff]
  %v607 = vld [vmem:[%s3 + $0x180] sm:$0xff]
  %v608 = vld [vmem:[%s3 + $0x188] sm:$0xff]
  %v609 = vld [vmem:[%s3 + $0x190] sm:$0xff]
  %v610 = vld [vmem:[%s3 + $0x198] sm:$0xff]
  %v611 = vld [vmem:[%s3 + $0x1a0] sm:$0xff]
  %v612 = vld [vmem:[%s3 + $0x1a8] sm:$0xff]
  %v613 = vld [vmem:[%s3 + $0x1b0] sm:$0xff]
  %v614 = vld [vmem:[%s3 + $0x1b8] sm:$0xff]
  %v615 = vld [vmem:[%s3 + $0x1c0] sm:$0xff]
  %v616 = vld [vmem:[%s3 + $0x1c8] sm:$0xff]
  %v617 = vld [vmem:[%s3 + $0x1d0] sm:$0xff]
  %v618 = vld [vmem:[%s3 + $0x1d8] sm:$0xff]
  %v619 = vld [vmem:[%s3 + $0x1e0] sm:$0xff]
  %v620 = vld [vmem:[%s3 + $0x1e8] sm:$0xff]
  %v621 = vld [vmem:[%s3 + $0x1f0] sm:$0xff]
  %v622 = vld [vmem:[%s3 + $0x1f8] sm:$0xff]
  %v623 = vld [vmem:[%s3 + $0x200] sm:$0xff]
  %v624 = vld [vmem:[%s3 + $0x208] sm:$0xff]
  %v625 = vld [vmem:[%s3 + $0x210] sm:$0xff]
  %v626 = vld [vmem:[%s3 + $0x218] sm:$0xff]
  %v627 = vld [vmem:[%s3 + $0x220] sm:$0xff]
  %v628 = vld [vmem:[%s3 + $0x228] sm:$0xff]
  %v629 = vld [vmem:[%s3 + $0x230] sm:$0xff]
  %v630 = vld [vmem:[%s3 + $0x238] sm:$0xff]
  %v631 = vld [vmem:[%s3 + $0x240] sm:$0xff]
  %v632 = vld [vmem:[%s3 + $0x248] sm:$0xff]
  %v633 = vld [vmem:[%s3 + $0x250] sm:$0xff]
  %v634 = vld [vmem:[%s3 + $0x258] sm:$0xff]
  %v635 = vld [vmem:[%s3 + $0x260] sm:$0xff]
  %v636 = vld [vmem:[%s3 + $0x268] sm:$0xff]
  %v637 = vld [vmem:[%s3 + $0x270] sm:$0xff]
  %v638 = vld [vmem:[%s3 + $0x278] sm:$0xff]
  %v639 = vld [vmem:[%s3 + $0x280] sm:$0xff]
  %v640 = vld [vmem:[%s3 + $0x288] sm:$0xff]
  %v641 = vld [vmem:[%s3 + $0x290] sm:$0xff]
  %v642 = vld [vmem:[%s3 + $0x298] sm:$0xff]
  %v643 = vld [vmem:[%s3 + $0x2a0] sm:$0xff]
  %v644 = vld [vmem:[%s3 + $0x2a8] sm:$0xff]
  %v645 = vld [vmem:[%s3 + $0x2b0] sm:$0xff]
  %v646 = vld [vmem:[%s3 + $0x2b8] sm:$0xff]
  %v647 = vld [vmem:[%s3 + $0x2c0] sm:$0xff]
  %v648 = vld [vmem:[%s3 + $0x2c8] sm:$0xff]
  %v649 = vld [vmem:[%s3 + $0x2d0] sm:$0xff]
  %v650 = vld [vmem:[%s3 + $0x2d8] sm:$0xff]
  %v651 = vld [vmem:[%s3 + $0x2e0] sm:$0xff]
  %v652 = vld [vmem:[%s3 + $0x2e8] sm:$0xff]
  %v653 = vld [vmem:[%s3 + $0x2f0] sm:$0xff]
  %v654 = vld [vmem:[%s3 + $0x2f8] sm:$0xff]
  %v655 = vld [vmem:[%s3 + $0x300] sm:$0xff]
  %v656 = vld [vmem:[%s3 + $0x308] sm:$0xff]
  %v657 = vld [vmem:[%s3 + $0x310] sm:$0xff]
  %v658 = vld [vmem:[%s3 + $0x318] sm:$0xff]
  %v659 = vld [vmem:[%s3 + $0x320] sm:$0xff]
  %v660 = vld [vmem:[%s3 + $0x328] sm:$0xff]
  %v661 = vld [vmem:[%s3 + $0x330] sm:$0xff]
  %v662 = vld [vmem:[%s3 + $0x338] sm:$0xff]
  %v663 = vld [vmem:[%s3 + $0x340] sm:$0xff]
  %v664 = vld [vmem:[%s3 + $0x348] sm:$0xff]
  %v665 = vld [vmem:[%s3 + $0x350] sm:$0xff]
  %v666 = vld [vmem:[%s3 + $0x358] sm:$0xff]
  %v667 = vld [vmem:[%s3 + $0x360] sm:$0xff]
  %v668 = vld [vmem:[%s3 + $0x368] sm:$0xff]
  %v669 = vld [vmem:[%s3 + $0x370] sm:$0xff]
  %v670 = vld [vmem:[%s3 + $0x378] sm:$0xff]
  %v671 = vld [vmem:[%s3 + $0x380] sm:$0xff]
  %v672 = vld [vmem:[%s3 + $0x388] sm:$0xff]
  %v673 = vld [vmem:[%s3 + $0x390] sm:$0xff]
  %v674 = vld [vmem:[%s3 + $0x398] sm:$0xff]
  %v675 = vld [vmem:[%s3 + $0x3a0] sm:$0xff]
  %v676 = vld [vmem:[%s3 + $0x3a8] sm:$0xff]
  %v677 = vld [vmem:[%s3 + $0x3b0] sm:$0xff]
  %v678 = vld [vmem:[%s3 + $0x3b8] sm:$0xff]
  %v679 = vld [vmem:[%s3 + $0x3c0] sm:$0xff]
  %v680 = vld [vmem:[%s3 + $0x3c8] sm:$0xff]
  %v681 = vld [vmem:[%s3 + $0x3d0] sm:$0xff]
  %v682 = vld [vmem:[%s3 + $0x3d8] sm:$0xff]
  %v683 = vld [vmem:[%s3 + $0x3e0] sm:$0xff]
  %v684 = vld [vmem:[%s3 + $0x3e8] sm:$0xff]
  %v685 = vld [vmem:[%s3 + $0x3f0] sm:$0xff]
  %v686 = vld [vmem:[%s3 + $0x3f8] sm:$0xff]
  %v687 = vld [vmem:[%s3 + $0x400] sm:$0xff]
  %v688 = vld [vmem:[%s3 + $0x408] sm:$0xff]
  %v689 = vld [vmem:[%s3 + $0x410] sm:$0xff]
  %v690 = vld [vmem:[%s3 + $0x418] sm:$0xff]
  %v691 = vld [vmem:[%s3 + $0x420] sm:$0xff]
  %v692 = vld [vmem:[%s3 + $0x428] sm:$0xff]
  %v693 = vld [vmem:[%s3 + $0x430] sm:$0xff]
  %v694 = vld [vmem:[%s3 + $0x438] sm:$0xff]
  %v695 = vld [vmem:[%s3 + $0x440] sm:$0xff]
  %v696 = vld [vmem:[%s3 + $0x448] sm:$0xff]
  %v697 = vld [vmem:[%s3 + $0x450] sm:$0xff]
  %v698 = vld [vmem:[%s3 + $0x458] sm:$0xff]
  %v699 = vld [vmem:[%s3 + $0x460] sm:$0xff]
  %v700 = vld [vmem:[%s3 + $0x468] sm:$0xff]
  %v701 = vld [vmem:[%s3 + $0x470] sm:$0xff]
  %v702 = vld [vmem:[%s3 + $0x478] sm:$0xff]
  %v703 = vld [vmem:[%s3 + $0x480] sm:$0xff]
  %v704 = vld [vmem:[%s3 + $0x488] sm:$0xff]
  %v705 = vld [vmem:[%s3 + $0x490] sm:$0xff]
  %v706 = vld [vmem:[%s3 + $0x498] sm:$0xff]
  %v707 = vld [vmem:[%s3 + $0x4a0] sm:$0xff]
  %v708 = vld [vmem:[%s3 + $0x4a8] sm:$0xff]
  %v709 = vld [vmem:[%s3 + $0x4b0] sm:$0xff]
  %v710 = vld [vmem:[%s3 + $0x4b8] sm:$0xff]
  %v711 = vld [vmem:[%s3 + $0x4c0] sm:$0xff]
  %v712 = vld [vmem:[%s3 + $0x4c8] sm:$0xff]
  %v713 = vld [vmem:[%s3 + $0x4d0] sm:$0xff]
  %v714 = vld [vmem:[%s3 + $0x4d8] sm:$0xff]
  %v715 = vld [vmem:[%s3 + $0x4e0] sm:$0xff]
  %v716 = vld [vmem:[%s3 + $0x4e8] sm:$0xff]
  %v717 = vld [vmem:[%s3 + $0x4f0] sm:$0xff]
  %v718 = vld [vmem:[%s3 + $0x4f8] sm:$0xff]
  %v719 = vld [vmem:[%s3 + $0x500] sm:$0xff]
  %v720 = vld [vmem:[%s3 + $0x508] sm:$0xff]
  %v721 = vld [vmem:[%s3 + $0x510] sm:$0xff]
  %v722 = vld [vmem:[%s3 + $0x518] sm:$0xff]
  %v723 = vld [vmem:[%s3 + $0x520] sm:$0xff]
  %v724 = vld [vmem:[%s3 + $0x528] sm:$0xff]
  %v725 = vld [vmem:[%s3 + $0x530] sm:$0xff]
  %v726 = vld [vmem:[%s3 + $0x538] sm:$0xff]
  %v727 = vld [vmem:[%s3 + $0x540] sm:$0xff]
  %v728 = vld [vmem:[%s3 + $0x548] sm:$0xff]
  %v729 = vld [vmem:[%s3 + $0x550] sm:$0xff]
  %v730 = vld [vmem:[%s3 + $0x558] sm:$0xff]
  %v731 = vld [vmem:[%s3 + $0x560] sm:$0xff]
  %v732 = vld [vmem:[%s3 + $0x568] sm:$0xff]
  %v733 = vld [vmem:[%s3 + $0x570] sm:$0xff]
  %v734 = vld [vmem:[%s3 + $0x578] sm:$0xff]
  %v735 = vld [vmem:[%s3 + $0x580] sm:$0xff]
  %v736 = vld [vmem:[%s3 + $0x588] sm:$0xff]
  %v737 = vld [vmem:[%s3 + $0x590] sm:$0xff]
  %v738 = vld [vmem:[%s3 + $0x598] sm:$0xff]
  %v739 = vld [vmem:[%s3 + $0x5a0] sm:$0xff]
  %v740 = vld [vmem:[%s3 + $0x5a8] sm:$0xff]
  %v741 = vld [vmem:[%s3 + $0x5b0] sm:$0xff]
  %v742 = vld [vmem:[%s3 + $0x5b8] sm:$0xff]
  %v743 = vld [vmem:[%s3 + $0x5c0] sm:$0xff]
  %v744 = vld [vmem:[%s3 + $0x5c8] sm:$0xff]
  %v745 = vld [vmem:[%s3 + $0x5d0] sm:$0xff]
  %v746 = vld [vmem:[%s3 + $0x5d8] sm:$0xff]
  %v747 = vld [vmem:[%s3 + $0x5e0] sm:$0xff]
  %v748 = vld [vmem:[%s3 + $0x5e8] sm:$0xff]
  %v749 = vld [vmem:[%s3 + $0x5f0] sm:$0xff]
  %v750 = vld [vmem:[%s3 + $0x5f8] sm:$0xff]
  %v751 = vld [vmem:[%s3 + $0x600] sm:$0xff]
  %v752 = vld [vmem:[%s3 + $0x608] sm:$0xff]
  %v753 = vld [vmem:[%s3 + $0x610] sm:$0xff]
  %v754 = vld [vmem:[%s3 + $0x618] sm:$0xff]
  %v755 = vld [vmem:[%s3 + $0x620] sm:$0xff]
  %v756 = vld [vmem:[%s3 + $0x628] sm:$0xff]
  %v757 = vld [vmem:[%s3 + $0x630] sm:$0xff]
  %v758 = vld [vmem:[%s3 + $0x638] sm:$0xff]
  %v759 = vld [vmem:[%s3 + $0x640] sm:$0xff]
  %v760 = vld [vmem:[%s3 + $0x648] sm:$0xff]
  %v761 = vld [vmem:[%s3 + $0x650] sm:$0xff]
  %v762 = vld [vmem:[%s3 + $0x658] sm:$0xff]
  %v763 = vld [vmem:[%s3 + $0x660] sm:$0xff]
  %v764 = vld [vmem:[%s3 + $0x668] sm:$0xff]
  %v765 = vld [vmem:[%s3 + $0x670] sm:$0xff]
  %v766 = vld [vmem:[%s3 + $0x678] sm:$0xff]
  %v767 = vld [vmem:[%s3 + $0x680] sm:$0xff]
  %v768 = vld [vmem:[%s3 + $0x688] sm:$0xff]
  %v769 = vld [vmem:[%s3 + $0x690] sm:$0xff]
  %v770 = vld [vmem:[%s3 + $0x698] sm:$0xff]
  %v771 = vld [vmem:[%s3 + $0x6a0] sm:$0xff]
  %v772 = vld [vmem:[%s3 + $0x6a8] sm:$0xff]
  %v773 = vld [vmem:[%s3 + $0x6b0] sm:$0xff]
  %v774 = vld [vmem:[%s3 + $0x6b8] sm:$0xff]
  %v775 = vld [vmem:[%s3 + $0x6c0] sm:$0xff]
  %v776 = vld [vmem:[%s3 + $0x6c8] sm:$0xff]
  %v777 = vld [vmem:[%s3 + $0x6d0] sm:$0xff]
  %v778 = vld [vmem:[%s3 + $0x6d8] sm:$0xff]
  %v779 = vld [vmem:[%s3 + $0x6e0] sm:$0xff]
  %v780 = vld [vmem:[%s3 + $0x6e8] sm:$0xff]
  %v781 = vld [vmem:[%s3 + $0x6f0] sm:$0xff]
  %v782 = vld [vmem:[%s3 + $0x6f8] sm:$0xff]
  %v783 = vld [vmem:[%s3 + $0x700] sm:$0xff]
  %v784 = vld [vmem:[%s3 + $0x708] sm:$0xff]
  %v785 = vld [vmem:[%s3 + $0x710] sm:$0xff]
  %v786 = vld [vmem:[%s3 + $0x718] sm:$0xff]
  %v787 = vld [vmem:[%s3 + $0x720] sm:$0xff]
  %v788 = vld [vmem:[%s3 + $0x728] sm:$0xff]
  %v789 = vld [vmem:[%s3 + $0x730] sm:$0xff]
  %v790 = vld [vmem:[%s3 + $0x738] sm:$0xff]
  %v791 = vld [vmem:[%s3 + $0x740] sm:$0xff]
  %v792 = vld [vmem:[%s3 + $0x748] sm:$0xff]
  %v793 = vld [vmem:[%s3 + $0x750] sm:$0xff]
  %v794 = vld [vmem:[%s3 + $0x758] sm:$0xff]
  %v795 = vld [vmem:[%s3 + $0x760] sm:$0xff]
  %v796 = vld [vmem:[%s3 + $0x768] sm:$0xff]
  %v797 = vld [vmem:[%s3 + $0x770] sm:$0xff]
  %v798 = vld [vmem:[%s3 + $0x778] sm:$0xff]
  %v799 = vld [vmem:[%s3 + $0x780] sm:$0xff]
  %v800 = vld [vmem:[%s3 + $0x788] sm:$0xff]
  %v801 = vld [vmem:[%s3 + $0x790] sm:$0xff]
  %v802 = vld [vmem:[%s3 + $0x798] sm:$0xff]
  %v803 = vld [vmem:[%s3 + $0x7a0] sm:$0xff]
  %v804 = vld [vmem:[%s3 + $0x7a8] sm:$0xff]
  %v805 = vld [vmem:[%s3 + $0x7b0] sm:$0xff]
  %v806 = vld [vmem:[%s3 + $0x7b8] sm:$0xff]
  %v807 = vld [vmem:[%s3 + $0x7c0] sm:$0xff]
  %v808 = vld [vmem:[%s3 + $0x7c8] sm:$0xff]
  %v809 = vld [vmem:[%s3 + $0x7d0] sm:$0xff]
  %v810 = vld [vmem:[%s3 + $0x7d8] sm:$0xff]
  %v811 = vld [vmem:[%s3 + $0x7e0] sm:$0xff]
  %v812 = vld [vmem:[%s3 + $0x7e8] sm:$0xff]
  %v813 = vld [vmem:[%s3 + $0x7f0] sm:$0xff]
  %v814 = vld [vmem:[%s3 + $0x7f8] sm:$0xff]
  %v815 = vld [vmem:[%s4] sm:$0xff]
  %v816 = vld [vmem:[%s4 + $0x8] sm:$0xff]
  %v817 = vld [vmem:[%s4 + $0x10] sm:$0xff]
  %v818 = vld [vmem:[%s4 + $0x18] sm:$0xff]
  %v823 = vperm.slane %v815, 0
  %v824 = vperm.slane %v815, 1
  %v825 = vperm.slane %v815, 2
  %v826 = vperm.slane %v815, 3
  %v827 = vperm.slane %v815, 4
  %v828 = vperm.slane %v815, 5
  %v829 = vperm.slane %v815, 6
  %v830 = vperm.slane %v815, 7
  %v831 = vperm.slane %v816, 0
  %v832 = vperm.slane %v816, 1
  %v833 = vperm.slane %v816, 2
  %v834 = vperm.slane %v816, 3
  %v835 = vperm.slane %v816, 4
  %v836 = vperm.slane %v816, 5
  %v837 = vperm.slane %v816, 6
  %v838 = vperm.slane %v816, 7
  %v839 = vperm.slane %v817, 0
  %v840 = vperm.slane %v817, 1
  %v841 = vperm.slane %v817, 2
  %v842 = vperm.slane %v817, 3
  %v843 = vperm.slane %v817, 4
  %v844 = vperm.slane %v817, 5
  %v845 = vperm.slane %v817, 6
  %v846 = vperm.slane %v817, 7
  %v847 = vperm.slane %v818, 0
  %v848 = vperm.slane %v818, 1
  %v849 = vperm.slane %v818, 2
  %v850 = vperm.slane %v818, 3
  %v851 = vperm.slane %v818, 4
  %v852 = vperm.slane %v818, 5
  %v853 = vperm.slane %v818, 6
  %v854 = vperm.slane %v818, 7
  %v1143 = vunpack.c.l.b16 %v559
  %v1144 = vunpack.c.h.b16 %v559
  %v1145 = vunpack.c.l.b16 %v560
  %v1146 = vunpack.c.h.b16 %v560
  %v1147 = vunpack.c.l.b16 %v561
  %v1148 = vunpack.c.h.b16 %v561
  %v1149 = vunpack.c.l.b16 %v562
  %v1150 = vunpack.c.h.b16 %v562
  %v1151 = vunpack.c.l.b16 %v563
  %v1152 = vunpack.c.h.b16 %v563
  %v1153 = vunpack.c.l.b16 %v564
  %v1154 = vunpack.c.h.b16 %v564
  %v1155 = vunpack.c.l.b16 %v565
  %v1156 = vunpack.c.h.b16 %v565
  %v1157 = vunpack.c.l.b16 %v566
  %v1158 = vunpack.c.h.b16 %v566
  %v1159 = vunpack.c.l.b16 %v567
  %v1160 = vunpack.c.h.b16 %v567
  %v1161 = vunpack.c.l.b16 %v568
  %v1162 = vunpack.c.h.b16 %v568
  %v1163 = vunpack.c.l.b16 %v569
  %v1164 = vunpack.c.h.b16 %v569
  %v1165 = vunpack.c.l.b16 %v570
  %v1166 = vunpack.c.h.b16 %v570
  %v1167 = vunpack.c.l.b16 %v571
  %v1168 = vunpack.c.h.b16 %v571
  %v1169 = vunpack.c.l.b16 %v572
  %v1170 = vunpack.c.h.b16 %v572
  %v1171 = vunpack.c.l.b16 %v573
  %v1172 = vunpack.c.h.b16 %v573
  %v1173 = vunpack.c.l.b16 %v574
  %v1174 = vunpack.c.h.b16 %v574
  %v1175 = vunpack.c.l.b16 %v575
  %v1176 = vunpack.c.h.b16 %v575
  %v1177 = vunpack.c.l.b16 %v576
  %v1178 = vunpack.c.h.b16 %v576
  %v1179 = vunpack.c.l.b16 %v577
  %v1180 = vunpack.c.h.b16 %v577
  %v1181 = vunpack.c.l.b16 %v578
  %v1182 = vunpack.c.h.b16 %v578
  %v1183 = vunpack.c.l.b16 %v579
  %v1184 = vunpack.c.h.b16 %v579
  %v1185 = vunpack.c.l.b16 %v580
  %v1186 = vunpack.c.h.b16 %v580
  %v1187 = vunpack.c.l.b16 %v581
  %v1188 = vunpack.c.h.b16 %v581
  %v1189 = vunpack.c.l.b16 %v582
  %v1190 = vunpack.c.h.b16 %v582
  %v1191 = vunpack.c.l.b16 %v583
  %v1192 = vunpack.c.h.b16 %v583
  %v1193 = vunpack.c.l.b16 %v584
  %v1194 = vunpack.c.h.b16 %v584
  %v1195 = vunpack.c.l.b16 %v585
  %v1196 = vunpack.c.h.b16 %v585
  %v1197 = vunpack.c.l.b16 %v586
  %v1198 = vunpack.c.h.b16 %v586
  %v1199 = vunpack.c.l.b16 %v587
  %v1200 = vunpack.c.h.b16 %v587
  %v1201 = vunpack.c.l.b16 %v588
  %v1202 = vunpack.c.h.b16 %v588
  %v1203 = vunpack.c.l.b16 %v589
  %v1204 = vunpack.c.h.b16 %v589
  %v1205 = vunpack.c.l.b16 %v590
  %v1206 = vunpack.c.h.b16 %v590
  %v1207 = vunpack.c.l.b16 %v591
  %v1208 = vunpack.c.h.b16 %v591
  %v1209 = vunpack.c.l.b16 %v592
  %v1210 = vunpack.c.h.b16 %v592
  %v1211 = vunpack.c.l.b16 %v593
  %v1212 = vunpack.c.h.b16 %v593
  %v1213 = vunpack.c.l.b16 %v594
  %v1214 = vunpack.c.h.b16 %v594
  %v1215 = vunpack.c.l.b16 %v595
  %v1216 = vunpack.c.h.b16 %v595
  %v1217 = vunpack.c.l.b16 %v596
  %v1218 = vunpack.c.h.b16 %v596
  %v1219 = vunpack.c.l.b16 %v597
  %v1220 = vunpack.c.h.b16 %v597
  %v1221 = vunpack.c.l.b16 %v598
  %v1222 = vunpack.c.h.b16 %v598
  %v1223 = vunpack.c.l.b16 %v599
  %v1224 = vunpack.c.h.b16 %v599
  %v1225 = vunpack.c.l.b16 %v600
  %v1226 = vunpack.c.h.b16 %v600
  %v1227 = vunpack.c.l.b16 %v601
  %v1228 = vunpack.c.h.b16 %v601
  %v1229 = vunpack.c.l.b16 %v602
  %v1230 = vunpack.c.h.b16 %v602
  %v1231 = vunpack.c.l.b16 %v603
  %v1232 = vunpack.c.h.b16 %v603
  %v1233 = vunpack.c.l.b16 %v604
  %v1234 = vunpack.c.h.b16 %v604
  %v1235 = vunpack.c.l.b16 %v605
  %v1236 = vunpack.c.h.b16 %v605
  %v1237 = vunpack.c.l.b16 %v606
  %v1238 = vunpack.c.h.b16 %v606
  %v1239 = vunpack.c.l.b16 %v607
  %v1240 = vunpack.c.h.b16 %v607
  %v1241 = vunpack.c.l.b16 %v608
  %v1242 = vunpack.c.h.b16 %v608
  %v1243 = vunpack.c.l.b16 %v609
  %v1244 = vunpack.c.h.b16 %v609
  %v1245 = vunpack.c.l.b16 %v610
  %v1246 = vunpack.c.h.b16 %v610
  %v1247 = vunpack.c.l.b16 %v611
  %v1248 = vunpack.c.h.b16 %v611
  %v1249 = vunpack.c.l.b16 %v612
  %v1250 = vunpack.c.h.b16 %v612
  %v1251 = vunpack.c.l.b16 %v613
  %v1252 = vunpack.c.h.b16 %v613
  %v1253 = vunpack.c.l.b16 %v614
  %v1254 = vunpack.c.h.b16 %v614
  %v1255 = vunpack.c.l.b16 %v615
  %v1256 = vunpack.c.h.b16 %v615
  %v1257 = vunpack.c.l.b16 %v616
  %v1258 = vunpack.c.h.b16 %v616
  %v1259 = vunpack.c.l.b16 %v617
  %v1260 = vunpack.c.h.b16 %v617
  %v1261 = vunpack.c.l.b16 %v618
  %v1262 = vunpack.c.h.b16 %v618
  %v1263 = vunpack.c.l.b16 %v619
  %v1264 = vunpack.c.h.b16 %v619
  %v1265 = vunpack.c.l.b16 %v620
  %v1266 = vunpack.c.h.b16 %v620
  %v1267 = vunpack.c.l.b16 %v621
  %v1268 = vunpack.c.h.b16 %v621
  %v1269 = vunpack.c.l.b16 %v622
  %v1270 = vunpack.c.h.b16 %v622
  %v1271 = vunpack.c.l.b16 %v623
  %v1272 = vunpack.c.h.b16 %v623
  %v1273 = vunpack.c.l.b16 %v624
  %v1274 = vunpack.c.h.b16 %v624
  %v1275 = vunpack.c.l.b16 %v625
  %v1276 = vunpack.c.h.b16 %v625
  %v1277 = vunpack.c.l.b16 %v626
  %v1278 = vunpack.c.h.b16 %v626
  %v1279 = vunpack.c.l.b16 %v627
  %v1280 = vunpack.c.h.b16 %v627
  %v1281 = vunpack.c.l.b16 %v628
  %v1282 = vunpack.c.h.b16 %v628
  %v1283 = vunpack.c.l.b16 %v629
  %v1284 = vunpack.c.h.b16 %v629
  %v1285 = vunpack.c.l.b16 %v630
  %v1286 = vunpack.c.h.b16 %v630
  %v1287 = vunpack.c.l.b16 %v631
  %v1288 = vunpack.c.h.b16 %v631
  %v1289 = vunpack.c.l.b16 %v632
  %v1290 = vunpack.c.h.b16 %v632
  %v1291 = vunpack.c.l.b16 %v633
  %v1292 = vunpack.c.h.b16 %v633
  %v1293 = vunpack.c.l.b16 %v634
  %v1294 = vunpack.c.h.b16 %v634
  %v1295 = vunpack.c.l.b16 %v635
  %v1296 = vunpack.c.h.b16 %v635
  %v1297 = vunpack.c.l.b16 %v636
  %v1298 = vunpack.c.h.b16 %v636
  %v1299 = vunpack.c.l.b16 %v637
  %v1300 = vunpack.c.h.b16 %v637
  %v1301 = vunpack.c.l.b16 %v638
  %v1302 = vunpack.c.h.b16 %v638
  %v1303 = vunpack.c.l.b16 %v639
  %v1304 = vunpack.c.h.b16 %v639
  %v1305 = vunpack.c.l.b16 %v640
  %v1306 = vunpack.c.h.b16 %v640
  %v1307 = vunpack.c.l.b16 %v641
  %v1308 = vunpack.c.h.b16 %v641
  %v1309 = vunpack.c.l.b16 %v642
  %v1310 = vunpack.c.h.b16 %v642
  %v1311 = vunpack.c.l.b16 %v643
  %v1312 = vunpack.c.h.b16 %v643
  %v1313 = vunpack.c.l.b16 %v644
  %v1314 = vunpack.c.h.b16 %v644
  %v1315 = vunpack.c.l.b16 %v645
  %v1316 = vunpack.c.h.b16 %v645
  %v1317 = vunpack.c.l.b16 %v646
  %v1318 = vunpack.c.h.b16 %v646
  %v1319 = vunpack.c.l.b16 %v647
  %v1320 = vunpack.c.h.b16 %v647
  %v1321 = vunpack.c.l.b16 %v648
  %v1322 = vunpack.c.h.b16 %v648
  %v1323 = vunpack.c.l.b16 %v649
  %v1324 = vunpack.c.h.b16 %v649
  %v1325 = vunpack.c.l.b16 %v650
  %v1326 = vunpack.c.h.b16 %v650
  %v1327 = vunpack.c.l.b16 %v651
  %v1328 = vunpack.c.h.b16 %v651
  %v1329 = vunpack.c.l.b16 %v652
  %v1330 = vunpack.c.h.b16 %v652
  %v1331 = vunpack.c.l.b16 %v653
  %v1332 = vunpack.c.h.b16 %v653
  %v1333 = vunpack.c.l.b16 %v654
  %v1334 = vunpack.c.h.b16 %v654
  %v1335 = vunpack.c.l.b16 %v655
  %v1336 = vunpack.c.h.b16 %v655
  %v1337 = vunpack.c.l.b16 %v656
  %v1338 = vunpack.c.h.b16 %v656
  %v1339 = vunpack.c.l.b16 %v657
  %v1340 = vunpack.c.h.b16 %v657
  %v1341 = vunpack.c.l.b16 %v658
  %v1342 = vunpack.c.h.b16 %v658
  %v1343 = vunpack.c.l.b16 %v659
  %v1344 = vunpack.c.h.b16 %v659
  %v1345 = vunpack.c.l.b16 %v660
  %v1346 = vunpack.c.h.b16 %v660
  %v1347 = vunpack.c.l.b16 %v661
  %v1348 = vunpack.c.h.b16 %v661
  %v1349 = vunpack.c.l.b16 %v662
  %v1350 = vunpack.c.h.b16 %v662
  %v1351 = vunpack.c.l.b16 %v663
  %v1352 = vunpack.c.h.b16 %v663
  %v1353 = vunpack.c.l.b16 %v664
  %v1354 = vunpack.c.h.b16 %v664
  %v1355 = vunpack.c.l.b16 %v665
  %v1356 = vunpack.c.h.b16 %v665
  %v1357 = vunpack.c.l.b16 %v666
  %v1358 = vunpack.c.h.b16 %v666
  %v1359 = vunpack.c.l.b16 %v667
  %v1360 = vunpack.c.h.b16 %v667
  %v1361 = vunpack.c.l.b16 %v668
  %v1362 = vunpack.c.h.b16 %v668
  %v1363 = vunpack.c.l.b16 %v669
  %v1364 = vunpack.c.h.b16 %v669
  %v1365 = vunpack.c.l.b16 %v670
  %v1366 = vunpack.c.h.b16 %v670
  %v1367 = vunpack.c.l.b16 %v671
  %v1368 = vunpack.c.h.b16 %v671
  %v1369 = vunpack.c.l.b16 %v672
  %v1370 = vunpack.c.h.b16 %v672
  %v1371 = vunpack.c.l.b16 %v673
  %v1372 = vunpack.c.h.b16 %v673
  %v1373 = vunpack.c.l.b16 %v674
  %v1374 = vunpack.c.h.b16 %v674
  %v1375 = vunpack.c.l.b16 %v675
  %v1376 = vunpack.c.h.b16 %v675
  %v1377 = vunpack.c.l.b16 %v676
  %v1378 = vunpack.c.h.b16 %v676
  %v1379 = vunpack.c.l.b16 %v677
  %v1380 = vunpack.c.h.b16 %v677
  %v1381 = vunpack.c.l.b16 %v678
  %v1382 = vunpack.c.h.b16 %v678
  %v1383 = vunpack.c.l.b16 %v679
  %v1384 = vunpack.c.h.b16 %v679
  %v1385 = vunpack.c.l.b16 %v680
  %v1386 = vunpack.c.h.b16 %v680
  %v1387 = vunpack.c.l.b16 %v681
  %v1388 = vunpack.c.h.b16 %v681
  %v1389 = vunpack.c.l.b16 %v682
  %v1390 = vunpack.c.h.b16 %v682
  %v1391 = vunpack.c.l.b16 %v683
  %v1392 = vunpack.c.h.b16 %v683
  %v1393 = vunpack.c.l.b16 %v684
  %v1394 = vunpack.c.h.b16 %v684
  %v1395 = vunpack.c.l.b16 %v685
  %v1396 = vunpack.c.h.b16 %v685
  %v1397 = vunpack.c.l.b16 %v686
  %v1398 = vunpack.c.h.b16 %v686
  %v1399 = vunpack.c.l.b16 %v687
  %v1400 = vunpack.c.h.b16 %v687
  %v1401 = vunpack.c.l.b16 %v688
  %v1402 = vunpack.c.h.b16 %v688
  %v1403 = vunpack.c.l.b16 %v689
  %v1404 = vunpack.c.h.b16 %v689
  %v1405 = vunpack.c.l.b16 %v690
  %v1406 = vunpack.c.h.b16 %v690
  %v1407 = vunpack.c.l.b16 %v691
  %v1408 = vunpack.c.h.b16 %v691
  %v1409 = vunpack.c.l.b16 %v692
  %v1410 = vunpack.c.h.b16 %v692
  %v1411 = vunpack.c.l.b16 %v693
  %v1412 = vunpack.c.h.b16 %v693
  %v1413 = vunpack.c.l.b16 %v694
  %v1414 = vunpack.c.h.b16 %v694
  %v1415 = vunpack.c.l.b16 %v695
  %v1416 = vunpack.c.h.b16 %v695
  %v1417 = vunpack.c.l.b16 %v696
  %v1418 = vunpack.c.h.b16 %v696
  %v1419 = vunpack.c.l.b16 %v697
  %v1420 = vunpack.c.h.b16 %v697
  %v1421 = vunpack.c.l.b16 %v698
  %v1422 = vunpack.c.h.b16 %v698
  %v1423 = vunpack.c.l.b16 %v699
  %v1424 = vunpack.c.h.b16 %v699
  %v1425 = vunpack.c.l.b16 %v700
  %v1426 = vunpack.c.h.b16 %v700
  %v1427 = vunpack.c.l.b16 %v701
  %v1428 = vunpack.c.h.b16 %v701
  %v1429 = vunpack.c.l.b16 %v702
  %v1430 = vunpack.c.h.b16 %v702
  %v1431 = vunpack.c.l.b16 %v703
  %v1432 = vunpack.c.h.b16 %v703
  %v1433 = vunpack.c.l.b16 %v704
  %v1434 = vunpack.c.h.b16 %v704
  %v1435 = vunpack.c.l.b16 %v705
  %v1436 = vunpack.c.h.b16 %v705
  %v1437 = vunpack.c.l.b16 %v706
  %v1438 = vunpack.c.h.b16 %v706
  %v1439 = vunpack.c.l.b16 %v707
  %v1440 = vunpack.c.h.b16 %v707
  %v1441 = vunpack.c.l.b16 %v708
  %v1442 = vunpack.c.h.b16 %v708
  %v1443 = vunpack.c.l.b16 %v709
  %v1444 = vunpack.c.h.b16 %v709
  %v1445 = vunpack.c.l.b16 %v710
  %v1446 = vunpack.c.h.b16 %v710
  %v1447 = vunpack.c.l.b16 %v711
  %v1448 = vunpack.c.h.b16 %v711
  %v1449 = vunpack.c.l.b16 %v712
  %v1450 = vunpack.c.h.b16 %v712
  %v1451 = vunpack.c.l.b16 %v713
  %v1452 = vunpack.c.h.b16 %v713
  %v1453 = vunpack.c.l.b16 %v714
  %v1454 = vunpack.c.h.b16 %v714
  %v1455 = vunpack.c.l.b16 %v715
  %v1456 = vunpack.c.h.b16 %v715
  %v1457 = vunpack.c.l.b16 %v716
  %v1458 = vunpack.c.h.b16 %v716
  %v1459 = vunpack.c.l.b16 %v717
  %v1460 = vunpack.c.h.b16 %v717
  %v1461 = vunpack.c.l.b16 %v718
  %v1462 = vunpack.c.h.b16 %v718
  %v1463 = vunpack.c.l.b16 %v719
  %v1464 = vunpack.c.h.b16 %v719
  %v1465 = vunpack.c.l.b16 %v720
  %v1466 = vunpack.c.h.b16 %v720
  %v1467 = vunpack.c.l.b16 %v721
  %v1468 = vunpack.c.h.b16 %v721
  %v1469 = vunpack.c.l.b16 %v722
  %v1470 = vunpack.c.h.b16 %v722
  %v1471 = vunpack.c.l.b16 %v723
  %v1472 = vunpack.c.h.b16 %v723
  %v1473 = vunpack.c.l.b16 %v724
  %v1474 = vunpack.c.h.b16 %v724
  %v1475 = vunpack.c.l.b16 %v725
  %v1476 = vunpack.c.h.b16 %v725
  %v1477 = vunpack.c.l.b16 %v726
  %v1478 = vunpack.c.h.b16 %v726
  %v1479 = vunpack.c.l.b16 %v727
  %v1480 = vunpack.c.h.b16 %v727
  %v1481 = vunpack.c.l.b16 %v728
  %v1482 = vunpack.c.h.b16 %v728
  %v1483 = vunpack.c.l.b16 %v729
  %v1484 = vunpack.c.h.b16 %v729
  %v1485 = vunpack.c.l.b16 %v730
  %v1486 = vunpack.c.h.b16 %v730
  %v1487 = vunpack.c.l.b16 %v731
  %v1488 = vunpack.c.h.b16 %v731
  %v1489 = vunpack.c.l.b16 %v732
  %v1490 = vunpack.c.h.b16 %v732
  %v1491 = vunpack.c.l.b16 %v733
  %v1492 = vunpack.c.h.b16 %v733
  %v1493 = vunpack.c.l.b16 %v734
  %v1494 = vunpack.c.h.b16 %v734
  %v1495 = vunpack.c.l.b16 %v735
  %v1496 = vunpack.c.h.b16 %v735
  %v1497 = vunpack.c.l.b16 %v736
  %v1498 = vunpack.c.h.b16 %v736
  %v1499 = vunpack.c.l.b16 %v737
  %v1500 = vunpack.c.h.b16 %v737
  %v1501 = vunpack.c.l.b16 %v738
  %v1502 = vunpack.c.h.b16 %v738
  %v1503 = vunpack.c.l.b16 %v739
  %v1504 = vunpack.c.h.b16 %v739
  %v1505 = vunpack.c.l.b16 %v740
  %v1506 = vunpack.c.h.b16 %v740
  %v1507 = vunpack.c.l.b16 %v741
  %v1508 = vunpack.c.h.b16 %v741
  %v1509 = vunpack.c.l.b16 %v742
  %v1510 = vunpack.c.h.b16 %v742
  %v1511 = vunpack.c.l.b16 %v743
  %v1512 = vunpack.c.h.b16 %v743
  %v1513 = vunpack.c.l.b16 %v744
  %v1514 = vunpack.c.h.b16 %v744
  %v1515 = vunpack.c.l.b16 %v745
  %v1516 = vunpack.c.h.b16 %v745
  %v1517 = vunpack.c.l.b16 %v746
  %v1518 = vunpack.c.h.b16 %v746
  %v1519 = vunpack.c.l.b16 %v747
  %v1520 = vunpack.c.h.b16 %v747
  %v1521 = vunpack.c.l.b16 %v748
  %v1522 = vunpack.c.h.b16 %v748
  %v1523 = vunpack.c.l.b16 %v749
  %v1524 = vunpack.c.h.b16 %v749
  %v1525 = vunpack.c.l.b16 %v750
  %v1526 = vunpack.c.h.b16 %v750
  %v1527 = vunpack.c.l.b16 %v751
  %v1528 = vunpack.c.h.b16 %v751
  %v1529 = vunpack.c.l.b16 %v752
  %v1530 = vunpack.c.h.b16 %v752
  %v1531 = vunpack.c.l.b16 %v753
  %v1532 = vunpack.c.h.b16 %v753
  %v1533 = vunpack.c.l.b16 %v754
  %v1534 = vunpack.c.h.b16 %v754
  %v1535 = vunpack.c.l.b16 %v755
  %v1536 = vunpack.c.h.b16 %v755
  %v1537 = vunpack.c.l.b16 %v756
  %v1538 = vunpack.c.h.b16 %v756
  %v1539 = vunpack.c.l.b16 %v757
  %v1540 = vunpack.c.h.b16 %v757
  %v1541 = vunpack.c.l.b16 %v758
  %v1542 = vunpack.c.h.b16 %v758
  %v1543 = vunpack.c.l.b16 %v759
  %v1544 = vunpack.c.h.b16 %v759
  %v1545 = vunpack.c.l.b16 %v760
  %v1546 = vunpack.c.h.b16 %v760
  %v1547 = vunpack.c.l.b16 %v761
  %v1548 = vunpack.c.h.b16 %v761
  %v1549 = vunpack.c.l.b16 %v762
  %v1550 = vunpack.c.h.b16 %v762
  %v1551 = vunpack.c.l.b16 %v763
  %v1552 = vunpack.c.h.b16 %v763
  %v1553 = vunpack.c.l.b16 %v764
  %v1554 = vunpack.c.h.b16 %v764
  %v1555 = vunpack.c.l.b16 %v765
  %v1556 = vunpack.c.h.b16 %v765
  %v1557 = vunpack.c.l.b16 %v766
  %v1558 = vunpack.c.h.b16 %v766
  %v1559 = vunpack.c.l.b16 %v767
  %v1560 = vunpack.c.h.b16 %v767
  %v1561 = vunpack.c.l.b16 %v768
  %v1562 = vunpack.c.h.b16 %v768
  %v1563 = vunpack.c.l.b16 %v769
  %v1564 = vunpack.c.h.b16 %v769
  %v1565 = vunpack.c.l.b16 %v770
  %v1566 = vunpack.c.h.b16 %v770
  %v1567 = vunpack.c.l.b16 %v771
  %v1568 = vunpack.c.h.b16 %v771
  %v1569 = vunpack.c.l.b16 %v772
  %v1570 = vunpack.c.h.b16 %v772
  %v1571 = vunpack.c.l.b16 %v773
  %v1572 = vunpack.c.h.b16 %v773
  %v1573 = vunpack.c.l.b16 %v774
  %v1574 = vunpack.c.h.b16 %v774
  %v1575 = vunpack.c.l.b16 %v775
  %v1576 = vunpack.c.h.b16 %v775
  %v1577 = vunpack.c.l.b16 %v776
  %v1578 = vunpack.c.h.b16 %v776
  %v1579 = vunpack.c.l.b16 %v777
  %v1580 = vunpack.c.h.b16 %v777
  %v1581 = vunpack.c.l.b16 %v778
  %v1582 = vunpack.c.h.b16 %v778
  %v1583 = vunpack.c.l.b16 %v779
  %v1584 = vunpack.c.h.b16 %v779
  %v1585 = vunpack.c.l.b16 %v780
  %v1586 = vunpack.c.h.b16 %v780
  %v1587 = vunpack.c.l.b16 %v781
  %v1588 = vunpack.c.h.b16 %v781
  %v1589 = vunpack.c.l.b16 %v782
  %v1590 = vunpack.c.h.b16 %v782
  %v1591 = vunpack.c.l.b16 %v783
  %v1592 = vunpack.c.h.b16 %v783
  %v1593 = vunpack.c.l.b16 %v784
  %v1594 = vunpack.c.h.b16 %v784
  %v1595 = vunpack.c.l.b16 %v785
  %v1596 = vunpack.c.h.b16 %v785
  %v1597 = vunpack.c.l.b16 %v786
  %v1598 = vunpack.c.h.b16 %v786
  %v1599 = vunpack.c.l.b16 %v787
  %v1600 = vunpack.c.h.b16 %v787
  %v1601 = vunpack.c.l.b16 %v788
  %v1602 = vunpack.c.h.b16 %v788
  %v1603 = vunpack.c.l.b16 %v789
  %v1604 = vunpack.c.h.b16 %v789
  %v1605 = vunpack.c.l.b16 %v790
  %v1606 = vunpack.c.h.b16 %v790
  %v1607 = vunpack.c.l.b16 %v791
  %v1608 = vunpack.c.h.b16 %v791
  %v1609 = vunpack.c.l.b16 %v792
  %v1610 = vunpack.c.h.b16 %v792
  %v1611 = vunpack.c.l.b16 %v793
  %v1612 = vunpack.c.h.b16 %v793
  %v1613 = vunpack.c.l.b16 %v794
  %v1614 = vunpack.c.h.b16 %v794
  %v1615 = vunpack.c.l.b16 %v795
  %v1616 = vunpack.c.h.b16 %v795
  %v1617 = vunpack.c.l.b16 %v796
  %v1618 = vunpack.c.h.b16 %v796
  %v1619 = vunpack.c.l.b16 %v797
  %v1620 = vunpack.c.h.b16 %v797
  %v1621 = vunpack.c.l.b16 %v798
  %v1622 = vunpack.c.h.b16 %v798
  %v1623 = vunpack.c.l.b16 %v799
  %v1624 = vunpack.c.h.b16 %v799
  %v1625 = vunpack.c.l.b16 %v800
  %v1626 = vunpack.c.h.b16 %v800
  %v1627 = vunpack.c.l.b16 %v801
  %v1628 = vunpack.c.h.b16 %v801
  %v1629 = vunpack.c.l.b16 %v802
  %v1630 = vunpack.c.h.b16 %v802
  %v1631 = vunpack.c.l.b16 %v803
  %v1632 = vunpack.c.h.b16 %v803
  %v1633 = vunpack.c.l.b16 %v804
  %v1634 = vunpack.c.h.b16 %v804
  %v1635 = vunpack.c.l.b16 %v805
  %v1636 = vunpack.c.h.b16 %v805
  %v1637 = vunpack.c.l.b16 %v806
  %v1638 = vunpack.c.h.b16 %v806
  %v1639 = vunpack.c.l.b16 %v807
  %v1640 = vunpack.c.h.b16 %v807
  %v1641 = vunpack.c.l.b16 %v808
  %v1642 = vunpack.c.h.b16 %v808
  %v1643 = vunpack.c.l.b16 %v809
  %v1644 = vunpack.c.h.b16 %v809
  %v1645 = vunpack.c.l.b16 %v810
  %v1646 = vunpack.c.h.b16 %v810
  %v1647 = vunpack.c.l.b16 %v811
  %v1648 = vunpack.c.h.b16 %v811
  %v1649 = vunpack.c.l.b16 %v812
  %v1650 = vunpack.c.h.b16 %v812
  %v1651 = vunpack.c.l.b16 %v813
  %v1652 = vunpack.c.h.b16 %v813
  %v1653 = vunpack.c.l.b16 %v814
  %v1654 = vunpack.c.h.b16 %v814
  %v1655 = vpack.c.b16 %v1175, %v1143
  %v1656 = vpack.c.b16 %v1176, %v1144
  %v1657 = vpack.c.b16 %v1177, %v1145
  %v1658 = vpack.c.b16 %v1178, %v1146
  %v1659 = vpack.c.b16 %v1179, %v1147
  %v1660 = vpack.c.b16 %v1180, %v1148
  %v1661 = vpack.c.b16 %v1181, %v1149
  %v1662 = vpack.c.b16 %v1182, %v1150
  %v1663 = vpack.c.b16 %v1183, %v1151
  %v1664 = vpack.c.b16 %v1184, %v1152
  %v1665 = vpack.c.b16 %v1185, %v1153
  %v1666 = vpack.c.b16 %v1186, %v1154
  %v1667 = vpack.c.b16 %v1187, %v1155
  %v1668 = vpack.c.b16 %v1188, %v1156
  %v1669 = vpack.c.b16 %v1189, %v1157
  %v1670 = vpack.c.b16 %v1190, %v1158
  %v1671 = vpack.c.b16 %v1191, %v1159
  %v1672 = vpack.c.b16 %v1192, %v1160
  %v1673 = vpack.c.b16 %v1193, %v1161
  %v1674 = vpack.c.b16 %v1194, %v1162
  %v1675 = vpack.c.b16 %v1195, %v1163
  %v1676 = vpack.c.b16 %v1196, %v1164
  %v1677 = vpack.c.b16 %v1197, %v1165
  %v1678 = vpack.c.b16 %v1198, %v1166
  %v1679 = vpack.c.b16 %v1199, %v1167
  %v1680 = vpack.c.b16 %v1200, %v1168
  %v1681 = vpack.c.b16 %v1201, %v1169
  %v1682 = vpack.c.b16 %v1202, %v1170
  %v1683 = vpack.c.b16 %v1203, %v1171
  %v1684 = vpack.c.b16 %v1204, %v1172
  %v1685 = vpack.c.b16 %v1205, %v1173
  %v1686 = vpack.c.b16 %v1206, %v1174
  %v1687 = vpack.c.b16 %v1239, %v1207
  %v1688 = vpack.c.b16 %v1240, %v1208
  %v1689 = vpack.c.b16 %v1241, %v1209
  %v1690 = vpack.c.b16 %v1242, %v1210
  %v1691 = vpack.c.b16 %v1243, %v1211
  %v1692 = vpack.c.b16 %v1244, %v1212
  %v1693 = vpack.c.b16 %v1245, %v1213
  %v1694 = vpack.c.b16 %v1246, %v1214
  %v1695 = vpack.c.b16 %v1247, %v1215
  %v1696 = vpack.c.b16 %v1248, %v1216
  %v1697 = vpack.c.b16 %v1249, %v1217
  %v1698 = vpack.c.b16 %v1250, %v1218
  %v1699 = vpack.c.b16 %v1251, %v1219
  %v1700 = vpack.c.b16 %v1252, %v1220
  %v1701 = vpack.c.b16 %v1253, %v1221
  %v1702 = vpack.c.b16 %v1254, %v1222
  %v1703 = vpack.c.b16 %v1255, %v1223
  %v1704 = vpack.c.b16 %v1256, %v1224
  %v1705 = vpack.c.b16 %v1257, %v1225
  %v1706 = vpack.c.b16 %v1258, %v1226
  %v1707 = vpack.c.b16 %v1259, %v1227
  %v1708 = vpack.c.b16 %v1260, %v1228
  %v1709 = vpack.c.b16 %v1261, %v1229
  %v1710 = vpack.c.b16 %v1262, %v1230
  %v1711 = vpack.c.b16 %v1263, %v1231
  %v1712 = vpack.c.b16 %v1264, %v1232
  %v1713 = vpack.c.b16 %v1265, %v1233
  %v1714 = vpack.c.b16 %v1266, %v1234
  %v1715 = vpack.c.b16 %v1267, %v1235
  %v1716 = vpack.c.b16 %v1268, %v1236
  %v1717 = vpack.c.b16 %v1269, %v1237
  %v1718 = vpack.c.b16 %v1270, %v1238
  %v1719 = vpack.c.b16 %v1303, %v1271
  %v1720 = vpack.c.b16 %v1304, %v1272
  %v1721 = vpack.c.b16 %v1305, %v1273
  %v1722 = vpack.c.b16 %v1306, %v1274
  %v1723 = vpack.c.b16 %v1307, %v1275
  %v1724 = vpack.c.b16 %v1308, %v1276
  %v1725 = vpack.c.b16 %v1309, %v1277
  %v1726 = vpack.c.b16 %v1310, %v1278
  %v1727 = vpack.c.b16 %v1311, %v1279
  %v1728 = vpack.c.b16 %v1312, %v1280
  %v1729 = vpack.c.b16 %v1313, %v1281
  %v1730 = vpack.c.b16 %v1314, %v1282
  %v1731 = vpack.c.b16 %v1315, %v1283
  %v1732 = vpack.c.b16 %v1316, %v1284
  %v1733 = vpack.c.b16 %v1317, %v1285
  %v1734 = vpack.c.b16 %v1318, %v1286
  %v1735 = vpack.c.b16 %v1319, %v1287
  %v1736 = vpack.c.b16 %v1320, %v1288
  %v1737 = vpack.c.b16 %v1321, %v1289
  %v1738 = vpack.c.b16 %v1322, %v1290
  %v1739 = vpack.c.b16 %v1323, %v1291
  %v1740 = vpack.c.b16 %v1324, %v1292
  %v1741 = vpack.c.b16 %v1325, %v1293
  %v1742 = vpack.c.b16 %v1326, %v1294
  %v1743 = vpack.c.b16 %v1327, %v1295
  %v1744 = vpack.c.b16 %v1328, %v1296
  %v1745 = vpack.c.b16 %v1329, %v1297
  %v1746 = vpack.c.b16 %v1330, %v1298
  %v1747 = vpack.c.b16 %v1331, %v1299
  %v1748 = vpack.c.b16 %v1332, %v1300
  %v1749 = vpack.c.b16 %v1333, %v1301
  %v1750 = vpack.c.b16 %v1334, %v1302
  %v1751 = vpack.c.b16 %v1367, %v1335
  %v1752 = vpack.c.b16 %v1368, %v1336
  %v1753 = vpack.c.b16 %v1369, %v1337
  %v1754 = vpack.c.b16 %v1370, %v1338
  %v1755 = vpack.c.b16 %v1371, %v1339
  %v1756 = vpack.c.b16 %v1372, %v1340
  %v1757 = vpack.c.b16 %v1373, %v1341
  %v1758 = vpack.c.b16 %v1374, %v1342
  %v1759 = vpack.c.b16 %v1375, %v1343
  %v1760 = vpack.c.b16 %v1376, %v1344
  %v1761 = vpack.c.b16 %v1377, %v1345
  %v1762 = vpack.c.b16 %v1378, %v1346
  %v1763 = vpack.c.b16 %v1379, %v1347
  %v1764 = vpack.c.b16 %v1380, %v1348
  %v1765 = vpack.c.b16 %v1381, %v1349
  %v1766 = vpack.c.b16 %v1382, %v1350
  %v1767 = vpack.c.b16 %v1383, %v1351
  %v1768 = vpack.c.b16 %v1384, %v1352
  %v1769 = vpack.c.b16 %v1385, %v1353
  %v1770 = vpack.c.b16 %v1386, %v1354
  %v1771 = vpack.c.b16 %v1387, %v1355
  %v1772 = vpack.c.b16 %v1388, %v1356
  %v1773 = vpack.c.b16 %v1389, %v1357
  %v1774 = vpack.c.b16 %v1390, %v1358
  %v1775 = vpack.c.b16 %v1391, %v1359
  %v1776 = vpack.c.b16 %v1392, %v1360
  %v1777 = vpack.c.b16 %v1393, %v1361
  %v1778 = vpack.c.b16 %v1394, %v1362
  %v1779 = vpack.c.b16 %v1395, %v1363
  %v1780 = vpack.c.b16 %v1396, %v1364
  %v1781 = vpack.c.b16 %v1397, %v1365
  %v1782 = vpack.c.b16 %v1398, %v1366
  %v1783 = vpack.c.b16 %v1431, %v1399
  %v1784 = vpack.c.b16 %v1432, %v1400
  %v1785 = vpack.c.b16 %v1433, %v1401
  %v1786 = vpack.c.b16 %v1434, %v1402
  %v1787 = vpack.c.b16 %v1435, %v1403
  %v1788 = vpack.c.b16 %v1436, %v1404
  %v1789 = vpack.c.b16 %v1437, %v1405
  %v1790 = vpack.c.b16 %v1438, %v1406
  %v1791 = vpack.c.b16 %v1439, %v1407
  %v1792 = vpack.c.b16 %v1440, %v1408
  %v1793 = vpack.c.b16 %v1441, %v1409
  %v1794 = vpack.c.b16 %v1442, %v1410
  %v1795 = vpack.c.b16 %v1443, %v1411
  %v1796 = vpack.c.b16 %v1444, %v1412
  %v1797 = vpack.c.b16 %v1445, %v1413
  %v1798 = vpack.c.b16 %v1446, %v1414
  %v1799 = vpack.c.b16 %v1447, %v1415
  %v1800 = vpack.c.b16 %v1448, %v1416
  %v1801 = vpack.c.b16 %v1449, %v1417
  %v1802 = vpack.c.b16 %v1450, %v1418
  %v1803 = vpack.c.b16 %v1451, %v1419
  %v1804 = vpack.c.b16 %v1452, %v1420
  %v1805 = vpack.c.b16 %v1453, %v1421
  %v1806 = vpack.c.b16 %v1454, %v1422
  %v1807 = vpack.c.b16 %v1455, %v1423
  %v1808 = vpack.c.b16 %v1456, %v1424
  %v1809 = vpack.c.b16 %v1457, %v1425
  %v1810 = vpack.c.b16 %v1458, %v1426
  %v1811 = vpack.c.b16 %v1459, %v1427
  %v1812 = vpack.c.b16 %v1460, %v1428
  %v1813 = vpack.c.b16 %v1461, %v1429
  %v1814 = vpack.c.b16 %v1462, %v1430
  %v1815 = vpack.c.b16 %v1495, %v1463
  %v1816 = vpack.c.b16 %v1496, %v1464
  %v1817 = vpack.c.b16 %v1497, %v1465
  %v1818 = vpack.c.b16 %v1498, %v1466
  %v1819 = vpack.c.b16 %v1499, %v1467
  %v1820 = vpack.c.b16 %v1500, %v1468
  %v1821 = vpack.c.b16 %v1501, %v1469
  %v1822 = vpack.c.b16 %v1502, %v1470
  %v1823 = vpack.c.b16 %v1503, %v1471
  %v1824 = vpack.c.b16 %v1504, %v1472
  %v1825 = vpack.c.b16 %v1505, %v1473
  %v1826 = vpack.c.b16 %v1506, %v1474
  %v1827 = vpack.c.b16 %v1507, %v1475
  %v1828 = vpack.c.b16 %v1508, %v1476
  %v1829 = vpack.c.b16 %v1509, %v1477
  %v1830 = vpack.c.b16 %v1510, %v1478
  %v1831 = vpack.c.b16 %v1511, %v1479
  %v1832 = vpack.c.b16 %v1512, %v1480
  %v1833 = vpack.c.b16 %v1513, %v1481
  %v1834 = vpack.c.b16 %v1514, %v1482
  %v1835 = vpack.c.b16 %v1515, %v1483
  %v1836 = vpack.c.b16 %v1516, %v1484
  %v1837 = vpack.c.b16 %v1517, %v1485
  %v1838 = vpack.c.b16 %v1518, %v1486
  %v1839 = vpack.c.b16 %v1519, %v1487
  %v1840 = vpack.c.b16 %v1520, %v1488
  %v1841 = vpack.c.b16 %v1521, %v1489
  %v1842 = vpack.c.b16 %v1522, %v1490
  %v1843 = vpack.c.b16 %v1523, %v1491
  %v1844 = vpack.c.b16 %v1524, %v1492
  %v1845 = vpack.c.b16 %v1525, %v1493
  %v1846 = vpack.c.b16 %v1526, %v1494
  %v1847 = vpack.c.b16 %v1559, %v1527
  %v1848 = vpack.c.b16 %v1560, %v1528
  %v1849 = vpack.c.b16 %v1561, %v1529
  %v1850 = vpack.c.b16 %v1562, %v1530
  %v1851 = vpack.c.b16 %v1563, %v1531
  %v1852 = vpack.c.b16 %v1564, %v1532
  %v1853 = vpack.c.b16 %v1565, %v1533
  %v1854 = vpack.c.b16 %v1566, %v1534
  %v1855 = vpack.c.b16 %v1567, %v1535
  %v1856 = vpack.c.b16 %v1568, %v1536
  %v1857 = vpack.c.b16 %v1569, %v1537
  %v1858 = vpack.c.b16 %v1570, %v1538
  %v1859 = vpack.c.b16 %v1571, %v1539
  %v1860 = vpack.c.b16 %v1572, %v1540
  %v1861 = vpack.c.b16 %v1573, %v1541
  %v1862 = vpack.c.b16 %v1574, %v1542
  %v1863 = vpack.c.b16 %v1575, %v1543
  %v1864 = vpack.c.b16 %v1576, %v1544
  %v1865 = vpack.c.b16 %v1577, %v1545
  %v1866 = vpack.c.b16 %v1578, %v1546
  %v1867 = vpack.c.b16 %v1579, %v1547
  %v1868 = vpack.c.b16 %v1580, %v1548
  %v1869 = vpack.c.b16 %v1581, %v1549
  %v1870 = vpack.c.b16 %v1582, %v1550
  %v1871 = vpack.c.b16 %v1583, %v1551
  %v1872 = vpack.c.b16 %v1584, %v1552
  %v1873 = vpack.c.b16 %v1585, %v1553
  %v1874 = vpack.c.b16 %v1586, %v1554
  %v1875 = vpack.c.b16 %v1587, %v1555
  %v1876 = vpack.c.b16 %v1588, %v1556
  %v1877 = vpack.c.b16 %v1589, %v1557
  %v1878 = vpack.c.b16 %v1590, %v1558
  %v1879 = vpack.c.b16 %v1623, %v1591
  %v1880 = vpack.c.b16 %v1624, %v1592
  %v1881 = vpack.c.b16 %v1625, %v1593
  %v1882 = vpack.c.b16 %v1626, %v1594
  %v1883 = vpack.c.b16 %v1627, %v1595
  %v1884 = vpack.c.b16 %v1628, %v1596
  %v1885 = vpack.c.b16 %v1629, %v1597
  %v1886 = vpack.c.b16 %v1630, %v1598
  %v1887 = vpack.c.b16 %v1631, %v1599
  %v1888 = vpack.c.b16 %v1632, %v1600
  %v1889 = vpack.c.b16 %v1633, %v1601
  %v1890 = vpack.c.b16 %v1634, %v1602
  %v1891 = vpack.c.b16 %v1635, %v1603
  %v1892 = vpack.c.b16 %v1636, %v1604
  %v1893 = vpack.c.b16 %v1637, %v1605
  %v1894 = vpack.c.b16 %v1638, %v1606
  %v1895 = vpack.c.b16 %v1639, %v1607
  %v1896 = vpack.c.b16 %v1640, %v1608
  %v1897 = vpack.c.b16 %v1641, %v1609
  %v1898 = vpack.c.b16 %v1642, %v1610
  %v1899 = vpack.c.b16 %v1643, %v1611
  %v1900 = vpack.c.b16 %v1644, %v1612
  %v1901 = vpack.c.b16 %v1645, %v1613
  %v1902 = vpack.c.b16 %v1646, %v1614
  %v1903 = vpack.c.b16 %v1647, %v1615
  %v1904 = vpack.c.b16 %v1648, %v1616
  %v1905 = vpack.c.b16 %v1649, %v1617
  %v1906 = vpack.c.b16 %v1650, %v1618
  %v1907 = vpack.c.b16 %v1651, %v1619
  %v1908 = vpack.c.b16 %v1652, %v1620
  %v1909 = vpack.c.b16 %v1653, %v1621
  %v1910 = vpack.c.b16 %v1654, %v1622
  %2167 = vmatpush.bf16.msra.mxu0 %v1879
  %2168 = vmatpush.bf16.msra.mxu0 %v1847
  %2169 = vmatpush.bf16.msra.mxu0 %v1815
  %2170 = vmatpush.bf16.msra.mxu0 %v1783
  %2171 = vmatpush.bf16.msra.mxu0 %v1751
  %2172 = vmatpush.bf16.msra.mxu0 %v1719
  %2173 = vmatpush.bf16.msra.mxu0 %v1687
  %2174 = vmatpush.bf16.msra.mxu0 %v1655
  %2175 = vmatmul.bf16.gmra.mxu0 %v557
  %v2176 = vpop.f32.mrf.mxu0
  %v2177 = vadd.f32 %v823, %v2176
  %v2178 = vpop.f32.mrf.mxu0
  %2179 = vdwg.mxu0
  %2180 = vmatpush.bf16.msra.mxu0 %v1880
  %2181 = vmatpush.bf16.msra.mxu0 %v1848
  %2182 = vmatpush.bf16.msra.mxu0 %v1816
  %2183 = vmatpush.bf16.msra.mxu0 %v1784
  %2184 = vmatpush.bf16.msra.mxu0 %v1752
  %2185 = vmatpush.bf16.msra.mxu0 %v1720
  %2186 = vmatpush.bf16.msra.mxu0 %v1688
  %2187 = vmatpush.bf16.msra.mxu0 %v1656
  %2188 = vmatmul.bf16.gmra.mxu0 %v557
  %v2189 = vpop.f32.mrf.mxu0
  %v2190 = vadd.f32 %v824, %v2189
  %v2191 = vpop.f32.mrf.mxu0
  %2192 = vdwg.mxu0
  %2193 = vmatpush.bf16.msra.mxu0 %v1881
  %2194 = vmatpush.bf16.msra.mxu0 %v1849
  %2195 = vmatpush.bf16.msra.mxu0 %v1817
  %2196 = vmatpush.bf16.msra.mxu0 %v1785
  %2197 = vmatpush.bf16.msra.mxu0 %v1753
  %2198 = vmatpush.bf16.msra.mxu0 %v1721
  %2199 = vmatpush.bf16.msra.mxu0 %v1689
  %2200 = vmatpush.bf16.msra.mxu0 %v1657
  %2201 = vmatmul.bf16.gmra.mxu0 %v557
  %v2202 = vpop.f32.mrf.mxu0
  %v2203 = vadd.f32 %v825, %v2202
  %v2204 = vpop.f32.mrf.mxu0
  %2205 = vdwg.mxu0
  %2206 = vmatpush.bf16.msra.mxu0 %v1882
  %2207 = vmatpush.bf16.msra.mxu0 %v1850
  %2208 = vmatpush.bf16.msra.mxu0 %v1818
  %2209 = vmatpush.bf16.msra.mxu0 %v1786
  %2210 = vmatpush.bf16.msra.mxu0 %v1754
  %2211 = vmatpush.bf16.msra.mxu0 %v1722
  %2212 = vmatpush.bf16.msra.mxu0 %v1690
  %2213 = vmatpush.bf16.msra.mxu0 %v1658
  %2214 = vmatmul.bf16.gmra.mxu0 %v557
  %v2215 = vpop.f32.mrf.mxu0
  %v2216 = vadd.f32 %v826, %v2215
  %v2217 = vpop.f32.mrf.mxu0
  %2218 = vdwg.mxu0
  %2219 = vmatpush.bf16.msra.mxu0 %v1883
  %2220 = vmatpush.bf16.msra.mxu0 %v1851
  %2221 = vmatpush.bf16.msra.mxu0 %v1819
  %2222 = vmatpush.bf16.msra.mxu0 %v1787
  %2223 = vmatpush.bf16.msra.mxu0 %v1755
  %2224 = vmatpush.bf16.msra.mxu0 %v1723
  %2225 = vmatpush.bf16.msra.mxu0 %v1691
  %2226 = vmatpush.bf16.msra.mxu0 %v1659
  %2227 = vmatmul.bf16.gmra.mxu0 %v557
  %v2228 = vpop.f32.mrf.mxu0
  %v2229 = vadd.f32 %v827, %v2228
  %v2230 = vpop.f32.mrf.mxu0
  %2231 = vdwg.mxu0
  %2232 = vmatpush.bf16.msra.mxu0 %v1884
  %2233 = vmatpush.bf16.msra.mxu0 %v1852
  %2234 = vmatpush.bf16.msra.mxu0 %v1820
  %2235 = vmatpush.bf16.msra.mxu0 %v1788
  %2236 = vmatpush.bf16.msra.mxu0 %v1756
  %2237 = vmatpush.bf16.msra.mxu0 %v1724
  %2238 = vmatpush.bf16.msra.mxu0 %v1692
  %2239 = vmatpush.bf16.msra.mxu0 %v1660
  %2240 = vmatmul.bf16.gmra.mxu0 %v557
  %v2241 = vpop.f32.mrf.mxu0
  %v2242 = vadd.f32 %v828, %v2241
  %v2243 = vpop.f32.mrf.mxu0
  %2244 = vdwg.mxu0
  %2245 = vmatpush.bf16.msra.mxu0 %v1885
  %2246 = vmatpush.bf16.msra.mxu0 %v1853
  %2247 = vmatpush.bf16.msra.mxu0 %v1821
  %2248 = vmatpush.bf16.msra.mxu0 %v1789
  %2249 = vmatpush.bf16.msra.mxu0 %v1757
  %2250 = vmatpush.bf16.msra.mxu0 %v1725
  %2251 = vmatpush.bf16.msra.mxu0 %v1693
  %2252 = vmatpush.bf16.msra.mxu0 %v1661
  %2253 = vmatmul.bf16.gmra.mxu0 %v557
  %v2254 = vpop.f32.mrf.mxu0
  %v2255 = vadd.f32 %v829, %v2254
  %v2256 = vpop.f32.mrf.mxu0
  %2257 = vdwg.mxu0
  %2258 = vmatpush.bf16.msra.mxu0 %v1886
  %2259 = vmatpush.bf16.msra.mxu0 %v1854
  %2260 = vmatpush.bf16.msra.mxu0 %v1822
  %2261 = vmatpush.bf16.msra.mxu0 %v1790
  %2262 = vmatpush.bf16.msra.mxu0 %v1758
  %2263 = vmatpush.bf16.msra.mxu0 %v1726
  %2264 = vmatpush.bf16.msra.mxu0 %v1694
  %2265 = vmatpush.bf16.msra.mxu0 %v1662
  %2266 = vmatmul.bf16.gmra.mxu0 %v557
  %v2267 = vpop.f32.mrf.mxu0
  %v2268 = vadd.f32 %v830, %v2267
  %v2269 = vpop.f32.mrf.mxu0
  %2270 = vdwg.mxu0
  %2271 = vmatpush.bf16.msra.mxu0 %v1887
  %2272 = vmatpush.bf16.msra.mxu0 %v1855
  %2273 = vmatpush.bf16.msra.mxu0 %v1823
  %2274 = vmatpush.bf16.msra.mxu0 %v1791
  %2275 = vmatpush.bf16.msra.mxu0 %v1759
  %2276 = vmatpush.bf16.msra.mxu0 %v1727
  %2277 = vmatpush.bf16.msra.mxu0 %v1695
  %2278 = vmatpush.bf16.msra.mxu0 %v1663
  %2279 = vmatmul.bf16.gmra.mxu0 %v557
  %v2280 = vpop.f32.mrf.mxu0
  %v2281 = vadd.f32 %v831, %v2280
  %v2282 = vpop.f32.mrf.mxu0
  %2283 = vdwg.mxu0
  %2284 = vmatpush.bf16.msra.mxu0 %v1888
  %2285 = vmatpush.bf16.msra.mxu0 %v1856
  %2286 = vmatpush.bf16.msra.mxu0 %v1824
  %2287 = vmatpush.bf16.msra.mxu0 %v1792
  %2288 = vmatpush.bf16.msra.mxu0 %v1760
  %2289 = vmatpush.bf16.msra.mxu0 %v1728
  %2290 = vmatpush.bf16.msra.mxu0 %v1696
  %2291 = vmatpush.bf16.msra.mxu0 %v1664
  %2292 = vmatmul.bf16.gmra.mxu0 %v557
  %v2293 = vpop.f32.mrf.mxu0
  %v2294 = vadd.f32 %v832, %v2293
  %v2295 = vpop.f32.mrf.mxu0
  %2296 = vdwg.mxu0
  %2297 = vmatpush.bf16.msra.mxu0 %v1889
  %2298 = vmatpush.bf16.msra.mxu0 %v1857
  %2299 = vmatpush.bf16.msra.mxu0 %v1825
  %2300 = vmatpush.bf16.msra.mxu0 %v1793
  %2301 = vmatpush.bf16.msra.mxu0 %v1761
  %2302 = vmatpush.bf16.msra.mxu0 %v1729
  %2303 = vmatpush.bf16.msra.mxu0 %v1697
  %2304 = vmatpush.bf16.msra.mxu0 %v1665
  %2305 = vmatmul.bf16.gmra.mxu0 %v557
  %v2306 = vpop.f32.mrf.mxu0
  %v2307 = vadd.f32 %v833, %v2306
  %v2308 = vpop.f32.mrf.mxu0
  %2309 = vdwg.mxu0
  %2310 = vmatpush.bf16.msra.mxu0 %v1890
  %2311 = vmatpush.bf16.msra.mxu0 %v1858
  %2312 = vmatpush.bf16.msra.mxu0 %v1826
  %2313 = vmatpush.bf16.msra.mxu0 %v1794
  %2314 = vmatpush.bf16.msra.mxu0 %v1762
  %2315 = vmatpush.bf16.msra.mxu0 %v1730
  %2316 = vmatpush.bf16.msra.mxu0 %v1698
  %2317 = vmatpush.bf16.msra.mxu0 %v1666
  %2318 = vmatmul.bf16.gmra.mxu0 %v557
  %v2319 = vpop.f32.mrf.mxu0
  %v2320 = vadd.f32 %v834, %v2319
  %v2321 = vpop.f32.mrf.mxu0
  %2322 = vdwg.mxu0
  %2323 = vmatpush.bf16.msra.mxu0 %v1891
  %2324 = vmatpush.bf16.msra.mxu0 %v1859
  %2325 = vmatpush.bf16.msra.mxu0 %v1827
  %2326 = vmatpush.bf16.msra.mxu0 %v1795
  %2327 = vmatpush.bf16.msra.mxu0 %v1763
  %2328 = vmatpush.bf16.msra.mxu0 %v1731
  %2329 = vmatpush.bf16.msra.mxu0 %v1699
  %2330 = vmatpush.bf16.msra.mxu0 %v1667
  %2331 = vmatmul.bf16.gmra.mxu0 %v557
  %v2332 = vpop.f32.mrf.mxu0
  %v2333 = vadd.f32 %v835, %v2332
  %v2334 = vpop.f32.mrf.mxu0
  %2335 = vdwg.mxu0
  %2336 = vmatpush.bf16.msra.mxu0 %v1892
  %2337 = vmatpush.bf16.msra.mxu0 %v1860
  %2338 = vmatpush.bf16.msra.mxu0 %v1828
  %2339 = vmatpush.bf16.msra.mxu0 %v1796
  %2340 = vmatpush.bf16.msra.mxu0 %v1764
  %2341 = vmatpush.bf16.msra.mxu0 %v1732
  %2342 = vmatpush.bf16.msra.mxu0 %v1700
  %2343 = vmatpush.bf16.msra.mxu0 %v1668
  %2344 = vmatmul.bf16.gmra.mxu0 %v557
  %v2345 = vpop.f32.mrf.mxu0
  %v2346 = vadd.f32 %v836, %v2345
  %v2347 = vpop.f32.mrf.mxu0
  %2348 = vdwg.mxu0
  %2349 = vmatpush.bf16.msra.mxu0 %v1893
  %2350 = vmatpush.bf16.msra.mxu0 %v1861
  %2351 = vmatpush.bf16.msra.mxu0 %v1829
  %2352 = vmatpush.bf16.msra.mxu0 %v1797
  %2353 = vmatpush.bf16.msra.mxu0 %v1765
  %2354 = vmatpush.bf16.msra.mxu0 %v1733
  %2355 = vmatpush.bf16.msra.mxu0 %v1701
  %2356 = vmatpush.bf16.msra.mxu0 %v1669
  %2357 = vmatmul.bf16.gmra.mxu0 %v557
  %v2358 = vpop.f32.mrf.mxu0
  %v2359 = vadd.f32 %v837, %v2358
  %v2360 = vpop.f32.mrf.mxu0
  %2361 = vdwg.mxu0
  %2362 = vmatpush.bf16.msra.mxu0 %v1894
  %2363 = vmatpush.bf16.msra.mxu0 %v1862
  %2364 = vmatpush.bf16.msra.mxu0 %v1830
  %2365 = vmatpush.bf16.msra.mxu0 %v1798
  %2366 = vmatpush.bf16.msra.mxu0 %v1766
  %2367 = vmatpush.bf16.msra.mxu0 %v1734
  %2368 = vmatpush.bf16.msra.mxu0 %v1702
  %2369 = vmatpush.bf16.msra.mxu0 %v1670
  %2370 = vmatmul.bf16.gmra.mxu0 %v557
  %v2371 = vpop.f32.mrf.mxu0
  %v2372 = vadd.f32 %v838, %v2371
  %v2373 = vpop.f32.mrf.mxu0
  %2374 = vdwg.mxu0
  %2375 = vmatpush.bf16.msra.mxu0 %v1895
  %2376 = vmatpush.bf16.msra.mxu0 %v1863
  %2377 = vmatpush.bf16.msra.mxu0 %v1831
  %2378 = vmatpush.bf16.msra.mxu0 %v1799
  %2379 = vmatpush.bf16.msra.mxu0 %v1767
  %2380 = vmatpush.bf16.msra.mxu0 %v1735
  %2381 = vmatpush.bf16.msra.mxu0 %v1703
  %2382 = vmatpush.bf16.msra.mxu0 %v1671
  %2383 = vmatmul.bf16.gmra.mxu0 %v557
  %v2384 = vpop.f32.mrf.mxu0
  %v2385 = vadd.f32 %v839, %v2384
  %v2386 = vpop.f32.mrf.mxu0
  %2387 = vdwg.mxu0
  %2388 = vmatpush.bf16.msra.mxu0 %v1896
  %2389 = vmatpush.bf16.msra.mxu0 %v1864
  %2390 = vmatpush.bf16.msra.mxu0 %v1832
  %2391 = vmatpush.bf16.msra.mxu0 %v1800
  %2392 = vmatpush.bf16.msra.mxu0 %v1768
  %2393 = vmatpush.bf16.msra.mxu0 %v1736
  %2394 = vmatpush.bf16.msra.mxu0 %v1704
  %2395 = vmatpush.bf16.msra.mxu0 %v1672
  %2396 = vmatmul.bf16.gmra.mxu0 %v557
  %v2397 = vpop.f32.mrf.mxu0
  %v2398 = vadd.f32 %v840, %v2397
  %v2399 = vpop.f32.mrf.mxu0
  %2400 = vdwg.mxu0
  %2401 = vmatpush.bf16.msra.mxu0 %v1897
  %2402 = vmatpush.bf16.msra.mxu0 %v1865
  %2403 = vmatpush.bf16.msra.mxu0 %v1833
  %2404 = vmatpush.bf16.msra.mxu0 %v1801
  %2405 = vmatpush.bf16.msra.mxu0 %v1769
  %2406 = vmatpush.bf16.msra.mxu0 %v1737
  %2407 = vmatpush.bf16.msra.mxu0 %v1705
  %2408 = vmatpush.bf16.msra.mxu0 %v1673
  %2409 = vmatmul.bf16.gmra.mxu0 %v557
  %v2410 = vpop.f32.mrf.mxu0
  %v2411 = vadd.f32 %v841, %v2410
  %v2412 = vpop.f32.mrf.mxu0
  %2413 = vdwg.mxu0
  %2414 = vmatpush.bf16.msra.mxu0 %v1898
  %2415 = vmatpush.bf16.msra.mxu0 %v1866
  %2416 = vmatpush.bf16.msra.mxu0 %v1834
  %2417 = vmatpush.bf16.msra.mxu0 %v1802
  %2418 = vmatpush.bf16.msra.mxu0 %v1770
  %2419 = vmatpush.bf16.msra.mxu0 %v1738
  %2420 = vmatpush.bf16.msra.mxu0 %v1706
  %2421 = vmatpush.bf16.msra.mxu0 %v1674
  %2422 = vmatmul.bf16.gmra.mxu0 %v557
  %v2423 = vpop.f32.mrf.mxu0
  %v2424 = vadd.f32 %v842, %v2423
  %v2425 = vpop.f32.mrf.mxu0
  %2426 = vdwg.mxu0
  %2427 = vmatpush.bf16.msra.mxu0 %v1899
  %2428 = vmatpush.bf16.msra.mxu0 %v1867
  %2429 = vmatpush.bf16.msra.mxu0 %v1835
  %2430 = vmatpush.bf16.msra.mxu0 %v1803
  %2431 = vmatpush.bf16.msra.mxu0 %v1771
  %2432 = vmatpush.bf16.msra.mxu0 %v1739
  %2433 = vmatpush.bf16.msra.mxu0 %v1707
  %2434 = vmatpush.bf16.msra.mxu0 %v1675
  %2435 = vmatmul.bf16.gmra.mxu0 %v557
  %v2436 = vpop.f32.mrf.mxu0
  %v2437 = vadd.f32 %v843, %v2436
  %v2438 = vpop.f32.mrf.mxu0
  %2439 = vdwg.mxu0
  %2440 = vmatpush.bf16.msra.mxu0 %v1900
  %2441 = vmatpush.bf16.msra.mxu0 %v1868
  %2442 = vmatpush.bf16.msra.mxu0 %v1836
  %2443 = vmatpush.bf16.msra.mxu0 %v1804
  %2444 = vmatpush.bf16.msra.mxu0 %v1772
  %2445 = vmatpush.bf16.msra.mxu0 %v1740
  %2446 = vmatpush.bf16.msra.mxu0 %v1708
  %2447 = vmatpush.bf16.msra.mxu0 %v1676
  %2448 = vmatmul.bf16.gmra.mxu0 %v557
  %v2449 = vpop.f32.mrf.mxu0
  %v2450 = vadd.f32 %v844, %v2449
  %v2451 = vpop.f32.mrf.mxu0
  %2452 = vdwg.mxu0
  %2453 = vmatpush.bf16.msra.mxu0 %v1901
  %2454 = vmatpush.bf16.msra.mxu0 %v1869
  %2455 = vmatpush.bf16.msra.mxu0 %v1837
  %2456 = vmatpush.bf16.msra.mxu0 %v1805
  %2457 = vmatpush.bf16.msra.mxu0 %v1773
  %2458 = vmatpush.bf16.msra.mxu0 %v1741
  %2459 = vmatpush.bf16.msra.mxu0 %v1709
  %2460 = vmatpush.bf16.msra.mxu0 %v1677
  %2461 = vmatmul.bf16.gmra.mxu0 %v557
  %v2462 = vpop.f32.mrf.mxu0
  %v2463 = vadd.f32 %v845, %v2462
  %v2464 = vpop.f32.mrf.mxu0
  %2465 = vdwg.mxu0
  %2466 = vmatpush.bf16.msra.mxu0 %v1902
  %2467 = vmatpush.bf16.msra.mxu0 %v1870
  %2468 = vmatpush.bf16.msra.mxu0 %v1838
  %2469 = vmatpush.bf16.msra.mxu0 %v1806
  %2470 = vmatpush.bf16.msra.mxu0 %v1774
  %2471 = vmatpush.bf16.msra.mxu0 %v1742
  %2472 = vmatpush.bf16.msra.mxu0 %v1710
  %2473 = vmatpush.bf16.msra.mxu0 %v1678
  %2474 = vmatmul.bf16.gmra.mxu0 %v557
  %v2475 = vpop.f32.mrf.mxu0
  %v2476 = vadd.f32 %v846, %v2475
  %v2477 = vpop.f32.mrf.mxu0
  %2478 = vdwg.mxu0
  %2479 = vmatpush.bf16.msra.mxu0 %v1903
  %2480 = vmatpush.bf16.msra.mxu0 %v1871
  %2481 = vmatpush.bf16.msra.mxu0 %v1839
  %2482 = vmatpush.bf16.msra.mxu0 %v1807
  %2483 = vmatpush.bf16.msra.mxu0 %v1775
  %2484 = vmatpush.bf16.msra.mxu0 %v1743
  %2485 = vmatpush.bf16.msra.mxu0 %v1711
  %2486 = vmatpush.bf16.msra.mxu0 %v1679
  %2487 = vmatmul.bf16.gmra.mxu0 %v557
  %v2488 = vpop.f32.mrf.mxu0
  %v2489 = vadd.f32 %v847, %v2488
  %v2490 = vpop.f32.mrf.mxu0
  %2491 = vdwg.mxu0
  %2492 = vmatpush.bf16.msra.mxu0 %v1904
  %2493 = vmatpush.bf16.msra.mxu0 %v1872
  %2494 = vmatpush.bf16.msra.mxu0 %v1840
  %2495 = vmatpush.bf16.msra.mxu0 %v1808
  %2496 = vmatpush.bf16.msra.mxu0 %v1776
  %2497 = vmatpush.bf16.msra.mxu0 %v1744
  %2498 = vmatpush.bf16.msra.mxu0 %v1712
  %2499 = vmatpush.bf16.msra.mxu0 %v1680
  %2500 = vmatmul.bf16.gmra.mxu0 %v557
  %v2501 = vpop.f32.mrf.mxu0
  %v2502 = vadd.f32 %v848, %v2501
  %v2503 = vpop.f32.mrf.mxu0
  %2504 = vdwg.mxu0
  %2505 = vmatpush.bf16.msra.mxu0 %v1905
  %2506 = vmatpush.bf16.msra.mxu0 %v1873
  %2507 = vmatpush.bf16.msra.mxu0 %v1841
  %2508 = vmatpush.bf16.msra.mxu0 %v1809
  %2509 = vmatpush.bf16.msra.mxu0 %v1777
  %2510 = vmatpush.bf16.msra.mxu0 %v1745
  %2511 = vmatpush.bf16.msra.mxu0 %v1713
  %2512 = vmatpush.bf16.msra.mxu0 %v1681
  %2513 = vmatmul.bf16.gmra.mxu0 %v557
  %v2514 = vpop.f32.mrf.mxu0
  %v2515 = vadd.f32 %v849, %v2514
  %v2516 = vpop.f32.mrf.mxu0
  %2517 = vdwg.mxu0
  %2518 = vmatpush.bf16.msra.mxu0 %v1906
  %2519 = vmatpush.bf16.msra.mxu0 %v1874
  %2520 = vmatpush.bf16.msra.mxu0 %v1842
  %2521 = vmatpush.bf16.msra.mxu0 %v1810
  %2522 = vmatpush.bf16.msra.mxu0 %v1778
  %2523 = vmatpush.bf16.msra.mxu0 %v1746
  %2524 = vmatpush.bf16.msra.mxu0 %v1714
  %2525 = vmatpush.bf16.msra.mxu0 %v1682
  %2526 = vmatmul.bf16.gmra.mxu0 %v557
  %v2527 = vpop.f32.mrf.mxu0
  %v2528 = vadd.f32 %v850, %v2527
  %v2529 = vpop.f32.mrf.mxu0
  %2530 = vdwg.mxu0
  %2531 = vmatpush.bf16.msra.mxu0 %v1907
  %2532 = vmatpush.bf16.msra.mxu0 %v1875
  %2533 = vmatpush.bf16.msra.mxu0 %v1843
  %2534 = vmatpush.bf16.msra.mxu0 %v1811
  %2535 = vmatpush.bf16.msra.mxu0 %v1779
  %2536 = vmatpush.bf16.msra.mxu0 %v1747
  %2537 = vmatpush.bf16.msra.mxu0 %v1715
  %2538 = vmatpush.bf16.msra.mxu0 %v1683
  %2539 = vmatmul.bf16.gmra.mxu0 %v557
  %v2540 = vpop.f32.mrf.mxu0
  %v2541 = vadd.f32 %v851, %v2540
  %v2542 = vpop.f32.mrf.mxu0
  %2543 = vdwg.mxu0
  %2544 = vmatpush.bf16.msra.mxu0 %v1908
  %2545 = vmatpush.bf16.msra.mxu0 %v1876
  %2546 = vmatpush.bf16.msra.mxu0 %v1844
  %2547 = vmatpush.bf16.msra.mxu0 %v1812
  %2548 = vmatpush.bf16.msra.mxu0 %v1780
  %2549 = vmatpush.bf16.msra.mxu0 %v1748
  %2550 = vmatpush.bf16.msra.mxu0 %v1716
  %2551 = vmatpush.bf16.msra.mxu0 %v1684
  %2552 = vmatmul.bf16.gmra.mxu0 %v557
  %v2553 = vpop.f32.mrf.mxu0
  %v2554 = vadd.f32 %v852, %v2553
  %v2555 = vpop.f32.mrf.mxu0
  %2556 = vdwg.mxu0
  %2557 = vmatpush.bf16.msra.mxu0 %v1909
  %2558 = vmatpush.bf16.msra.mxu0 %v1877
  %2559 = vmatpush.bf16.msra.mxu0 %v1845
  %2560 = vmatpush.bf16.msra.mxu0 %v1813
  %2561 = vmatpush.bf16.msra.mxu0 %v1781
  %2562 = vmatpush.bf16.msra.mxu0 %v1749
  %2563 = vmatpush.bf16.msra.mxu0 %v1717
  %2564 = vmatpush.bf16.msra.mxu0 %v1685
  %2565 = vmatmul.bf16.gmra.mxu0 %v557
  %v2566 = vpop.f32.mrf.mxu0
  %v2567 = vadd.f32 %v853, %v2566
  %v2568 = vpop.f32.mrf.mxu0
  %2569 = vdwg.mxu0
  %2570 = vmatpush.bf16.msra.mxu0 %v1910
  %2571 = vmatpush.bf16.msra.mxu0 %v1878
  %2572 = vmatpush.bf16.msra.mxu0 %v1846
  %2573 = vmatpush.bf16.msra.mxu0 %v1814
  %2574 = vmatpush.bf16.msra.mxu0 %v1782
  %2575 = vmatpush.bf16.msra.mxu0 %v1750
  %2576 = vmatpush.bf16.msra.mxu0 %v1718
  %2577 = vmatpush.bf16.msra.mxu0 %v1686
  %2578 = vmatmul.bf16.gmra.mxu0 %v557
  %v2579 = vpop.f32.mrf.mxu0
  %v2580 = vadd.f32 %v854, %v2579
  %v2581 = vpop.f32.mrf.mxu0
  %2582 = vdwg.mxu0
  %v2583 = vmax.f32 %v2177, 0.0
  %v2584 = vmax.f32 %v2190, 0.0
  %v2585 = vmax.f32 %v2203, 0.0
  %v2586 = vmax.f32 %v2216, 0.0
  %v2587 = vmax.f32 %v2229, 0.0
  %v2588 = vmax.f32 %v2242, 0.0
  %v2589 = vmax.f32 %v2255, 0.0
  %v2590 = vmax.f32 %v2268, 0.0
  %v2591 = vmax.f32 %v2281, 0.0
  %v2592 = vmax.f32 %v2294, 0.0
  %v2593 = vmax.f32 %v2307, 0.0
  %v2594 = vmax.f32 %v2320, 0.0
  %v2595 = vmax.f32 %v2333, 0.0
  %v2596 = vmax.f32 %v2346, 0.0
  %v2597 = vmax.f32 %v2359, 0.0
  %v2598 = vmax.f32 %v2372, 0.0
  %v2599 = vmax.f32 %v2385, 0.0
  %v2600 = vmax.f32 %v2398, 0.0
  %v2601 = vmax.f32 %v2411, 0.0
  %v2602 = vmax.f32 %v2424, 0.0
  %v2603 = vmax.f32 %v2437, 0.0
  %v2604 = vmax.f32 %v2450, 0.0
  %v2605 = vmax.f32 %v2463, 0.0
  %v2606 = vmax.f32 %v2476, 0.0
  %v2607 = vmax.f32 %v2489, 0.0
  %v2608 = vmax.f32 %v2502, 0.0
  %v2609 = vmax.f32 %v2515, 0.0
  %v2610 = vmax.f32 %v2528, 0.0
  %v2611 = vmax.f32 %v2541, 0.0
  %v2612 = vmax.f32 %v2554, 0.0
  %v2613 = vmax.f32 %v2567, 0.0
  %v2614 = vmax.f32 %v2580, 0.0
  %v2615 = vld [vmem:[%s5] sm:$0xff]
  %v2616 = vld [vmem:[%s5 + $0x8] sm:$0xff]
  %v2617 = vld [vmem:[%s5 + $0x10] sm:$0xff]
  %v2618 = vld [vmem:[%s5 + $0x18] sm:$0xff]
  %v2623 = vperm.slane %v2615, 0
  %v2624 = vperm.slane %v2615, 1
  %v2625 = vperm.slane %v2615, 2
  %v2626 = vperm.slane %v2615, 3
  %v2627 = vperm.slane %v2615, 4
  %v2628 = vperm.slane %v2615, 5
  %v2629 = vperm.slane %v2615, 6
  %v2630 = vperm.slane %v2615, 7
  %v2631 = vperm.slane %v2616, 0
  %v2632 = vperm.slane %v2616, 1
  %v2633 = vperm.slane %v2616, 2
  %v2634 = vperm.slane %v2616, 3
  %v2635 = vperm.slane %v2616, 4
  %v2636 = vperm.slane %v2616, 5
  %v2637 = vperm.slane %v2616, 6
  %v2638 = vperm.slane %v2616, 7
  %v2639 = vperm.slane %v2617, 0
  %v2640 = vperm.slane %v2617, 1
  %v2641 = vperm.slane %v2617, 2
  %v2642 = vperm.slane %v2617, 3
  %v2643 = vperm.slane %v2617, 4
  %v2644 = vperm.slane %v2617, 5
  %v2645 = vperm.slane %v2617, 6
  %v2646 = vperm.slane %v2617, 7
  %v2647 = vperm.slane %v2618, 0
  %v2648 = vperm.slane %v2618, 1
  %v2649 = vperm.slane %v2618, 2
  %v2650 = vperm.slane %v2618, 3
  %v2651 = vperm.slane %v2618, 4
  %v2652 = vperm.slane %v2618, 5
  %v2653 = vperm.slane %v2618, 6
  %v2654 = vperm.slane %v2618, 7
  %v2687 = vmul.f32 %v2583, %v2623
  %v2688 = vmul.f32 %v2584, %v2624
  %v2689 = vmul.f32 %v2585, %v2625
  %v2690 = vmul.f32 %v2586, %v2626
  %v2691 = vmul.f32 %v2587, %v2627
  %v2692 = vmul.f32 %v2588, %v2628
  %v2693 = vmul.f32 %v2589, %v2629
  %v2694 = vmul.f32 %v2590, %v2630
  %v2695 = vmul.f32 %v2591, %v2631
  %v2696 = vmul.f32 %v2592, %v2632
  %v2697 = vmul.f32 %v2593, %v2633
  %v2698 = vmul.f32 %v2594, %v2634
  %v2699 = vmul.f32 %v2595, %v2635
  %v2700 = vmul.f32 %v2596, %v2636
  %v2701 = vmul.f32 %v2597, %v2637
  %v2702 = vmul.f32 %v2598, %v2638
  %v2703 = vmul.f32 %v2599, %v2639
  %v2704 = vmul.f32 %v2600, %v2640
  %v2705 = vmul.f32 %v2601, %v2641
  %v2706 = vmul.f32 %v2602, %v2642
  %v2707 = vmul.f32 %v2603, %v2643
  %v2708 = vmul.f32 %v2604, %v2644
  %v2709 = vmul.f32 %v2605, %v2645
  %v2710 = vmul.f32 %v2606, %v2646
  %v2711 = vmul.f32 %v2607, %v2647
  %v2712 = vmul.f32 %v2608, %v2648
  %v2713 = vmul.f32 %v2609, %v2649
  %v2714 = vmul.f32 %v2610, %v2650
  %v2715 = vmul.f32 %v2611, %v2651
  %v2716 = vmul.f32 %v2612, %v2652
  %v2717 = vmul.f32 %v2613, %v2653
  %v2718 = vmul.f32 %v2614, %v2654
  %vm2719 = vcmask 1043456
  %v2720 = vsel %vm2719, %v2687, 0.0
  %v2721 = vsel %vm2719, %v2688, 0.0
  %v2722 = vadd.f32 %v2720, %v2721
  %v2723 = vsel %vm2719, %v2689, 0.0
  %v2724 = vadd.f32 %v2722, %v2723
  %v2725 = vsel %vm2719, %v2690, 0.0
  %v2726 = vadd.f32 %v2724, %v2725
  %v2727 = vsel %vm2719, %v2691, 0.0
  %v2728 = vadd.f32 %v2726, %v2727
  %v2729 = vsel %vm2719, %v2692, 0.0
  %v2730 = vadd.f32 %v2728, %v2729
  %v2731 = vsel %vm2719, %v2693, 0.0
  %v2732 = vadd.f32 %v2730, %v2731
  %v2733 = vsel %vm2719, %v2694, 0.0
  %v2734 = vadd.f32 %v2732, %v2733
  %v2735 = vsel %vm2719, %v2695, 0.0
  %v2736 = vadd.f32 %v2734, %v2735
  %v2737 = vsel %vm2719, %v2696, 0.0
  %v2738 = vadd.f32 %v2736, %v2737
  %v2739 = vsel %vm2719, %v2697, 0.0
  %v2740 = vadd.f32 %v2738, %v2739
  %v2741 = vsel %vm2719, %v2698, 0.0
  %v2742 = vadd.f32 %v2740, %v2741
  %v2743 = vsel %vm2719, %v2699, 0.0
  %v2744 = vadd.f32 %v2742, %v2743
  %v2745 = vsel %vm2719, %v2700, 0.0
  %v2746 = vadd.f32 %v2744, %v2745
  %v2747 = vsel %vm2719, %v2701, 0.0
  %v2748 = vadd.f32 %v2746, %v2747
  %v2749 = vsel %vm2719, %v2702, 0.0
  %v2750 = vadd.f32 %v2748, %v2749
  %v2751 = vsel %vm2719, %v2703, 0.0
  %v2752 = vadd.f32 %v2750, %v2751
  %v2753 = vsel %vm2719, %v2704, 0.0
  %v2754 = vadd.f32 %v2752, %v2753
  %v2755 = vsel %vm2719, %v2705, 0.0
  %v2756 = vadd.f32 %v2754, %v2755
  %v2757 = vsel %vm2719, %v2706, 0.0
  %v2758 = vadd.f32 %v2756, %v2757
  %v2759 = vsel %vm2719, %v2707, 0.0
  %v2760 = vadd.f32 %v2758, %v2759
  %v2761 = vsel %vm2719, %v2708, 0.0
  %v2762 = vadd.f32 %v2760, %v2761
  %v2763 = vsel %vm2719, %v2709, 0.0
  %v2764 = vadd.f32 %v2762, %v2763
  %v2765 = vsel %vm2719, %v2710, 0.0
  %v2766 = vadd.f32 %v2764, %v2765
  %v2767 = vsel %vm2719, %v2711, 0.0
  %v2768 = vadd.f32 %v2766, %v2767
  %v2769 = vsel %vm2719, %v2712, 0.0
  %v2770 = vadd.f32 %v2768, %v2769
  %v2771 = vsel %vm2719, %v2713, 0.0
  %v2772 = vadd.f32 %v2770, %v2771
  %v2773 = vsel %vm2719, %v2714, 0.0
  %v2774 = vadd.f32 %v2772, %v2773
  %v2775 = vsel %vm2719, %v2715, 0.0
  %v2776 = vadd.f32 %v2774, %v2775
  %v2777 = vsel %vm2719, %v2716, 0.0
  %v2778 = vadd.f32 %v2776, %v2777
  %v2779 = vsel %vm2719, %v2717, 0.0
  %v2780 = vadd.f32 %v2778, %v2779
  %v2781 = vsel %vm2719, %v2718, 0.0
  %v2782 = vadd.f32 %v2780, %v2781
  %2783 = vadd.xlane.f32.xlu0 %v2782
  %v2784 = vpop.xlane.xlu0 %2783
  %v2785 = vld [vmem:[#allocation2] sm:$0x1]
  %v2787 = vperm.slane %v2785, 0
  %v2789 = vadd.f32 %v2784, %v2787
  %vm2790 = vcmask 1024
  %2791 = vst.msk [vmem:[%s14] sm:$0x3] %vm2790, %v2789
  %2793 = vrot.lane.b32.xlu0 %v2789, 1
  %v2794 = vpop.permute.xlu0 %2793
  %vm2796 = vcmask 11274
  %2797 = vst.msk [vmem:[%s14 - $0x2] sm:$0xc] %vm2796, %v2794
  %v2798 = vld [vmem:[%s7] sm:$0xff]
  %v2799 = vld [vmem:[%s7 + $0x8] sm:$0xff]
  %v2800 = vld [vmem:[%s7 + $0x10] sm:$0xff]
  %v2801 = vld [vmem:[%s7 + $0x18] sm:$0xff]
  %v2802 = vld [vmem:[%s7 + $0x20] sm:$0xff]
  %v2803 = vld [vmem:[%s7 + $0x28] sm:$0xff]
  %v2804 = vld [vmem:[%s7 + $0x30] sm:$0xff]
  %v2805 = vld [vmem:[%s7 + $0x38] sm:$0xff]
  %v2806 = vld [vmem:[%s7 + $0x40] sm:$0xff]
  %v2807 = vld [vmem:[%s7 + $0x48] sm:$0xff]
  %v2808 = vld [vmem:[%s7 + $0x50] sm:$0xff]
  %v2809 = vld [vmem:[%s7 + $0x58] sm:$0xff]
  %v2810 = vld [vmem:[%s7 + $0x60] sm:$0xff]
  %v2811 = vld [vmem:[%s7 + $0x68] sm:$0xff]
  %v2812 = vld [vmem:[%s7 + $0x70] sm:$0xff]
  %v2813 = vld [vmem:[%s7 + $0x78] sm:$0xff]
  %v2814 = vld [vmem:[%s7 + $0x80] sm:$0xff]
  %v2815 = vld [vmem:[%s7 + $0x88] sm:$0xff]
  %v2816 = vld [vmem:[%s7 + $0x90] sm:$0xff]
  %v2817 = vld [vmem:[%s7 + $0x98] sm:$0xff]
  %v2818 = vld [vmem:[%s7 + $0xa0] sm:$0xff]
  %v2819 = vld [vmem:[%s7 + $0xa8] sm:$0xff]
  %v2820 = vld [vmem:[%s7 + $0xb0] sm:$0xff]
  %v2821 = vld [vmem:[%s7 + $0xb8] sm:$0xff]
  %v2822 = vld [vmem:[%s7 + $0xc0] sm:$0xff]
  %v2823 = vld [vmem:[%s7 + $0xc8] sm:$0xff]
  %v2824 = vld [vmem:[%s7 + $0xd0] sm:$0xff]
  %v2825 = vld [vmem:[%s7 + $0xd8] sm:$0xff]
  %v2826 = vld [vmem:[%s7 + $0xe0] sm:$0xff]
  %v2827 = vld [vmem:[%s7 + $0xe8] sm:$0xff]
  %v2828 = vld [vmem:[%s7 + $0xf0] sm:$0xff]
  %v2829 = vld [vmem:[%s7 + $0xf8] sm:$0xff]
  %v2830 = vld [vmem:[%s8] sm:$0xff]
  %v2831 = vld [vmem:[%s8 + $0x8] sm:$0xff]
  %v2832 = vld [vmem:[%s8 + $0x10] sm:$0xff]
  %v2833 = vld [vmem:[%s8 + $0x18] sm:$0xff]
  %v2834 = vld [vmem:[%s8 + $0x20] sm:$0xff]
  %v2835 = vld [vmem:[%s8 + $0x28] sm:$0xff]
  %v2836 = vld [vmem:[%s8 + $0x30] sm:$0xff]
  %v2837 = vld [vmem:[%s8 + $0x38] sm:$0xff]
  %v2838 = vld [vmem:[%s8 + $0x40] sm:$0xff]
  %v2839 = vld [vmem:[%s8 + $0x48] sm:$0xff]
  %v2840 = vld [vmem:[%s8 + $0x50] sm:$0xff]
  %v2841 = vld [vmem:[%s8 + $0x58] sm:$0xff]
  %v2842 = vld [vmem:[%s8 + $0x60] sm:$0xff]
  %v2843 = vld [vmem:[%s8 + $0x68] sm:$0xff]
  %v2844 = vld [vmem:[%s8 + $0x70] sm:$0xff]
  %v2845 = vld [vmem:[%s8 + $0x78] sm:$0xff]
  %v2846 = vld [vmem:[%s8 + $0x80] sm:$0xff]
  %v2847 = vld [vmem:[%s8 + $0x88] sm:$0xff]
  %v2848 = vld [vmem:[%s8 + $0x90] sm:$0xff]
  %v2849 = vld [vmem:[%s8 + $0x98] sm:$0xff]
  %v2850 = vld [vmem:[%s8 + $0xa0] sm:$0xff]
  %v2851 = vld [vmem:[%s8 + $0xa8] sm:$0xff]
  %v2852 = vld [vmem:[%s8 + $0xb0] sm:$0xff]
  %v2853 = vld [vmem:[%s8 + $0xb8] sm:$0xff]
  %v2854 = vld [vmem:[%s8 + $0xc0] sm:$0xff]
  %v2855 = vld [vmem:[%s8 + $0xc8] sm:$0xff]
  %v2856 = vld [vmem:[%s8 + $0xd0] sm:$0xff]
  %v2857 = vld [vmem:[%s8 + $0xd8] sm:$0xff]
  %v2858 = vld [vmem:[%s8 + $0xe0] sm:$0xff]
  %v2859 = vld [vmem:[%s8 + $0xe8] sm:$0xff]
  %v2860 = vld [vmem:[%s8 + $0xf0] sm:$0xff]
  %v2861 = vld [vmem:[%s8 + $0xf8] sm:$0xff]
  %v2863 = vunpack.c.l.b16 %v557
  %v2864 = vpack.c.b16 %v2863, %v2863
  %v2865 = vrot.slane %v2864, 1
  %v2899 = vunpack.c.l.b16 %v2830
  %v2900 = vunpack.c.h.b16 %v2830
  %v2901 = vunpack.c.l.b16 %v2831
  %v2902 = vunpack.c.h.b16 %v2831
  %v2903 = vunpack.c.l.b16 %v2832
  %v2904 = vunpack.c.h.b16 %v2832
  %v2905 = vunpack.c.l.b16 %v2833
  %v2906 = vunpack.c.h.b16 %v2833
  %v2907 = vunpack.c.l.b16 %v2834
  %v2908 = vunpack.c.h.b16 %v2834
  %v2909 = vunpack.c.l.b16 %v2835
  %v2910 = vunpack.c.h.b16 %v2835
  %v2911 = vunpack.c.l.b16 %v2836
  %v2912 = vunpack.c.h.b16 %v2836
  %v2913 = vunpack.c.l.b16 %v2837
  %v2914 = vunpack.c.h.b16 %v2837
  %v2915 = vunpack.c.l.b16 %v2838
  %v2916 = vunpack.c.h.b16 %v2838
  %v2917 = vunpack.c.l.b16 %v2839
  %v2918 = vunpack.c.h.b16 %v2839
  %v2919 = vunpack.c.l.b16 %v2840
  %v2920 = vunpack.c.h.b16 %v2840
  %v2921 = vunpack.c.l.b16 %v2841
  %v2922 = vunpack.c.h.b16 %v2841
  %v2923 = vunpack.c.l.b16 %v2842
  %v2924 = vunpack.c.h.b16 %v2842
  %v2925 = vunpack.c.l.b16 %v2843
  %v2926 = vunpack.c.h.b16 %v2843
  %v2927 = vunpack.c.l.b16 %v2844
  %v2928 = vunpack.c.h.b16 %v2844
  %v2929 = vunpack.c.l.b16 %v2845
  %v2930 = vunpack.c.h.b16 %v2845
  %v2931 = vunpack.c.l.b16 %v2846
  %v2932 = vunpack.c.h.b16 %v2846
  %v2933 = vunpack.c.l.b16 %v2847
  %v2934 = vunpack.c.h.b16 %v2847
  %v2935 = vunpack.c.l.b16 %v2848
  %v2936 = vunpack.c.h.b16 %v2848
  %v2937 = vunpack.c.l.b16 %v2849
  %v2938 = vunpack.c.h.b16 %v2849
  %v2939 = vunpack.c.l.b16 %v2850
  %v2940 = vunpack.c.h.b16 %v2850
  %v2941 = vunpack.c.l.b16 %v2851
  %v2942 = vunpack.c.h.b16 %v2851
  %v2943 = vunpack.c.l.b16 %v2852
  %v2944 = vunpack.c.h.b16 %v2852
  %v2945 = vunpack.c.l.b16 %v2853
  %v2946 = vunpack.c.h.b16 %v2853
  %v2947 = vunpack.c.l.b16 %v2854
  %v2948 = vunpack.c.h.b16 %v2854
  %v2949 = vunpack.c.l.b16 %v2855
  %v2950 = vunpack.c.h.b16 %v2855
  %v2951 = vunpack.c.l.b16 %v2856
  %v2952 = vunpack.c.h.b16 %v2856
  %v2953 = vunpack.c.l.b16 %v2857
  %v2954 = vunpack.c.h.b16 %v2857
  %v2955 = vunpack.c.l.b16 %v2858
  %v2956 = vunpack.c.h.b16 %v2858
  %v2957 = vunpack.c.l.b16 %v2859
  %v2958 = vunpack.c.h.b16 %v2859
  %v2959 = vunpack.c.l.b16 %v2860
  %v2960 = vunpack.c.h.b16 %v2860
  %v2961 = vunpack.c.l.b16 %v2861
  %v2962 = vunpack.c.h.b16 %v2861
  %v2963 = vpack.c.b16 %v2903, %v2899
  %v2964 = vpack.c.b16 %v2904, %v2900
  %v2965 = vpack.c.b16 %v2905, %v2901
  %v2966 = vpack.c.b16 %v2906, %v2902
  %v2967 = vpack.c.b16 %v2911, %v2907
  %v2968 = vpack.c.b16 %v2912, %v2908
  %v2969 = vpack.c.b16 %v2913, %v2909
  %v2970 = vpack.c.b16 %v2914, %v2910
  %v2971 = vpack.c.b16 %v2919, %v2915
  %v2972 = vpack.c.b16 %v2920, %v2916
  %v2973 = vpack.c.b16 %v2921, %v2917
  %v2974 = vpack.c.b16 %v2922, %v2918
  %v2975 = vpack.c.b16 %v2927, %v2923
  %v2976 = vpack.c.b16 %v2928, %v2924
  %v2977 = vpack.c.b16 %v2929, %v2925
  %v2978 = vpack.c.b16 %v2930, %v2926
  %v2979 = vpack.c.b16 %v2935, %v2931
  %v2980 = vpack.c.b16 %v2936, %v2932
  %v2981 = vpack.c.b16 %v2937, %v2933
  %v2982 = vpack.c.b16 %v2938, %v2934
  %v2983 = vpack.c.b16 %v2943, %v2939
  %v2984 = vpack.c.b16 %v2944, %v2940
  %v2985 = vpack.c.b16 %v2945, %v2941
  %v2986 = vpack.c.b16 %v2946, %v2942
  %v2987 = vpack.c.b16 %v2951, %v2947
  %v2988 = vpack.c.b16 %v2952, %v2948
  %v2989 = vpack.c.b16 %v2953, %v2949
  %v2990 = vpack.c.b16 %v2954, %v2950
  %v2991 = vpack.c.b16 %v2959, %v2955
  %v2992 = vpack.c.b16 %v2960, %v2956
  %v2993 = vpack.c.b16 %v2961, %v2957
  %v2994 = vpack.c.b16 %v2962, %v2958
  %3027 = vmatpush.bf16.msra.mxu0 %v2991
  %3028 = vmatpush.bf16.msra.mxu0 %v2987
  %3029 = vmatpush.bf16.msra.mxu0 %v2983
  %3030 = vmatpush.bf16.msra.mxu0 %v2979
  %3031 = vmatpush.bf16.msra.mxu0 %v2975
  %3032 = vmatpush.bf16.msra.mxu0 %v2971
  %3033 = vmatpush.bf16.msra.mxu0 %v2967
  %3034 = vmatpush.bf16.msra.mxu0 %v2963
  %3035 = vmatmul.bf16.gmra.mxu0 %v2865
  %v3036 = vpop.f32.mrf.mxu0
  %v3037 = vadd.f32 0.0, %v3036
  %v3038 = vpop.f32.mrf.mxu0
  %3039 = vdwg.mxu0
  %3040 = vmatpush.bf16.msra.mxu0 %v2992
  %3041 = vmatpush.bf16.msra.mxu0 %v2988
  %3042 = vmatpush.bf16.msra.mxu0 %v2984
  %3043 = vmatpush.bf16.msra.mxu0 %v2980
  %3044 = vmatpush.bf16.msra.mxu0 %v2976
  %3045 = vmatpush.bf16.msra.mxu0 %v2972
  %3046 = vmatpush.bf16.msra.mxu0 %v2968
  %3047 = vmatpush.bf16.msra.mxu0 %v2964
  %3048 = vmatmul.bf16.gmra.mxu0 %v2865
  %v3049 = vpop.f32.mrf.mxu0
  %v3050 = vadd.f32 0.0, %v3049
  %v3051 = vpop.f32.mrf.mxu0
  %3052 = vdwg.mxu0
  %3053 = vmatpush.bf16.msra.mxu0 %v2993
  %3054 = vmatpush.bf16.msra.mxu0 %v2989
  %3055 = vmatpush.bf16.msra.mxu0 %v2985
  %3056 = vmatpush.bf16.msra.mxu0 %v2981
  %3057 = vmatpush.bf16.msra.mxu0 %v2977
  %3058 = vmatpush.bf16.msra.mxu0 %v2973
  %3059 = vmatpush.bf16.msra.mxu0 %v2969
  %3060 = vmatpush.bf16.msra.mxu0 %v2965
  %3061 = vmatmul.bf16.gmra.mxu0 %v2865
  %v3062 = vpop.f32.mrf.mxu0
  %v3063 = vadd.f32 0.0, %v3062
  %v3064 = vpop.f32.mrf.mxu0
  %3065 = vdwg.mxu0
  %3066 = vmatpush.bf16.msra.mxu0 %v2994
  %3067 = vmatpush.bf16.msra.mxu0 %v2990
  %3068 = vmatpush.bf16.msra.mxu0 %v2986
  %3069 = vmatpush.bf16.msra.mxu0 %v2982
  %3070 = vmatpush.bf16.msra.mxu0 %v2978
  %3071 = vmatpush.bf16.msra.mxu0 %v2974
  %3072 = vmatpush.bf16.msra.mxu0 %v2970
  %3073 = vmatpush.bf16.msra.mxu0 %v2966
  %3074 = vmatmul.bf16.gmra.mxu0 %v2865
  %v3075 = vpop.f32.mrf.mxu0
  %v3076 = vadd.f32 0.0, %v3075
  %v3077 = vpop.f32.mrf.mxu0
  %3078 = vdwg.mxu0
  %v3111 = vunpack.c.l.b16 %v2798
  %v3112 = vunpack.c.h.b16 %v2798
  %v3113 = vunpack.c.l.b16 %v2799
  %v3114 = vunpack.c.h.b16 %v2799
  %v3115 = vunpack.c.l.b16 %v2800
  %v3116 = vunpack.c.h.b16 %v2800
  %v3117 = vunpack.c.l.b16 %v2801
  %v3118 = vunpack.c.h.b16 %v2801
  %v3119 = vunpack.c.l.b16 %v2802
  %v3120 = vunpack.c.h.b16 %v2802
  %v3121 = vunpack.c.l.b16 %v2803
  %v3122 = vunpack.c.h.b16 %v2803
  %v3123 = vunpack.c.l.b16 %v2804
  %v3124 = vunpack.c.h.b16 %v2804
  %v3125 = vunpack.c.l.b16 %v2805
  %v3126 = vunpack.c.h.b16 %v2805
  %v3127 = vunpack.c.l.b16 %v2806
  %v3128 = vunpack.c.h.b16 %v2806
  %v3129 = vunpack.c.l.b16 %v2807
  %v3130 = vunpack.c.h.b16 %v2807
  %v3131 = vunpack.c.l.b16 %v2808
  %v3132 = vunpack.c.h.b16 %v2808
  %v3133 = vunpack.c.l.b16 %v2809
  %v3134 = vunpack.c.h.b16 %v2809
  %v3135 = vunpack.c.l.b16 %v2810
  %v3136 = vunpack.c.h.b16 %v2810
  %v3137 = vunpack.c.l.b16 %v2811
  %v3138 = vunpack.c.h.b16 %v2811
  %v3139 = vunpack.c.l.b16 %v2812
  %v3140 = vunpack.c.h.b16 %v2812
  %v3141 = vunpack.c.l.b16 %v2813
  %v3142 = vunpack.c.h.b16 %v2813
  %v3143 = vunpack.c.l.b16 %v2814
  %v3144 = vunpack.c.h.b16 %v2814
  %v3145 = vunpack.c.l.b16 %v2815
  %v3146 = vunpack.c.h.b16 %v2815
  %v3147 = vunpack.c.l.b16 %v2816
  %v3148 = vunpack.c.h.b16 %v2816
  %v3149 = vunpack.c.l.b16 %v2817
  %v3150 = vunpack.c.h.b16 %v2817
  %v3151 = vunpack.c.l.b16 %v2818
  %v3152 = vunpack.c.h.b16 %v2818
  %v3153 = vunpack.c.l.b16 %v2819
  %v3154 = vunpack.c.h.b16 %v2819
  %v3155 = vunpack.c.l.b16 %v2820
  %v3156 = vunpack.c.h.b16 %v2820
  %v3157 = vunpack.c.l.b16 %v2821
  %v3158 = vunpack.c.h.b16 %v2821
  %v3159 = vunpack.c.l.b16 %v2822
  %v3160 = vunpack.c.h.b16 %v2822
  %v3161 = vunpack.c.l.b16 %v2823
  %v3162 = vunpack.c.h.b16 %v2823
  %v3163 = vunpack.c.l.b16 %v2824
  %v3164 = vunpack.c.h.b16 %v2824
  %v3165 = vunpack.c.l.b16 %v2825
  %v3166 = vunpack.c.h.b16 %v2825
  %v3167 = vunpack.c.l.b16 %v2826
  %v3168 = vunpack.c.h.b16 %v2826
  %v3169 = vunpack.c.l.b16 %v2827
  %v3170 = vunpack.c.h.b16 %v2827
  %v3171 = vunpack.c.l.b16 %v2828
  %v3172 = vunpack.c.h.b16 %v2828
  %v3173 = vunpack.c.l.b16 %v2829
  %v3174 = vunpack.c.h.b16 %v2829
  %v3175 = vpack.c.b16 %v3115, %v3111
  %v3176 = vpack.c.b16 %v3116, %v3112
  %v3177 = vpack.c.b16 %v3117, %v3113
  %v3178 = vpack.c.b16 %v3118, %v3114
  %v3179 = vpack.c.b16 %v3123, %v3119
  %v3180 = vpack.c.b16 %v3124, %v3120
  %v3181 = vpack.c.b16 %v3125, %v3121
  %v3182 = vpack.c.b16 %v3126, %v3122
  %v3183 = vpack.c.b16 %v3131, %v3127
  %v3184 = vpack.c.b16 %v3132, %v3128
  %v3185 = vpack.c.b16 %v3133, %v3129
  %v3186 = vpack.c.b16 %v3134, %v3130
  %v3187 = vpack.c.b16 %v3139, %v3135
  %v3188 = vpack.c.b16 %v3140, %v3136
  %v3189 = vpack.c.b16 %v3141, %v3137
  %v3190 = vpack.c.b16 %v3142, %v3138
  %v3191 = vpack.c.b16 %v3147, %v3143
  %v3192 = vpack.c.b16 %v3148, %v3144
  %v3193 = vpack.c.b16 %v3149, %v3145
  %v3194 = vpack.c.b16 %v3150, %v3146
  %v3195 = vpack.c.b16 %v3155, %v3151
  %v3196 = vpack.c.b16 %v3156, %v3152
  %v3197 = vpack.c.b16 %v3157, %v3153
  %v3198 = vpack.c.b16 %v3158, %v3154
  %v3199 = vpack.c.b16 %v3163, %v3159
  %v3200 = vpack.c.b16 %v3164, %v3160
  %v3201 = vpack.c.b16 %v3165, %v3161
  %v3202 = vpack.c.b16 %v3166, %v3162
  %v3203 = vpack.c.b16 %v3171, %v3167
  %v3204 = vpack.c.b16 %v3172, %v3168
  %v3205 = vpack.c.b16 %v3173, %v3169
  %v3206 = vpack.c.b16 %v3174, %v3170
  %3239 = vmatpush.bf16.msra.mxu0 %v3203
  %3240 = vmatpush.bf16.msra.mxu0 %v3199
  %3241 = vmatpush.bf16.msra.mxu0 %v3195
  %3242 = vmatpush.bf16.msra.mxu0 %v3191
  %3243 = vmatpush.bf16.msra.mxu0 %v3187
  %3244 = vmatpush.bf16.msra.mxu0 %v3183
  %3245 = vmatpush.bf16.msra.mxu0 %v3179
  %3246 = vmatpush.bf16.msra.mxu0 %v3175
  %3247 = vmatmul.bf16.gmra.mxu0 %v557
  %v3248 = vpop.f32.mrf.mxu0
  %v3249 = vadd.f32 %v3037, %v3248
  %v3250 = vpop.f32.mrf.mxu0
  %3251 = vdwg.mxu0
  %3252 = vmatpush.bf16.msra.mxu0 %v3204
  %3253 = vmatpush.bf16.msra.mxu0 %v3200
  %3254 = vmatpush.bf16.msra.mxu0 %v3196
  %3255 = vmatpush.bf16.msra.mxu0 %v3192
  %3256 = vmatpush.bf16.msra.mxu0 %v3188
  %3257 = vmatpush.bf16.msra.mxu0 %v3184
  %3258 = vmatpush.bf16.msra.mxu0 %v3180
  %3259 = vmatpush.bf16.msra.mxu0 %v3176
  %3260 = vmatmul.bf16.gmra.mxu0 %v557
  %v3261 = vpop.f32.mrf.mxu0
  %v3262 = vadd.f32 %v3050, %v3261
  %v3263 = vpop.f32.mrf.mxu0
  %3264 = vdwg.mxu0
  %3265 = vmatpush.bf16.msra.mxu0 %v3205
  %3266 = vmatpush.bf16.msra.mxu0 %v3201
  %3267 = vmatpush.bf16.msra.mxu0 %v3197
  %3268 = vmatpush.bf16.msra.mxu0 %v3193
  %3269 = vmatpush.bf16.msra.mxu0 %v3189
  %3270 = vmatpush.bf16.msra.mxu0 %v3185
  %3271 = vmatpush.bf16.msra.mxu0 %v3181
  %3272 = vmatpush.bf16.msra.mxu0 %v3177
  %3273 = vmatmul.bf16.gmra.mxu0 %v557
  %v3274 = vpop.f32.mrf.mxu0
  %v3275 = vadd.f32 %v3063, %v3274
  %v3276 = vpop.f32.mrf.mxu0
  %3277 = vdwg.mxu0
  %3278 = vmatpush.bf16.msra.mxu0 %v3206
  %3279 = vmatpush.bf16.msra.mxu0 %v3202
  %3280 = vmatpush.bf16.msra.mxu0 %v3198
  %3281 = vmatpush.bf16.msra.mxu0 %v3194
  %3282 = vmatpush.bf16.msra.mxu0 %v3190
  %3283 = vmatpush.bf16.msra.mxu0 %v3186
  %3284 = vmatpush.bf16.msra.mxu0 %v3182
  %3285 = vmatpush.bf16.msra.mxu0 %v3178
  %3286 = vmatmul.bf16.gmra.mxu0 %v557
  %v3287 = vpop.f32.mrf.mxu0
  %v3288 = vadd.f32 %v3076, %v3287
  %v3289 = vpop.f32.mrf.mxu0
  %3290 = vdwg.mxu0
  %v3291 = vld [vmem:[%s9] sm:$0xf]
  %v3293 = vperm.slane %v3291, 0
  %v3294 = vperm.slane %v3291, 1
  %v3295 = vperm.slane %v3291, 2
  %v3296 = vperm.slane %v3291, 3
  %v3301 = vadd.f32 %v3249, %v3293
  %v3302 = vadd.f32 %v3262, %v3294
  %v3303 = vadd.f32 %v3275, %v3295
  %v3304 = vadd.f32 %v3288, %v3296
  %v3305 = vmax.f32 %v3301, 0.0
  %v3306 = vmax.f32 %v3302, 0.0
  %v3307 = vmax.f32 %v3303, 0.0
  %v3308 = vmax.f32 %v3304, 0.0
  %v3309 = vpack.c.bf16 %v3305, %v3305
  %v3310 = vpack.c.bf16 %v3306, %v3306
  %v3311 = vpack.c.bf16 %v3307, %v3307
  %v3312 = vpack.c.bf16 %v3308, %v3308
  %v3313 = vld [vmem:[%s10] sm:$0xff]
  %v3314 = vld [vmem:[%s10 + $0x8] sm:$0xff]
  %v3315 = vld [vmem:[%s10 + $0x10] sm:$0xff]
  %v3316 = vld [vmem:[%s10 + $0x18] sm:$0xff]
  %v3317 = vld [vmem:[%s10 + $0x20] sm:$0xff]
  %v3318 = vld [vmem:[%s10 + $0x28] sm:$0xff]
  %v3319 = vld [vmem:[%s10 + $0x30] sm:$0xff]
  %v3320 = vld [vmem:[%s10 + $0x38] sm:$0xff]
  %v3321 = vld [vmem:[%s10 + $0x40] sm:$0xff]
  %v3322 = vld [vmem:[%s10 + $0x48] sm:$0xff]
  %v3323 = vld [vmem:[%s10 + $0x50] sm:$0xff]
  %v3324 = vld [vmem:[%s10 + $0x58] sm:$0xff]
  %v3325 = vld [vmem:[%s10 + $0x60] sm:$0xff]
  %v3326 = vld [vmem:[%s10 + $0x68] sm:$0xff]
  %v3327 = vld [vmem:[%s10 + $0x70] sm:$0xff]
  %v3328 = vld [vmem:[%s10 + $0x78] sm:$0xff]
  %v3329 = vld [vmem:[%s10 + $0x80] sm:$0xff]
  %v3330 = vld [vmem:[%s10 + $0x88] sm:$0xff]
  %v3331 = vld [vmem:[%s10 + $0x90] sm:$0xff]
  %v3332 = vld [vmem:[%s10 + $0x98] sm:$0xff]
  %v3333 = vld [vmem:[%s10 + $0xa0] sm:$0xff]
  %v3334 = vld [vmem:[%s10 + $0xa8] sm:$0xff]
  %v3335 = vld [vmem:[%s10 + $0xb0] sm:$0xff]
  %v3336 = vld [vmem:[%s10 + $0xb8] sm:$0xff]
  %v3337 = vld [vmem:[%s10 + $0xc0] sm:$0xff]
  %v3338 = vld [vmem:[%s10 + $0xc8] sm:$0xff]
  %v3339 = vld [vmem:[%s10 + $0xd0] sm:$0xff]
  %v3340 = vld [vmem:[%s10 + $0xd8] sm:$0xff]
  %v3341 = vld [vmem:[%s10 + $0xe0] sm:$0xff]
  %v3342 = vld [vmem:[%s10 + $0xe8] sm:$0xff]
  %v3343 = vld [vmem:[%s10 + $0xf0] sm:$0xff]
  %v3344 = vld [vmem:[%s10 + $0xf8] sm:$0xff]
  %v3345 = vld [vmem:[%s10 + $0x100] sm:$0xff]
  %v3346 = vld [vmem:[%s10 + $0x108] sm:$0xff]
  %v3347 = vld [vmem:[%s10 + $0x110] sm:$0xff]
  %v3348 = vld [vmem:[%s10 + $0x118] sm:$0xff]
  %v3349 = vld [vmem:[%s10 + $0x120] sm:$0xff]
  %v3350 = vld [vmem:[%s10 + $0x128] sm:$0xff]
  %v3351 = vld [vmem:[%s10 + $0x130] sm:$0xff]
  %v3352 = vld [vmem:[%s10 + $0x138] sm:$0xff]
  %v3353 = vld [vmem:[%s10 + $0x140] sm:$0xff]
  %v3354 = vld [vmem:[%s10 + $0x148] sm:$0xff]
  %v3355 = vld [vmem:[%s10 + $0x150] sm:$0xff]
  %v3356 = vld [vmem:[%s10 + $0x158] sm:$0xff]
  %v3357 = vld [vmem:[%s10 + $0x160] sm:$0xff]
  %v3358 = vld [vmem:[%s10 + $0x168] sm:$0xff]
  %v3359 = vld [vmem:[%s10 + $0x170] sm:$0xff]
  %v3360 = vld [vmem:[%s10 + $0x178] sm:$0xff]
  %v3361 = vld [vmem:[%s10 + $0x180] sm:$0xff]
  %v3362 = vld [vmem:[%s10 + $0x188] sm:$0xff]
  %v3363 = vld [vmem:[%s10 + $0x190] sm:$0xff]
  %v3364 = vld [vmem:[%s10 + $0x198] sm:$0xff]
  %v3365 = vld [vmem:[%s10 + $0x1a0] sm:$0xff]
  %v3366 = vld [vmem:[%s10 + $0x1a8] sm:$0xff]
  %v3367 = vld [vmem:[%s10 + $0x1b0] sm:$0xff]
  %v3368 = vld [vmem:[%s10 + $0x1b8] sm:$0xff]
  %v3369 = vld [vmem:[%s10 + $0x1c0] sm:$0xff]
  %v3370 = vld [vmem:[%s10 + $0x1c8] sm:$0xff]
  %v3371 = vld [vmem:[%s10 + $0x1d0] sm:$0xff]
  %v3372 = vld [vmem:[%s10 + $0x1d8] sm:$0xff]
  %v3373 = vld [vmem:[%s10 + $0x1e0] sm:$0xff]
  %v3374 = vld [vmem:[%s10 + $0x1e8] sm:$0xff]
  %v3375 = vld [vmem:[%s10 + $0x1f0] sm:$0xff]
  %v3376 = vld [vmem:[%s10 + $0x1f8] sm:$0xff]
  %v3377 = vld [vmem:[%s10 + $0x200] sm:$0xff]
  %v3378 = vld [vmem:[%s10 + $0x208] sm:$0xff]
  %v3379 = vld [vmem:[%s10 + $0x210] sm:$0xff]
  %v3380 = vld [vmem:[%s10 + $0x218] sm:$0xff]
  %v3381 = vld [vmem:[%s10 + $0x220] sm:$0xff]
  %v3382 = vld [vmem:[%s10 + $0x228] sm:$0xff]
  %v3383 = vld [vmem:[%s10 + $0x230] sm:$0xff]
  %v3384 = vld [vmem:[%s10 + $0x238] sm:$0xff]
  %v3385 = vld [vmem:[%s10 + $0x240] sm:$0xff]
  %v3386 = vld [vmem:[%s10 + $0x248] sm:$0xff]
  %v3387 = vld [vmem:[%s10 + $0x250] sm:$0xff]
  %v3388 = vld [vmem:[%s10 + $0x258] sm:$0xff]
  %v3389 = vld [vmem:[%s10 + $0x260] sm:$0xff]
  %v3390 = vld [vmem:[%s10 + $0x268] sm:$0xff]
  %v3391 = vld [vmem:[%s10 + $0x270] sm:$0xff]
  %v3392 = vld [vmem:[%s10 + $0x278] sm:$0xff]
  %v3393 = vld [vmem:[%s10 + $0x280] sm:$0xff]
  %v3394 = vld [vmem:[%s10 + $0x288] sm:$0xff]
  %v3395 = vld [vmem:[%s10 + $0x290] sm:$0xff]
  %v3396 = vld [vmem:[%s10 + $0x298] sm:$0xff]
  %v3397 = vld [vmem:[%s10 + $0x2a0] sm:$0xff]
  %v3398 = vld [vmem:[%s10 + $0x2a8] sm:$0xff]
  %v3399 = vld [vmem:[%s10 + $0x2b0] sm:$0xff]
  %v3400 = vld [vmem:[%s10 + $0x2b8] sm:$0xff]
  %v3401 = vld [vmem:[%s10 + $0x2c0] sm:$0xff]
  %v3402 = vld [vmem:[%s10 + $0x2c8] sm:$0xff]
  %v3403 = vld [vmem:[%s10 + $0x2d0] sm:$0xff]
  %v3404 = vld [vmem:[%s10 + $0x2d8] sm:$0xff]
  %v3405 = vld [vmem:[%s10 + $0x2e0] sm:$0xff]
  %v3406 = vld [vmem:[%s10 + $0x2e8] sm:$0xff]
  %v3407 = vld [vmem:[%s10 + $0x2f0] sm:$0xff]
  %v3408 = vld [vmem:[%s10 + $0x2f8] sm:$0xff]
  %v3409 = vld [vmem:[%s10 + $0x300] sm:$0xff]
  %v3410 = vld [vmem:[%s10 + $0x308] sm:$0xff]
  %v3411 = vld [vmem:[%s10 + $0x310] sm:$0xff]
  %v3412 = vld [vmem:[%s10 + $0x318] sm:$0xff]
  %v3413 = vld [vmem:[%s10 + $0x320] sm:$0xff]
  %v3414 = vld [vmem:[%s10 + $0x328] sm:$0xff]
  %v3415 = vld [vmem:[%s10 + $0x330] sm:$0xff]
  %v3416 = vld [vmem:[%s10 + $0x338] sm:$0xff]
  %v3417 = vld [vmem:[%s10 + $0x340] sm:$0xff]
  %v3418 = vld [vmem:[%s10 + $0x348] sm:$0xff]
  %v3419 = vld [vmem:[%s10 + $0x350] sm:$0xff]
  %v3420 = vld [vmem:[%s10 + $0x358] sm:$0xff]
  %v3421 = vld [vmem:[%s10 + $0x360] sm:$0xff]
  %v3422 = vld [vmem:[%s10 + $0x368] sm:$0xff]
  %v3423 = vld [vmem:[%s10 + $0x370] sm:$0xff]
  %v3424 = vld [vmem:[%s10 + $0x378] sm:$0xff]
  %v3425 = vld [vmem:[%s10 + $0x380] sm:$0xff]
  %v3426 = vld [vmem:[%s10 + $0x388] sm:$0xff]
  %v3427 = vld [vmem:[%s10 + $0x390] sm:$0xff]
  %v3428 = vld [vmem:[%s10 + $0x398] sm:$0xff]
  %v3429 = vld [vmem:[%s10 + $0x3a0] sm:$0xff]
  %v3430 = vld [vmem:[%s10 + $0x3a8] sm:$0xff]
  %v3431 = vld [vmem:[%s10 + $0x3b0] sm:$0xff]
  %v3432 = vld [vmem:[%s10 + $0x3b8] sm:$0xff]
  %v3433 = vld [vmem:[%s10 + $0x3c0] sm:$0xff]
  %v3434 = vld [vmem:[%s10 + $0x3c8] sm:$0xff]
  %v3435 = vld [vmem:[%s10 + $0x3d0] sm:$0xff]
  %v3436 = vld [vmem:[%s10 + $0x3d8] sm:$0xff]
  %v3437 = vld [vmem:[%s10 + $0x3e0] sm:$0xff]
  %v3438 = vld [vmem:[%s10 + $0x3e8] sm:$0xff]
  %v3439 = vld [vmem:[%s10 + $0x3f0] sm:$0xff]
  %v3440 = vld [vmem:[%s10 + $0x3f8] sm:$0xff]
  %v3441 = vld [vmem:[%s11] sm:$0xf]
  %v3443 = vperm.slane %v3441, 0
  %v3444 = vperm.slane %v3441, 1
  %v3445 = vperm.slane %v3441, 2
  %v3446 = vperm.slane %v3441, 3
  %v3579 = vunpack.c.l.b16 %v3313
  %v3580 = vunpack.c.h.b16 %v3313
  %v3581 = vunpack.c.l.b16 %v3314
  %v3582 = vunpack.c.h.b16 %v3314
  %v3583 = vunpack.c.l.b16 %v3315
  %v3584 = vunpack.c.h.b16 %v3315
  %v3585 = vunpack.c.l.b16 %v3316
  %v3586 = vunpack.c.h.b16 %v3316
  %v3587 = vunpack.c.l.b16 %v3317
  %v3588 = vunpack.c.h.b16 %v3317
  %v3589 = vunpack.c.l.b16 %v3318
  %v3590 = vunpack.c.h.b16 %v3318
  %v3591 = vunpack.c.l.b16 %v3319
  %v3592 = vunpack.c.h.b16 %v3319
  %v3593 = vunpack.c.l.b16 %v3320
  %v3594 = vunpack.c.h.b16 %v3320
  %v3595 = vunpack.c.l.b16 %v3321
  %v3596 = vunpack.c.h.b16 %v3321
  %v3597 = vunpack.c.l.b16 %v3322
  %v3598 = vunpack.c.h.b16 %v3322
  %v3599 = vunpack.c.l.b16 %v3323
  %v3600 = vunpack.c.h.b16 %v3323
  %v3601 = vunpack.c.l.b16 %v3324
  %v3602 = vunpack.c.h.b16 %v3324
  %v3603 = vunpack.c.l.b16 %v3325
  %v3604 = vunpack.c.h.b16 %v3325
  %v3605 = vunpack.c.l.b16 %v3326
  %v3606 = vunpack.c.h.b16 %v3326
  %v3607 = vunpack.c.l.b16 %v3327
  %v3608 = vunpack.c.h.b16 %v3327
  %v3609 = vunpack.c.l.b16 %v3328
  %v3610 = vunpack.c.h.b16 %v3328
  %v3611 = vunpack.c.l.b16 %v3329
  %v3612 = vunpack.c.h.b16 %v3329
  %v3613 = vunpack.c.l.b16 %v3330
  %v3614 = vunpack.c.h.b16 %v3330
  %v3615 = vunpack.c.l.b16 %v3331
  %v3616 = vunpack.c.h.b16 %v3331
  %v3617 = vunpack.c.l.b16 %v3332
  %v3618 = vunpack.c.h.b16 %v3332
  %v3619 = vunpack.c.l.b16 %v3333
  %v3620 = vunpack.c.h.b16 %v3333
  %v3621 = vunpack.c.l.b16 %v3334
  %v3622 = vunpack.c.h.b16 %v3334
  %v3623 = vunpack.c.l.b16 %v3335
  %v3624 = vunpack.c.h.b16 %v3335
  %v3625 = vunpack.c.l.b16 %v3336
  %v3626 = vunpack.c.h.b16 %v3336
  %v3627 = vunpack.c.l.b16 %v3337
  %v3628 = vunpack.c.h.b16 %v3337
  %v3629 = vunpack.c.l.b16 %v3338
  %v3630 = vunpack.c.h.b16 %v3338
  %v3631 = vunpack.c.l.b16 %v3339
  %v3632 = vunpack.c.h.b16 %v3339
  %v3633 = vunpack.c.l.b16 %v3340
  %v3634 = vunpack.c.h.b16 %v3340
  %v3635 = vunpack.c.l.b16 %v3341
  %v3636 = vunpack.c.h.b16 %v3341
  %v3637 = vunpack.c.l.b16 %v3342
  %v3638 = vunpack.c.h.b16 %v3342
  %v3639 = vunpack.c.l.b16 %v3343
  %v3640 = vunpack.c.h.b16 %v3343
  %v3641 = vunpack.c.l.b16 %v3344
  %v3642 = vunpack.c.h.b16 %v3344
  %v3643 = vunpack.c.l.b16 %v3345
  %v3644 = vunpack.c.h.b16 %v3345
  %v3645 = vunpack.c.l.b16 %v3346
  %v3646 = vunpack.c.h.b16 %v3346
  %v3647 = vunpack.c.l.b16 %v3347
  %v3648 = vunpack.c.h.b16 %v3347
  %v3649 = vunpack.c.l.b16 %v3348
  %v3650 = vunpack.c.h.b16 %v3348
  %v3651 = vunpack.c.l.b16 %v3349
  %v3652 = vunpack.c.h.b16 %v3349
  %v3653 = vunpack.c.l.b16 %v3350
  %v3654 = vunpack.c.h.b16 %v3350
  %v3655 = vunpack.c.l.b16 %v3351
  %v3656 = vunpack.c.h.b16 %v3351
  %v3657 = vunpack.c.l.b16 %v3352
  %v3658 = vunpack.c.h.b16 %v3352
  %v3659 = vunpack.c.l.b16 %v3353
  %v3660 = vunpack.c.h.b16 %v3353
  %v3661 = vunpack.c.l.b16 %v3354
  %v3662 = vunpack.c.h.b16 %v3354
  %v3663 = vunpack.c.l.b16 %v3355
  %v3664 = vunpack.c.h.b16 %v3355
  %v3665 = vunpack.c.l.b16 %v3356
  %v3666 = vunpack.c.h.b16 %v3356
  %v3667 = vunpack.c.l.b16 %v3357
  %v3668 = vunpack.c.h.b16 %v3357
  %v3669 = vunpack.c.l.b16 %v3358
  %v3670 = vunpack.c.h.b16 %v3358
  %v3671 = vunpack.c.l.b16 %v3359
  %v3672 = vunpack.c.h.b16 %v3359
  %v3673 = vunpack.c.l.b16 %v3360
  %v3674 = vunpack.c.h.b16 %v3360
  %v3675 = vunpack.c.l.b16 %v3361
  %v3676 = vunpack.c.h.b16 %v3361
  %v3677 = vunpack.c.l.b16 %v3362
  %v3678 = vunpack.c.h.b16 %v3362
  %v3679 = vunpack.c.l.b16 %v3363
  %v3680 = vunpack.c.h.b16 %v3363
  %v3681 = vunpack.c.l.b16 %v3364
  %v3682 = vunpack.c.h.b16 %v3364
  %v3683 = vunpack.c.l.b16 %v3365
  %v3684 = vunpack.c.h.b16 %v3365
  %v3685 = vunpack.c.l.b16 %v3366
  %v3686 = vunpack.c.h.b16 %v3366
  %v3687 = vunpack.c.l.b16 %v3367
  %v3688 = vunpack.c.h.b16 %v3367
  %v3689 = vunpack.c.l.b16 %v3368
  %v3690 = vunpack.c.h.b16 %v3368
  %v3691 = vunpack.c.l.b16 %v3369
  %v3692 = vunpack.c.h.b16 %v3369
  %v3693 = vunpack.c.l.b16 %v3370
  %v3694 = vunpack.c.h.b16 %v3370
  %v3695 = vunpack.c.l.b16 %v3371
  %v3696 = vunpack.c.h.b16 %v3371
  %v3697 = vunpack.c.l.b16 %v3372
  %v3698 = vunpack.c.h.b16 %v3372
  %v3699 = vunpack.c.l.b16 %v3373
  %v3700 = vunpack.c.h.b16 %v3373
  %v3701 = vunpack.c.l.b16 %v3374
  %v3702 = vunpack.c.h.b16 %v3374
  %v3703 = vunpack.c.l.b16 %v3375
  %v3704 = vunpack.c.h.b16 %v3375
  %v3705 = vunpack.c.l.b16 %v3376
  %v3706 = vunpack.c.h.b16 %v3376
  %v3707 = vunpack.c.l.b16 %v3377
  %v3708 = vunpack.c.h.b16 %v3377
  %v3709 = vunpack.c.l.b16 %v3378
  %v3710 = vunpack.c.h.b16 %v3378
  %v3711 = vunpack.c.l.b16 %v3379
  %v3712 = vunpack.c.h.b16 %v3379
  %v3713 = vunpack.c.l.b16 %v3380
  %v3714 = vunpack.c.h.b16 %v3380
  %v3715 = vunpack.c.l.b16 %v3381
  %v3716 = vunpack.c.h.b16 %v3381
  %v3717 = vunpack.c.l.b16 %v3382
  %v3718 = vunpack.c.h.b16 %v3382
  %v3719 = vunpack.c.l.b16 %v3383
  %v3720 = vunpack.c.h.b16 %v3383
  %v3721 = vunpack.c.l.b16 %v3384
  %v3722 = vunpack.c.h.b16 %v3384
  %v3723 = vunpack.c.l.b16 %v3385
  %v3724 = vunpack.c.h.b16 %v3385
  %v3725 = vunpack.c.l.b16 %v3386
  %v3726 = vunpack.c.h.b16 %v3386
  %v3727 = vunpack.c.l.b16 %v3387
  %v3728 = vunpack.c.h.b16 %v3387
  %v3729 = vunpack.c.l.b16 %v3388
  %v3730 = vunpack.c.h.b16 %v3388
  %v3731 = vunpack.c.l.b16 %v3389
  %v3732 = vunpack.c.h.b16 %v3389
  %v3733 = vunpack.c.l.b16 %v3390
  %v3734 = vunpack.c.h.b16 %v3390
  %v3735 = vunpack.c.l.b16 %v3391
  %v3736 = vunpack.c.h.b16 %v3391
  %v3737 = vunpack.c.l.b16 %v3392
  %v3738 = vunpack.c.h.b16 %v3392
  %v3739 = vunpack.c.l.b16 %v3393
  %v3740 = vunpack.c.h.b16 %v3393
  %v3741 = vunpack.c.l.b16 %v3394
  %v3742 = vunpack.c.h.b16 %v3394
  %v3743 = vunpack.c.l.b16 %v3395
  %v3744 = vunpack.c.h.b16 %v3395
  %v3745 = vunpack.c.l.b16 %v3396
  %v3746 = vunpack.c.h.b16 %v3396
  %v3747 = vunpack.c.l.b16 %v3397
  %v3748 = vunpack.c.h.b16 %v3397
  %v3749 = vunpack.c.l.b16 %v3398
  %v3750 = vunpack.c.h.b16 %v3398
  %v3751 = vunpack.c.l.b16 %v3399
  %v3752 = vunpack.c.h.b16 %v3399
  %v3753 = vunpack.c.l.b16 %v3400
  %v3754 = vunpack.c.h.b16 %v3400
  %v3755 = vunpack.c.l.b16 %v3401
  %v3756 = vunpack.c.h.b16 %v3401
  %v3757 = vunpack.c.l.b16 %v3402
  %v3758 = vunpack.c.h.b16 %v3402
  %v3759 = vunpack.c.l.b16 %v3403
  %v3760 = vunpack.c.h.b16 %v3403
  %v3761 = vunpack.c.l.b16 %v3404
  %v3762 = vunpack.c.h.b16 %v3404
  %v3763 = vunpack.c.l.b16 %v3405
  %v3764 = vunpack.c.h.b16 %v3405
  %v3765 = vunpack.c.l.b16 %v3406
  %v3766 = vunpack.c.h.b16 %v3406
  %v3767 = vunpack.c.l.b16 %v3407
  %v3768 = vunpack.c.h.b16 %v3407
  %v3769 = vunpack.c.l.b16 %v3408
  %v3770 = vunpack.c.h.b16 %v3408
  %v3771 = vunpack.c.l.b16 %v3409
  %v3772 = vunpack.c.h.b16 %v3409
  %v3773 = vunpack.c.l.b16 %v3410
  %v3774 = vunpack.c.h.b16 %v3410
  %v3775 = vunpack.c.l.b16 %v3411
  %v3776 = vunpack.c.h.b16 %v3411
  %v3777 = vunpack.c.l.b16 %v3412
  %v3778 = vunpack.c.h.b16 %v3412
  %v3779 = vunpack.c.l.b16 %v3413
  %v3780 = vunpack.c.h.b16 %v3413
  %v3781 = vunpack.c.l.b16 %v3414
  %v3782 = vunpack.c.h.b16 %v3414
  %v3783 = vunpack.c.l.b16 %v3415
  %v3784 = vunpack.c.h.b16 %v3415
  %v3785 = vunpack.c.l.b16 %v3416
  %v3786 = vunpack.c.h.b16 %v3416
  %v3787 = vunpack.c.l.b16 %v3417
  %v3788 = vunpack.c.h.b16 %v3417
  %v3789 = vunpack.c.l.b16 %v3418
  %v3790 = vunpack.c.h.b16 %v3418
  %v3791 = vunpack.c.l.b16 %v3419
  %v3792 = vunpack.c.h.b16 %v3419
  %v3793 = vunpack.c.l.b16 %v3420
  %v3794 = vunpack.c.h.b16 %v3420
  %v3795 = vunpack.c.l.b16 %v3421
  %v3796 = vunpack.c.h.b16 %v3421
  %v3797 = vunpack.c.l.b16 %v3422
  %v3798 = vunpack.c.h.b16 %v3422
  %v3799 = vunpack.c.l.b16 %v3423
  %v3800 = vunpack.c.h.b16 %v3423
  %v3801 = vunpack.c.l.b16 %v3424
  %v3802 = vunpack.c.h.b16 %v3424
  %v3803 = vunpack.c.l.b16 %v3425
  %v3804 = vunpack.c.h.b16 %v3425
  %v3805 = vunpack.c.l.b16 %v3426
  %v3806 = vunpack.c.h.b16 %v3426
  %v3807 = vunpack.c.l.b16 %v3427
  %v3808 = vunpack.c.h.b16 %v3427
  %v3809 = vunpack.c.l.b16 %v3428
  %v3810 = vunpack.c.h.b16 %v3428
  %v3811 = vunpack.c.l.b16 %v3429
  %v3812 = vunpack.c.h.b16 %v3429
  %v3813 = vunpack.c.l.b16 %v3430
  %v3814 = vunpack.c.h.b16 %v3430
  %v3815 = vunpack.c.l.b16 %v3431
  %v3816 = vunpack.c.h.b16 %v3431
  %v3817 = vunpack.c.l.b16 %v3432
  %v3818 = vunpack.c.h.b16 %v3432
  %v3819 = vunpack.c.l.b16 %v3433
  %v3820 = vunpack.c.h.b16 %v3433
  %v3821 = vunpack.c.l.b16 %v3434
  %v3822 = vunpack.c.h.b16 %v3434
  %v3823 = vunpack.c.l.b16 %v3435
  %v3824 = vunpack.c.h.b16 %v3435
  %v3825 = vunpack.c.l.b16 %v3436
  %v3826 = vunpack.c.h.b16 %v3436
  %v3827 = vunpack.c.l.b16 %v3437
  %v3828 = vunpack.c.h.b16 %v3437
  %v3829 = vunpack.c.l.b16 %v3438
  %v3830 = vunpack.c.h.b16 %v3438
  %v3831 = vunpack.c.l.b16 %v3439
  %v3832 = vunpack.c.h.b16 %v3439
  %v3833 = vunpack.c.l.b16 %v3440
  %v3834 = vunpack.c.h.b16 %v3440
  %v3835 = vpack.c.b16 %v3583, %v3579
  %v3836 = vpack.c.b16 %v3584, %v3580
  %v3837 = vpack.c.b16 %v3585, %v3581
  %v3838 = vpack.c.b16 %v3586, %v3582
  %v3839 = vpack.c.b16 %v3591, %v3587
  %v3840 = vpack.c.b16 %v3592, %v3588
  %v3841 = vpack.c.b16 %v3593, %v3589
  %v3842 = vpack.c.b16 %v3594, %v3590
  %v3843 = vpack.c.b16 %v3599, %v3595
  %v3844 = vpack.c.b16 %v3600, %v3596
  %v3845 = vpack.c.b16 %v3601, %v3597
  %v3846 = vpack.c.b16 %v3602, %v3598
  %v3847 = vpack.c.b16 %v3607, %v3603
  %v3848 = vpack.c.b16 %v3608, %v3604
  %v3849 = vpack.c.b16 %v3609, %v3605
  %v3850 = vpack.c.b16 %v3610, %v3606
  %v3851 = vpack.c.b16 %v3615, %v3611
  %v3852 = vpack.c.b16 %v3616, %v3612
  %v3853 = vpack.c.b16 %v3617, %v3613
  %v3854 = vpack.c.b16 %v3618, %v3614
  %v3855 = vpack.c.b16 %v3623, %v3619
  %v3856 = vpack.c.b16 %v3624, %v3620
  %v3857 = vpack.c.b16 %v3625, %v3621
  %v3858 = vpack.c.b16 %v3626, %v3622
  %v3859 = vpack.c.b16 %v3631, %v3627
  %v3860 = vpack.c.b16 %v3632, %v3628
  %v3861 = vpack.c.b16 %v3633, %v3629
  %v3862 = vpack.c.b16 %v3634, %v3630
  %v3863 = vpack.c.b16 %v3639, %v3635
  %v3864 = vpack.c.b16 %v3640, %v3636
  %v3865 = vpack.c.b16 %v3641, %v3637
  %v3866 = vpack.c.b16 %v3642, %v3638
  %v3867 = vpack.c.b16 %v3647, %v3643
  %v3868 = vpack.c.b16 %v3648, %v3644
  %v3869 = vpack.c.b16 %v3649, %v3645
  %v3870 = vpack.c.b16 %v3650, %v3646
  %v3871 = vpack.c.b16 %v3655, %v3651
  %v3872 = vpack.c.b16 %v3656, %v3652
  %v3873 = vpack.c.b16 %v3657, %v3653
  %v3874 = vpack.c.b16 %v3658, %v3654
  %v3875 = vpack.c.b16 %v3663, %v3659
  %v3876 = vpack.c.b16 %v3664, %v3660
  %v3877 = vpack.c.b16 %v3665, %v3661
  %v3878 = vpack.c.b16 %v3666, %v3662
  %v3879 = vpack.c.b16 %v3671, %v3667
  %v3880 = vpack.c.b16 %v3672, %v3668
  %v3881 = vpack.c.b16 %v3673, %v3669
  %v3882 = vpack.c.b16 %v3674, %v3670
  %v3883 = vpack.c.b16 %v3679, %v3675
  %v3884 = vpack.c.b16 %v3680, %v3676
  %v3885 = vpack.c.b16 %v3681, %v3677
  %v3886 = vpack.c.b16 %v3682, %v3678
  %v3887 = vpack.c.b16 %v3687, %v3683
  %v3888 = vpack.c.b16 %v3688, %v3684
  %v3889 = vpack.c.b16 %v3689, %v3685
  %v3890 = vpack.c.b16 %v3690, %v3686
  %v3891 = vpack.c.b16 %v3695, %v3691
  %v3892 = vpack.c.b16 %v3696, %v3692
  %v3893 = vpack.c.b16 %v3697, %v3693
  %v3894 = vpack.c.b16 %v3698, %v3694
  %v3895 = vpack.c.b16 %v3703, %v3699
  %v3896 = vpack.c.b16 %v3704, %v3700
  %v3897 = vpack.c.b16 %v3705, %v3701
  %v3898 = vpack.c.b16 %v3706, %v3702
  %v3899 = vpack.c.b16 %v3711, %v3707
  %v3900 = vpack.c.b16 %v3712, %v3708
  %v3901 = vpack.c.b16 %v3713, %v3709
  %v3902 = vpack.c.b16 %v3714, %v3710
  %v3903 = vpack.c.b16 %v3719, %v3715
  %v3904 = vpack.c.b16 %v3720, %v3716
  %v3905 = vpack.c.b16 %v3721, %v3717
  %v3906 = vpack.c.b16 %v3722, %v3718
  %v3907 = vpack.c.b16 %v3727, %v3723
  %v3908 = vpack.c.b16 %v3728, %v3724
  %v3909 = vpack.c.b16 %v3729, %v3725
  %v3910 = vpack.c.b16 %v3730, %v3726
  %v3911 = vpack.c.b16 %v3735, %v3731
  %v3912 = vpack.c.b16 %v3736, %v3732
  %v3913 = vpack.c.b16 %v3737, %v3733
  %v3914 = vpack.c.b16 %v3738, %v3734
  %v3915 = vpack.c.b16 %v3743, %v3739
  %v3916 = vpack.c.b16 %v3744, %v3740
  %v3917 = vpack.c.b16 %v3745, %v3741
  %v3918 = vpack.c.b16 %v3746, %v3742
  %v3919 = vpack.c.b16 %v3751, %v3747
  %v3920 = vpack.c.b16 %v3752, %v3748
  %v3921 = vpack.c.b16 %v3753, %v3749
  %v3922 = vpack.c.b16 %v3754, %v3750
  %v3923 = vpack.c.b16 %v3759, %v3755
  %v3924 = vpack.c.b16 %v3760, %v3756
  %v3925 = vpack.c.b16 %v3761, %v3757
  %v3926 = vpack.c.b16 %v3762, %v3758
  %v3927 = vpack.c.b16 %v3767, %v3763
  %v3928 = vpack.c.b16 %v3768, %v3764
  %v3929 = vpack.c.b16 %v3769, %v3765
  %v3930 = vpack.c.b16 %v3770, %v3766
  %v3931 = vpack.c.b16 %v3775, %v3771
  %v3932 = vpack.c.b16 %v3776, %v3772
  %v3933 = vpack.c.b16 %v3777, %v3773
  %v3934 = vpack.c.b16 %v3778, %v3774
  %v3935 = vpack.c.b16 %v3783, %v3779
  %v3936 = vpack.c.b16 %v3784, %v3780
  %v3937 = vpack.c.b16 %v3785, %v3781
  %v3938 = vpack.c.b16 %v3786, %v3782
  %v3939 = vpack.c.b16 %v3791, %v3787
  %v3940 = vpack.c.b16 %v3792, %v3788
  %v3941 = vpack.c.b16 %v3793, %v3789
  %v3942 = vpack.c.b16 %v3794, %v3790
  %v3943 = vpack.c.b16 %v3799, %v3795
  %v3944 = vpack.c.b16 %v3800, %v3796
  %v3945 = vpack.c.b16 %v3801, %v3797
  %v3946 = vpack.c.b16 %v3802, %v3798
  %v3947 = vpack.c.b16 %v3807, %v3803
  %v3948 = vpack.c.b16 %v3808, %v3804
  %v3949 = vpack.c.b16 %v3809, %v3805
  %v3950 = vpack.c.b16 %v3810, %v3806
  %v3951 = vpack.c.b16 %v3815, %v3811
  %v3952 = vpack.c.b16 %v3816, %v3812
  %v3953 = vpack.c.b16 %v3817, %v3813
  %v3954 = vpack.c.b16 %v3818, %v3814
  %v3955 = vpack.c.b16 %v3823, %v3819
  %v3956 = vpack.c.b16 %v3824, %v3820
  %v3957 = vpack.c.b16 %v3825, %v3821
  %v3958 = vpack.c.b16 %v3826, %v3822
  %v3959 = vpack.c.b16 %v3831, %v3827
  %v3960 = vpack.c.b16 %v3832, %v3828
  %v3961 = vpack.c.b16 %v3833, %v3829
  %v3962 = vpack.c.b16 %v3834, %v3830
  %4091 = vmatpush.bf16.msra.mxu0 %v3863
  %4092 = vmatpush.bf16.msra.mxu0 %v3859
  %4093 = vmatpush.bf16.msra.mxu0 %v3855
  %4094 = vmatpush.bf16.msra.mxu0 %v3851
  %4095 = vmatpush.bf16.msra.mxu0 %v3847
  %4096 = vmatpush.bf16.msra.mxu0 %v3843
  %4097 = vmatpush.bf16.msra.mxu0 %v3839
  %4098 = vmatpush.bf16.msra.mxu0 %v3835
  %4099 = vmatmul.bf16.gmra.mxu0 %v3309
  %v4100 = vpop.f32.mrf.mxu0
  %v4101 = vadd.f32 %v3443, %v4100
  %v4102 = vpop.f32.mrf.mxu0
  %4103 = vdwg.mxu0
  %4104 = vmatpush.bf16.msra.mxu0 %v3895
  %4105 = vmatpush.bf16.msra.mxu0 %v3891
  %4106 = vmatpush.bf16.msra.mxu0 %v3887
  %4107 = vmatpush.bf16.msra.mxu0 %v3883
  %4108 = vmatpush.bf16.msra.mxu0 %v3879
  %4109 = vmatpush.bf16.msra.mxu0 %v3875
  %4110 = vmatpush.bf16.msra.mxu0 %v3871
  %4111 = vmatpush.bf16.msra.mxu0 %v3867
  %4112 = vmatmul.bf16.gmra.mxu0 %v3310
  %v4113 = vpop.f32.mrf.mxu0
  %v4114 = vadd.f32 %v4101, %v4113
  %v4115 = vpop.f32.mrf.mxu0
  %4116 = vdwg.mxu0
  %4117 = vmatpush.bf16.msra.mxu0 %v3927
  %4118 = vmatpush.bf16.msra.mxu0 %v3923
  %4119 = vmatpush.bf16.msra.mxu0 %v3919
  %4120 = vmatpush.bf16.msra.mxu0 %v3915
  %4121 = vmatpush.bf16.msra.mxu0 %v3911
  %4122 = vmatpush.bf16.msra.mxu0 %v3907
  %4123 = vmatpush.bf16.msra.mxu0 %v3903
  %4124 = vmatpush.bf16.msra.mxu0 %v3899
  %4125 = vmatmul.bf16.gmra.mxu0 %v3311
  %v4126 = vpop.f32.mrf.mxu0
  %v4127 = vadd.f32 %v4114, %v4126
  %v4128 = vpop.f32.mrf.mxu0
  %4129 = vdwg.mxu0
  %4130 = vmatpush.bf16.msra.mxu0 %v3959
  %4131 = vmatpush.bf16.msra.mxu0 %v3955
  %4132 = vmatpush.bf16.msra.mxu0 %v3951
  %4133 = vmatpush.bf16.msra.mxu0 %v3947
  %4134 = vmatpush.bf16.msra.mxu0 %v3943
  %4135 = vmatpush.bf16.msra.mxu0 %v3939
  %4136 = vmatpush.bf16.msra.mxu0 %v3935
  %4137 = vmatpush.bf16.msra.mxu0 %v3931
  %4138 = vmatmul.bf16.gmra.mxu0 %v3312
  %v4139 = vpop.f32.mrf.mxu0
  %v4140 = vadd.f32 %v4127, %v4139
  %v4141 = vpop.f32.mrf.mxu0
  %4142 = vdwg.mxu0
  %4143 = vmatpush.bf16.msra.mxu0 %v3864
  %4144 = vmatpush.bf16.msra.mxu0 %v3860
  %4145 = vmatpush.bf16.msra.mxu0 %v3856
  %4146 = vmatpush.bf16.msra.mxu0 %v3852
  %4147 = vmatpush.bf16.msra.mxu0 %v3848
  %4148 = vmatpush.bf16.msra.mxu0 %v3844
  %4149 = vmatpush.bf16.msra.mxu0 %v3840
  %4150 = vmatpush.bf16.msra.mxu0 %v3836
  %4151 = vmatmul.bf16.gmra.mxu0 %v3309
  %v4152 = vpop.f32.mrf.mxu0
  %v4153 = vadd.f32 %v3444, %v4152
  %v4154 = vpop.f32.mrf.mxu0
  %4155 = vdwg.mxu0
  %4156 = vmatpush.bf16.msra.mxu0 %v3896
  %4157 = vmatpush.bf16.msra.mxu0 %v3892
  %4158 = vmatpush.bf16.msra.mxu0 %v3888
  %4159 = vmatpush.bf16.msra.mxu0 %v3884
  %4160 = vmatpush.bf16.msra.mxu0 %v3880
  %4161 = vmatpush.bf16.msra.mxu0 %v3876
  %4162 = vmatpush.bf16.msra.mxu0 %v3872
  %4163 = vmatpush.bf16.msra.mxu0 %v3868
  %4164 = vmatmul.bf16.gmra.mxu0 %v3310
  %v4165 = vpop.f32.mrf.mxu0
  %v4166 = vadd.f32 %v4153, %v4165
  %v4167 = vpop.f32.mrf.mxu0
  %4168 = vdwg.mxu0
  %4169 = vmatpush.bf16.msra.mxu0 %v3928
  %4170 = vmatpush.bf16.msra.mxu0 %v3924
  %4171 = vmatpush.bf16.msra.mxu0 %v3920
  %4172 = vmatpush.bf16.msra.mxu0 %v3916
  %4173 = vmatpush.bf16.msra.mxu0 %v3912
  %4174 = vmatpush.bf16.msra.mxu0 %v3908
  %4175 = vmatpush.bf16.msra.mxu0 %v3904
  %4176 = vmatpush.bf16.msra.mxu0 %v3900
  %4177 = vmatmul.bf16.gmra.mxu0 %v3311
  %v4178 = vpop.f32.mrf.mxu0
  %v4179 = vadd.f32 %v4166, %v4178
  %v4180 = vpop.f32.mrf.mxu0
  %4181 = vdwg.mxu0
  %4182 = vmatpush.bf16.msra.mxu0 %v3960
  %4183 = vmatpush.bf16.msra.mxu0 %v3956
  %4184 = vmatpush.bf16.msra.mxu0 %v3952
  %4185 = vmatpush.bf16.msra.mxu0 %v3948
  %4186 = vmatpush.bf16.msra.mxu0 %v3944
  %4187 = vmatpush.bf16.msra.mxu0 %v3940
  %4188 = vmatpush.bf16.msra.mxu0 %v3936
  %4189 = vmatpush.bf16.msra.mxu0 %v3932
  %4190 = vmatmul.bf16.gmra.mxu0 %v3312
  %v4191 = vpop.f32.mrf.mxu0
  %v4192 = vadd.f32 %v4179, %v4191
  %v4193 = vpop.f32.mrf.mxu0
  %4194 = vdwg.mxu0
  %4195 = vmatpush.bf16.msra.mxu0 %v3865
  %4196 = vmatpush.bf16.msra.mxu0 %v3861
  %4197 = vmatpush.bf16.msra.mxu0 %v3857
  %4198 = vmatpush.bf16.msra.mxu0 %v3853
  %4199 = vmatpush.bf16.msra.mxu0 %v3849
  %4200 = vmatpush.bf16.msra.mxu0 %v3845
  %4201 = vmatpush.bf16.msra.mxu0 %v3841
  %4202 = vmatpush.bf16.msra.mxu0 %v3837
  %4203 = vmatmul.bf16.gmra.mxu0 %v3309
  %v4204 = vpop.f32.mrf.mxu0
  %v4205 = vadd.f32 %v3445, %v4204
  %v4206 = vpop.f32.mrf.mxu0
  %4207 = vdwg.mxu0
  %4208 = vmatpush.bf16.msra.mxu0 %v3897
  %4209 = vmatpush.bf16.msra.mxu0 %v3893
  %4210 = vmatpush.bf16.msra.mxu0 %v3889
  %4211 = vmatpush.bf16.msra.mxu0 %v3885
  %4212 = vmatpush.bf16.msra.mxu0 %v3881
  %4213 = vmatpush.bf16.msra.mxu0 %v3877
  %4214 = vmatpush.bf16.msra.mxu0 %v3873
  %4215 = vmatpush.bf16.msra.mxu0 %v3869
  %4216 = vmatmul.bf16.gmra.mxu0 %v3310
  %v4217 = vpop.f32.mrf.mxu0
  %v4218 = vadd.f32 %v4205, %v4217
  %v4219 = vpop.f32.mrf.mxu0
  %4220 = vdwg.mxu0
  %4221 = vmatpush.bf16.msra.mxu0 %v3929
  %4222 = vmatpush.bf16.msra.mxu0 %v3925
  %4223 = vmatpush.bf16.msra.mxu0 %v3921
  %4224 = vmatpush.bf16.msra.mxu0 %v3917
  %4225 = vmatpush.bf16.msra.mxu0 %v3913
  %4226 = vmatpush.bf16.msra.mxu0 %v3909
  %4227 = vmatpush.bf16.msra.mxu0 %v3905
  %4228 = vmatpush.bf16.msra.mxu0 %v3901
  %4229 = vmatmul.bf16.gmra.mxu0 %v3311
  %v4230 = vpop.f32.mrf.mxu0
  %v4231 = vadd.f32 %v4218, %v4230
  %v4232 = vpop.f32.mrf.mxu0
  %4233 = vdwg.mxu0
  %4234 = vmatpush.bf16.msra.mxu0 %v3961
  %4235 = vmatpush.bf16.msra.mxu0 %v3957
  %4236 = vmatpush.bf16.msra.mxu0 %v3953
  %4237 = vmatpush.bf16.msra.mxu0 %v3949
  %4238 = vmatpush.bf16.msra.mxu0 %v3945
  %4239 = vmatpush.bf16.msra.mxu0 %v3941
  %4240 = vmatpush.bf16.msra.mxu0 %v3937
  %4241 = vmatpush.bf16.msra.mxu0 %v3933
  %4242 = vmatmul.bf16.gmra.mxu0 %v3312
  %v4243 = vpop.f32.mrf.mxu0
  %v4244 = vadd.f32 %v4231, %v4243
  %v4245 = vpop.f32.mrf.mxu0
  %4246 = vdwg.mxu0
  %4247 = vmatpush.bf16.msra.mxu0 %v3866
  %4248 = vmatpush.bf16.msra.mxu0 %v3862
  %4249 = vmatpush.bf16.msra.mxu0 %v3858
  %4250 = vmatpush.bf16.msra.mxu0 %v3854
  %4251 = vmatpush.bf16.msra.mxu0 %v3850
  %4252 = vmatpush.bf16.msra.mxu0 %v3846
  %4253 = vmatpush.bf16.msra.mxu0 %v3842
  %4254 = vmatpush.bf16.msra.mxu0 %v3838
  %4255 = vmatmul.bf16.gmra.mxu0 %v3309
  %v4256 = vpop.f32.mrf.mxu0
  %v4257 = vadd.f32 %v3446, %v4256
  %v4258 = vpop.f32.mrf.mxu0
  %4259 = vdwg.mxu0
  %4260 = vmatpush.bf16.msra.mxu0 %v3898
  %4261 = vmatpush.bf16.msra.mxu0 %v3894
  %4262 = vmatpush.bf16.msra.mxu0 %v3890
  %4263 = vmatpush.bf16.msra.mxu0 %v3886
  %4264 = vmatpush.bf16.msra.mxu0 %v3882
  %4265 = vmatpush.bf16.msra.mxu0 %v3878
  %4266 = vmatpush.bf16.msra.mxu0 %v3874
  %4267 = vmatpush.bf16.msra.mxu0 %v3870
  %4268 = vmatmul.bf16.gmra.mxu0 %v3310
  %v4269 = vpop.f32.mrf.mxu0
  %v4270 = vadd.f32 %v4257, %v4269
  %v4271 = vpop.f32.mrf.mxu0
  %4272 = vdwg.mxu0
  %4273 = vmatpush.bf16.msra.mxu0 %v3930
  %4274 = vmatpush.bf16.msra.mxu0 %v3926
  %4275 = vmatpush.bf16.msra.mxu0 %v3922
  %4276 = vmatpush.bf16.msra.mxu0 %v3918
  %4277 = vmatpush.bf16.msra.mxu0 %v3914
  %4278 = vmatpush.bf16.msra.mxu0 %v3910
  %4279 = vmatpush.bf16.msra.mxu0 %v3906
  %4280 = vmatpush.bf16.msra.mxu0 %v3902
  %4281 = vmatmul.bf16.gmra.mxu0 %v3311
  %v4282 = vpop.f32.mrf.mxu0
  %v4283 = vadd.f32 %v4270, %v4282
  %v4284 = vpop.f32.mrf.mxu0
  %4285 = vdwg.mxu0
  %4286 = vmatpush.bf16.msra.mxu0 %v3962
  %4287 = vmatpush.bf16.msra.mxu0 %v3958
  %4288 = vmatpush.bf16.msra.mxu0 %v3954
  %4289 = vmatpush.bf16.msra.mxu0 %v3950
  %4290 = vmatpush.bf16.msra.mxu0 %v3946
  %4291 = vmatpush.bf16.msra.mxu0 %v3942
  %4292 = vmatpush.bf16.msra.mxu0 %v3938
  %4293 = vmatpush.bf16.msra.mxu0 %v3934
  %4294 = vmatmul.bf16.gmra.mxu0 %v3312
  %v4295 = vpop.f32.mrf.mxu0
  %v4296 = vadd.f32 %v4283, %v4295
  %v4297 = vpop.f32.mrf.mxu0
  %4298 = vdwg.mxu0
  %v4299 = vmax.f32 %v4140, 0.0
  %v4300 = vmax.f32 %v4192, 0.0
  %v4301 = vmax.f32 %v4244, 0.0
  %v4302 = vmax.f32 %v4296, 0.0
  %v4303 = vpack.c.bf16 %v4299, %v4299
  %v4304 = vpack.c.bf16 %v4300, %v4300
  %v4305 = vpack.c.bf16 %v4301, %v4301
  %v4306 = vpack.c.bf16 %v4302, %v4302
  %v4307 = vld [vmem:[%s12] sm:$0xf]
  %v4308 = vld [vmem:[%s12 + $0x4] sm:$0xf]
  %v4309 = vld [vmem:[%s12 + $0x8] sm:$0xf]
  %v4310 = vld [vmem:[%s12 + $0xc] sm:$0xf]
  %v4311 = vld [vmem:[%s12 + $0x10] sm:$0xf]
  %v4312 = vld [vmem:[%s12 + $0x14] sm:$0xf]
  %v4313 = vld [vmem:[%s12 + $0x18] sm:$0xf]
  %v4314 = vld [vmem:[%s12 + $0x1c] sm:$0xf]
  %v4315 = vld [vmem:[%s12 + $0x20] sm:$0xf]
  %v4316 = vld [vmem:[%s12 + $0x24] sm:$0xf]
  %v4317 = vld [vmem:[%s12 + $0x28] sm:$0xf]
  %v4318 = vld [vmem:[%s12 + $0x2c] sm:$0xf]
  %v4319 = vld [vmem:[%s12 + $0x30] sm:$0xf]
  %v4320 = vld [vmem:[%s12 + $0x34] sm:$0xf]
  %v4321 = vld [vmem:[%s12 + $0x38] sm:$0xf]
  %v4322 = vld [vmem:[%s12 + $0x3c] sm:$0xf]
  %v4323 = vld [vmem:[%s12 + $0x40] sm:$0xf]
  %v4324 = vld [vmem:[%s12 + $0x44] sm:$0xf]
  %v4325 = vld [vmem:[%s12 + $0x48] sm:$0xf]
  %v4326 = vld [vmem:[%s12 + $0x4c] sm:$0xf]
  %v4327 = vld [vmem:[%s12 + $0x50] sm:$0xf]
  %v4328 = vld [vmem:[%s12 + $0x54] sm:$0xf]
  %v4329 = vld [vmem:[%s12 + $0x58] sm:$0xf]
  %v4330 = vld [vmem:[%s12 + $0x5c] sm:$0xf]
  %v4331 = vld [vmem:[%s12 + $0x60] sm:$0xf]
  %v4332 = vld [vmem:[%s12 + $0x64] sm:$0xf]
  %v4333 = vld [vmem:[%s12 + $0x68] sm:$0xf]
  %v4334 = vld [vmem:[%s12 + $0x6c] sm:$0xf]
  %v4335 = vld [vmem:[%s12 + $0x70] sm:$0xf]
  %v4336 = vld [vmem:[%s12 + $0x74] sm:$0xf]
  %v4337 = vld [vmem:[%s12 + $0x78] sm:$0xf]
  %v4338 = vld [vmem:[%s12 + $0x7c] sm:$0xf]
  %v4339 = vld [vmem:[%s12 + $0x80] sm:$0xf]
  %v4340 = vld [vmem:[%s12 + $0x84] sm:$0xf]
  %v4341 = vld [vmem:[%s12 + $0x88] sm:$0xf]
  %v4342 = vld [vmem:[%s12 + $0x8c] sm:$0xf]
  %v4343 = vld [vmem:[%s12 + $0x90] sm:$0xf]
  %v4344 = vld [vmem:[%s12 + $0x94] sm:$0xf]
  %v4345 = vld [vmem:[%s12 + $0x98] sm:$0xf]
  %v4346 = vld [vmem:[%s12 + $0x9c] sm:$0xf]
  %v4347 = vld [vmem:[%s12 + $0xa0] sm:$0xf]
  %v4348 = vld [vmem:[%s12 + $0xa4] sm:$0xf]
  %v4349 = vld [vmem:[%s12 + $0xa8] sm:$0xf]
  %v4350 = vld [vmem:[%s12 + $0xac] sm:$0xf]
  %v4351 = vld [vmem:[%s12 + $0xb0] sm:$0xf]
  %v4352 = vld [vmem:[%s12 + $0xb4] sm:$0xf]
  %v4353 = vld [vmem:[%s12 + $0xb8] sm:$0xf]
  %v4354 = vld [vmem:[%s12 + $0xbc] sm:$0xf]
  %v4355 = vld [vmem:[%s12 + $0xc0] sm:$0xf]
  %v4356 = vld [vmem:[%s12 + $0xc4] sm:$0xf]
  %v4357 = vld [vmem:[%s12 + $0xc8] sm:$0xf]
  %v4358 = vld [vmem:[%s12 + $0xcc] sm:$0xf]
  %v4359 = vld [vmem:[%s12 + $0xd0] sm:$0xf]
  %v4360 = vld [vmem:[%s12 + $0xd4] sm:$0xf]
  %v4361 = vld [vmem:[%s12 + $0xd8] sm:$0xf]
  %v4362 = vld [vmem:[%s12 + $0xdc] sm:$0xf]
  %v4363 = vld [vmem:[%s12 + $0xe0] sm:$0xf]
  %v4364 = vld [vmem:[%s12 + $0xe4] sm:$0xf]
  %v4365 = vld [vmem:[%s12 + $0xe8] sm:$0xf]
  %v4366 = vld [vmem:[%s12 + $0xec] sm:$0xf]
  %v4367 = vld [vmem:[%s12 + $0xf0] sm:$0xf]
  %v4368 = vld [vmem:[%s12 + $0xf4] sm:$0xf]
  %v4369 = vld [vmem:[%s12 + $0xf8] sm:$0xf]
  %v4370 = vld [vmem:[%s12 + $0xfc] sm:$0xf]
  %v4371 = vld [vmem:[%s13] sm:$0x1]
  %v4373 = vperm.slane %v4371, 0
  %v4439 = vunpack.c.l.b16 %v4307
  %v4440 = vunpack.c.l.b16 %v4308
  %v4441 = vunpack.c.l.b16 %v4309
  %v4442 = vunpack.c.l.b16 %v4310
  %v4443 = vunpack.c.l.b16 %v4311
  %v4444 = vunpack.c.l.b16 %v4312
  %v4445 = vunpack.c.l.b16 %v4313
  %v4446 = vunpack.c.l.b16 %v4314
  %v4447 = vunpack.c.l.b16 %v4315
  %v4448 = vunpack.c.l.b16 %v4316
  %v4449 = vunpack.c.l.b16 %v4317
  %v4450 = vunpack.c.l.b16 %v4318
  %v4451 = vunpack.c.l.b16 %v4319
  %v4452 = vunpack.c.l.b16 %v4320
  %v4453 = vunpack.c.l.b16 %v4321
  %v4454 = vunpack.c.l.b16 %v4322
  %v4455 = vunpack.c.l.b16 %v4323
  %v4456 = vunpack.c.l.b16 %v4324
  %v4457 = vunpack.c.l.b16 %v4325
  %v4458 = vunpack.c.l.b16 %v4326
  %v4459 = vunpack.c.l.b16 %v4327
  %v4460 = vunpack.c.l.b16 %v4328
  %v4461 = vunpack.c.l.b16 %v4329
  %v4462 = vunpack.c.l.b16 %v4330
  %v4463 = vunpack.c.l.b16 %v4331
  %v4464 = vunpack.c.l.b16 %v4332
  %v4465 = vunpack.c.l.b16 %v4333
  %v4466 = vunpack.c.l.b16 %v4334
  %v4467 = vunpack.c.l.b16 %v4335
  %v4468 = vunpack.c.l.b16 %v4336
  %v4469 = vunpack.c.l.b16 %v4337
  %v4470 = vunpack.c.l.b16 %v4338
  %v4471 = vunpack.c.l.b16 %v4339
  %v4472 = vunpack.c.l.b16 %v4340
  %v4473 = vunpack.c.l.b16 %v4341
  %v4474 = vunpack.c.l.b16 %v4342
  %v4475 = vunpack.c.l.b16 %v4343
  %v4476 = vunpack.c.l.b16 %v4344
  %v4477 = vunpack.c.l.b16 %v4345
  %v4478 = vunpack.c.l.b16 %v4346
  %v4479 = vunpack.c.l.b16 %v4347
  %v4480 = vunpack.c.l.b16 %v4348
  %v4481 = vunpack.c.l.b16 %v4349
  %v4482 = vunpack.c.l.b16 %v4350
  %v4483 = vunpack.c.l.b16 %v4351
  %v4484 = vunpack.c.l.b16 %v4352
  %v4485 = vunpack.c.l.b16 %v4353
  %v4486 = vunpack.c.l.b16 %v4354
  %v4487 = vunpack.c.l.b16 %v4355
  %v4488 = vunpack.c.l.b16 %v4356
  %v4489 = vunpack.c.l.b16 %v4357
  %v4490 = vunpack.c.l.b16 %v4358
  %v4491 = vunpack.c.l.b16 %v4359
  %v4492 = vunpack.c.l.b16 %v4360
  %v4493 = vunpack.c.l.b16 %v4361
  %v4494 = vunpack.c.l.b16 %v4362
  %v4495 = vunpack.c.l.b16 %v4363
  %v4496 = vunpack.c.l.b16 %v4364
  %v4497 = vunpack.c.l.b16 %v4365
  %v4498 = vunpack.c.l.b16 %v4366
  %v4499 = vunpack.c.l.b16 %v4367
  %v4500 = vunpack.c.l.b16 %v4368
  %v4501 = vunpack.c.l.b16 %v4369
  %v4502 = vunpack.c.l.b16 %v4370
  %v4503 = vpack.c.b16 %v4440, %v4439
  %v4504 = vpack.c.b16 %v4442, %v4441
  %v4505 = vpack.c.b16 %v4444, %v4443
  %v4506 = vpack.c.b16 %v4446, %v4445
  %v4507 = vpack.c.b16 %v4448, %v4447
  %v4508 = vpack.c.b16 %v4450, %v4449
  %v4509 = vpack.c.b16 %v4452, %v4451
  %v4510 = vpack.c.b16 %v4454, %v4453
  %v4511 = vpack.c.b16 %v4456, %v4455
  %v4512 = vpack.c.b16 %v4458, %v4457
  %v4513 = vpack.c.b16 %v4460, %v4459
  %v4514 = vpack.c.b16 %v4462, %v4461
  %v4515 = vpack.c.b16 %v4464, %v4463
  %v4516 = vpack.c.b16 %v4466, %v4465
  %v4517 = vpack.c.b16 %v4468, %v4467
  %v4518 = vpack.c.b16 %v4470, %v4469
  %v4519 = vpack.c.b16 %v4472, %v4471
  %v4520 = vpack.c.b16 %v4474, %v4473
  %v4521 = vpack.c.b16 %v4476, %v4475
  %v4522 = vpack.c.b16 %v4478, %v4477
  %v4523 = vpack.c.b16 %v4480, %v4479
  %v4524 = vpack.c.b16 %v4482, %v4481
  %v4525 = vpack.c.b16 %v4484, %v4483
  %v4526 = vpack.c.b16 %v4486, %v4485
  %v4527 = vpack.c.b16 %v4488, %v4487
  %v4528 = vpack.c.b16 %v4490, %v4489
  %v4529 = vpack.c.b16 %v4492, %v4491
  %v4530 = vpack.c.b16 %v4494, %v4493
  %v4531 = vpack.c.b16 %v4496, %v4495
  %v4532 = vpack.c.b16 %v4498, %v4497
  %v4533 = vpack.c.b16 %v4500, %v4499
  %v4534 = vpack.c.b16 %v4502, %v4501
  %4567 = vmatpush.bf16.msra.mxu0 %v4510
  %4568 = vmatpush.bf16.msra.mxu0 %v4509
  %4569 = vmatpush.bf16.msra.mxu0 %v4508
  %4570 = vmatpush.bf16.msra.mxu0 %v4507
  %4571 = vmatpush.bf16.msra.mxu0 %v4506
  %4572 = vmatpush.bf16.msra.mxu0 %v4505
  %4573 = vmatpush.bf16.msra.mxu0 %v4504
  %4574 = vmatpush.bf16.msra.mxu0 %v4503
  %4575 = vmatmul.bf16.gmra.mxu0 %v4303
  %v4576 = vpop.f32.mrf.mxu0
  %v4577 = vadd.f32 %v4373, %v4576
  %v4578 = vpop.f32.mrf.mxu0
  %4579 = vdwg.mxu0
  %4580 = vmatpush.bf16.msra.mxu0 %v4518
  %4581 = vmatpush.bf16.msra.mxu0 %v4517
  %4582 = vmatpush.bf16.msra.mxu0 %v4516
  %4583 = vmatpush.bf16.msra.mxu0 %v4515
  %4584 = vmatpush.bf16.msra.mxu0 %v4514
  %4585 = vmatpush.bf16.msra.mxu0 %v4513
  %4586 = vmatpush.bf16.msra.mxu0 %v4512
  %4587 = vmatpush.bf16.msra.mxu0 %v4511
  %4588 = vmatmul.bf16.gmra.mxu0 %v4304
  %v4589 = vpop.f32.mrf.mxu0
  %v4590 = vadd.f32 %v4577, %v4589
  %v4591 = vpop.f32.mrf.mxu0
  %4592 = vdwg.mxu0
  %4593 = vmatpush.bf16.msra.mxu0 %v4526
  %4594 = vmatpush.bf16.msra.mxu0 %v4525
  %4595 = vmatpush.bf16.msra.mxu0 %v4524
  %4596 = vmatpush.bf16.msra.mxu0 %v4523
  %4597 = vmatpush.bf16.msra.mxu0 %v4522
  %4598 = vmatpush.bf16.msra.mxu0 %v4521
  %4599 = vmatpush.bf16.msra.mxu0 %v4520
  %4600 = vmatpush.bf16.msra.mxu0 %v4519
  %4601 = vmatmul.bf16.gmra.mxu0 %v4305
  %v4602 = vpop.f32.mrf.mxu0
  %v4603 = vadd.f32 %v4590, %v4602
  %v4604 = vpop.f32.mrf.mxu0
  %4605 = vdwg.mxu0
  %4606 = vmatpush.bf16.msra.mxu0 %v4534
  %4607 = vmatpush.bf16.msra.mxu0 %v4533
  %4608 = vmatpush.bf16.msra.mxu0 %v4532
  %4609 = vmatpush.bf16.msra.mxu0 %v4531
  %4610 = vmatpush.bf16.msra.mxu0 %v4530
  %4611 = vmatpush.bf16.msra.mxu0 %v4529
  %4612 = vmatpush.bf16.msra.mxu0 %v4528
  %4613 = vmatpush.bf16.msra.mxu0 %v4527
  %4614 = vmatmul.bf16.gmra.mxu0 %v4306
  %v4615 = vpop.f32.mrf.mxu0
  %v4616 = vadd.f32 %v4603, %v4615
  %v4617 = vpop.f32.mrf.mxu0
  %4618 = vdwg.mxu0
  %4620 = vrot.lane.b32.xlu0 %v4616, 2
  %v4621 = vpop.permute.xlu0 %4620
  %vm4623 = vcmask 25616
  %4624 = vst.msk [vmem:[%s14] sm:$0x3] %vm4623, %v4621
  // Predicated region
  $region58: #{_forward_impl.1} parent=0 // pred_check
    _
  $region59: #{_forward_impl.1} parent=0 // pred_check_branch
    %4626 = sbr.rel (0) target = $region61
  $region60: #{_forward_impl.1} parent=0 // pred_region
    _
  $region61: #{_forward_impl.1} parent=0 // pred_fallthru
    _
  // Predicated region
  $region62: #{_forward_impl.1} parent=0 // pred_check
    _
  $region63: #{_forward_impl.1} parent=0 // pred_check_branch
    %4628 = sbr.rel (0) target = $region65
  $region64: #{_forward_impl.1} parent=0 // pred_region
    _
  $region65: #{_forward_impl.1} parent=0 // pred_fallthru
    _

</llo_original>
